<compile_context>
chip_gen: v5e
topology: v5e:2x2
jax: 0.10.0
libtpu: 0.0.40
codegen_flags: <defaults>
</compile_context>

<pallas_src>
import functools
import numpy as np
import jax
import jax.numpy as jnp
from jax import lax
from jax.experimental import pallas as pl
from jax.experimental.pallas import tpu as pltpu


def _sigmoid(v):
    # exp lowers to the EUP; pl.reciprocal keeps the divide on the EUP vrcp
    # path instead of a VALU divide sequence (approx=True would be cheaper
    # still, at ~2^-12 relative error).
    return pl.reciprocal(1.0 + jnp.exp(-v), approx=False)


# ---------------------------------------------------------------------------
# Fused CBAM kernel: NB batch images per grid step
# ---------------------------------------------------------------------------
def _cbam_kernel(x_ref, w1_ref, b1_ref, w2_ref, b2_ref, onesc_ref, bconv_ref,
                 bs_ref, o_ref, *, NB, H, W, C):
    HW = H * W
    x = x_ref[...].astype(jnp.float32)                     # (NB, H, W, C)
    x3 = x.reshape(NB, HW, C)

    # ---------------- ChannelGate ----------------
    # Global pools reduce over H*W (sublane direction) -> VPU adds/max, no
    # cross-lane XLU traffic.  Both MLP passes run stacked as ONE pair of
    # MXU matmuls on a (2*NB, C) matrix.
    avg = jnp.sum(x3, axis=1) * (1.0 / float(HW))          # (NB, C)
    mx = jnp.max(x3, axis=1)                               # (NB, C)
    pools = jnp.concatenate([avg, mx], axis=0)             # (2*NB, C)
    h = jnp.dot(pools, w1_ref[...], preferred_element_type=jnp.float32)
    h = jnp.maximum(h + b1_ref[...], 0.0)                  # (2*NB, Cr)
    att = jnp.dot(h, w2_ref[...], preferred_element_type=jnp.float32)
    att = att + b2_ref[...]                                # (2*NB, C)
    scale_c = _sigmoid(att[:NB] + att[NB:])                # (NB, C)
    xc = x * scale_c[:, None, None, :]                     # (NB, H, W, C)

    # ---------------- SpatialGate ----------------
    # Channel compress: the max (non-linear) stays as an XLU lane-reduce; the
    # mean is offloaded to the otherwise-idle MXU via (NB*H*W, C) @ (C, 1)
    # (onesc holds 1/C), halving the XLU reduction traffic.
    cmx = jnp.max(xc, axis=-1)                             # (NB, H, W)
    xc2 = xc.reshape(NB * HW, C)
    cmn = jnp.dot(xc2, onesc_ref[...],
                  preferred_element_type=jnp.float32).reshape(NB, H, W)

    # 7x7 (2->1, pad=3) conv: row-pad the [max|mean] map and accumulate seven
    # (NB*H, 2W) @ (2W, W) MXU matmuls.  The banded blocks encode the column
    # taps + zero column padding; no 14W im2col lane-concat is built, and the
    # remaining row-slice work is amortized over all NB images in the step.
    mid = jnp.concatenate([cmx, cmn], axis=-1)             # (NB, H, 2W)
    zrows = jnp.zeros((NB, 3, 2 * W), jnp.float32)
    mpad = jnp.concatenate([zrows, mid, zrows], axis=1)    # (NB, H+6, 2W)
    acc = jnp.zeros((NB * H, W), jnp.float32)
    for i in range(7):                                     # static unroll
        rows_i = mpad[:, i:i + H, :].reshape(NB * H, 2 * W)
        acc = acc + jnp.dot(rows_i, bconv_ref[i],
                            preferred_element_type=jnp.float32)
    scale_s = _sigmoid(acc + bs_ref[0]).reshape(NB, H, W)  # bias from SMEM

    o_ref[...] = (xc * scale_s[:, :, :, None]).astype(o_ref.dtype)


# ---------------------------------------------------------------------------
# Host-side (one-time) prep: banded conv blocks + reshaped params
# ---------------------------------------------------------------------------
def build_spatial_band_blocks(W, ws):
    """(7, 2W, W) blocks B s.t. rows_i @ B[i] applies kernel row i of the 7x7
    (2-in, 1-out) conv.  Within block i, rows [c*W:(c+1)*W] handle input
    channel c (0 = channel-max, 1 = channel-mean); out-of-range column taps
    have no entry, so zero W-padding is implicit.  Vectorized numpy build."""
    K = np.asarray(ws)[..., 0]                   # (7, 7, 2)  (ki, kj, cin)
    w_in = np.arange(W)[:, None]
    w_out = np.arange(W)[None, :]
    kj = w_in - w_out + 3                        # (W, W)
    valid = (kj >= 0) & (kj < 7)
    kj_c = np.clip(kj, 0, 6)
    B = np.zeros((7, 2, W, W), np.float32)
    for i in range(7):
        for c in range(2):
            B[i, c] = np.where(valid, K[i, kj_c, c], 0.0)
    return jnp.asarray(B.reshape(7, 2 * W, W))


def prepare_cbam_params(params, W):
    """Call ONCE per parameter set (not per forward) — hoists the band-matrix
    construction and host->device uploads out of the hot path."""
    C, Cr = params["w1"].shape
    return {
        "w1": params["w1"].astype(jnp.float32),
        "b1": params["b1"].reshape(1, Cr).astype(jnp.float32),
        "w2": params["w2"].astype(jnp.float32),
        "b2": params["b2"].reshape(1, C).astype(jnp.float32),
        "ones_c": jnp.full((C, 1), 1.0 / C, jnp.float32),   # channel-mean RHS
        "bconv": build_spatial_band_blocks(W, params["ws"]),
        "bs": jnp.asarray(params["bs"], jnp.float32).reshape(1),
    }


def _pick_block_batch(N, H, W, C, itemsize):
    """Images per grid step.  Budget ~ (2x-double-buffered in + out DMA blocks
    plus ~4 live in-kernel temporaries) * NB * H*W*C * itemsize, kept well
    under the v5e 16 MiB scoped-VMEM default (v6e/v7x have 32 MiB).  Keep the
    grid >= 2 steps when N >= 2 so v7x's two TensorCores both get work."""
    per_img = H * W * C * itemsize
    cap = max(1, int((12 * 1024 * 1024) // (8 * per_img)))
    cap = min(cap, 8)
    nb = 1
    for d in range(1, N + 1):
        if N % d:
            continue                         # exact divisor -> every block full
        if d > cap:
            break
        if N >= 2 and N // d < 2:
            continue                         # keep >=2 grid steps for v7x
        nb = d
    return nb


# ---------------------------------------------------------------------------
# Wrapper
# ---------------------------------------------------------------------------
def cbam_forward(prepped, x):
    """x: (N, H, W, C) NHWC.  prepped: output of prepare_cbam_params."""
    N, H, W, C = x.shape
    Cr = prepped["w1"].shape[1]
    NB = _pick_block_batch(N, H, W, C, x.dtype.itemsize)

    kernel = functools.partial(_cbam_kernel, NB=NB, H=H, W=W, C=C)
    return pl.pallas_call(
        kernel,
        out_shape=jax.ShapeDtypeStruct((N, H, W, C), x.dtype),
        grid=(N // NB,),
        in_specs=[
            pl.BlockSpec((NB, H, W, C), lambda n: (n, 0, 0, 0)),
            # Weight/constant operands: constant index maps -> fetched once,
            # stay resident in VMEM across all grid steps.
            pl.BlockSpec((C, Cr), lambda n: (0, 0)),
            pl.BlockSpec((1, Cr), lambda n: (0, 0)),
            pl.BlockSpec((Cr, C), lambda n: (0, 0)),
            pl.BlockSpec((1, C), lambda n: (0, 0)),
            pl.BlockSpec((C, 1), lambda n: (0, 0)),
            pl.BlockSpec((7, 2 * W, W), lambda n: (0, 0, 0)),
            pl.BlockSpec(memory_space=pltpu.MemorySpace.SMEM),   # scalar bias
        ],
        out_specs=pl.BlockSpec((NB, H, W, C), lambda n: (n, 0, 0, 0)),
        compiler_params=pltpu.CompilerParams(
            dimension_semantics=("parallel",)),
    )(x, prepped["w1"], prepped["b1"], prepped["w2"], prepped["b2"],
      prepped["ones_c"], prepped["bconv"], prepped["bs"])


# ---------------------------------------------------------------------------
# Pure-JAX reference (same math, no Pallas) for a correctness check
# ---------------------------------------------------------------------------
def _ref_forward(params, x):
    avg = jnp.mean(x, axis=(1, 2))                 # (N, C)
    mx = jnp.max(x, axis=(1, 2))                   # (N, C)

    def mlp(p):
        h = jax.nn.relu(p @ params["w1"] + params["b1"])
        return h @ params["w2"] + params["b2"]

    scale_c = jax.nn.sigmoid(mlp(avg) + mlp(mx))[:, None, None, :]
    xc = x * scale_c
    comp = jnp.concatenate([jnp.max(xc, axis=-1, keepdims=True),
                            jnp.mean(xc, axis=-1, keepdims=True)], axis=-1)
    conv = lax.conv_general_dilated(comp, params["ws"], (1, 1), "SAME",
                                    dimension_numbers=("NHWC", "HWIO", "NHWC"))
    conv = conv + params["bs"]
    return xc * jax.nn.sigmoid(conv)


# ---------------------------------------------------------------------------
if __name__ == "__main__":
    # NHWC (8, 16, 16, 128) == PyTorch NCHW (8, 128, 16, 16); reduction 16.
    N, H, W, C = 8, 16, 16, 128
    reduction = 16
    Cr = C // reduction

    key = jax.random.PRNGKey(0)
    ks = jax.random.split(key, 7)
    params = {
        "w1": jax.random.normal(ks[0], (C, Cr), jnp.float32) / np.sqrt(C),
        "b1": jax.random.normal(ks[1], (Cr,), jnp.float32) * 0.05,
        "b2": jax.random.normal(ks[3], (C,), jnp.float32) * 0.05,
        "w2": jax.random.normal(ks[2], (Cr, C), jnp.float32) / np.sqrt(Cr),
        "ws": jax.random.normal(ks[4], (7, 7, 2, 1), jnp.float32) / np.sqrt(98.0),
        "bs": jax.random.normal(ks[5], (), jnp.float32) * 0.05,
    }
    x = jax.random.normal(ks[6], (N, H, W, C), jnp.float32)

    prepped = prepare_cbam_params(params, W)       # one-time host-side prep
    out = jax.block_until_ready(cbam_forward(prepped, x))

    ref = _ref_forward(params, x)
    np.testing.assert_allclose(np.asarray(out), np.asarray(ref),
                               rtol=2e-4, atol=2e-4)
    print("KERNEL_OK")
</pallas_src>

<mosaic_0001>
module attributes {stable_mosaic.version = 11 : i64} {
  func.func @_cbam_kernel(%arg0: i32, %arg1: memref<4x16x16x128xf32, #tpu.memory_space<vmem>>, %arg2: memref<128x8xf32, #tpu.memory_space<vmem>>, %arg3: memref<1x8xf32, #tpu.memory_space<vmem>>, %arg4: memref<8x128xf32, #tpu.memory_space<vmem>>, %arg5: memref<1x128xf32, #tpu.memory_space<vmem>>, %arg6: memref<128x1xf32, #tpu.memory_space<vmem>>, %arg7: memref<7x32x16xf32, #tpu.memory_space<vmem>>, %arg8: memref<1xf32, #tpu.memory_space<smem>>, %arg9: memref<4x16x16x128xf32, #tpu.memory_space<vmem>>) attributes {dimension_semantics = [#tpu.dimension_semantics<parallel>], iteration_bounds = array<i64: 2>, scalar_prefetch = 0 : i64, scratch_operands = 0 : i64, tpu.core_type = #tpu.core_type<tc>, window_params = [{transform_indices = @transform_0, window_bounds = array<i64: 4, 16, 16, 128>}, {pipeline_mode = #tpu.pipeline_mode<synchronous>, transform_indices = @transform_1, window_bounds = array<i64: 128, 8>}, {pipeline_mode = #tpu.pipeline_mode<synchronous>, transform_indices = @transform_2, window_bounds = array<i64: 1, 8>}, {pipeline_mode = #tpu.pipeline_mode<synchronous>, transform_indices = @transform_3, window_bounds = array<i64: 8, 128>}, {pipeline_mode = #tpu.pipeline_mode<synchronous>, transform_indices = @transform_4, window_bounds = array<i64: 1, 128>}, {pipeline_mode = #tpu.pipeline_mode<synchronous>, transform_indices = @transform_5, window_bounds = array<i64: 128, 1>}, {pipeline_mode = #tpu.pipeline_mode<synchronous>, transform_indices = @transform_6, window_bounds = array<i64: 7, 32, 16>}, {transform_indices = @transform_7, window_bounds = array<i64: 1>}, {transform_indices = @transform_8, window_bounds = array<i64: 4, 16, 16, 128>}]} {
    %c0 = arith.constant 0 : index
    %c0_0 = arith.constant 0 : index
    %c0_1 = arith.constant 0 : index
    %c0_2 = arith.constant 0 : index
    %0 = vector.load %arg1[%c0, %c0_0, %c0_1, %c0_2] : memref<4x16x16x128xf32, #tpu.memory_space<vmem>>, vector<4x16x16x128xf32>
    %1 = vector.shape_cast %0 : vector<4x16x16x128xf32> to vector<4x256x128xf32>
    %cst = arith.constant dense<0.000000e+00> : vector<4x128xf32>
    %2 = vector.multi_reduction <add>, %1, %cst [1] : vector<4x256x128xf32> to vector<4x128xf32>
    %cst_3 = arith.constant 3.906250e-03 : f32
    %3 = vector.broadcast %cst_3 : f32 to vector<4x128xf32>
    %4 = arith.mulf %2, %3 : vector<4x128xf32>
    %cst_4 = arith.constant dense<0xFF800000> : vector<4x128xf32>
    %5 = vector.multi_reduction <maximumf>, %1, %cst_4 [1] : vector<4x256x128xf32> to vector<4x128xf32>
    %6 = tpu.concatenate %4, %5 in 0 : vector<4x128xf32>, vector<4x128xf32> -> vector<8x128xf32>
    %c0_5 = arith.constant 0 : index
    %c0_6 = arith.constant 0 : index
    %7 = vector.load %arg2[%c0_5, %c0_6] : memref<128x8xf32, #tpu.memory_space<vmem>>, vector<128x8xf32>
    %cst_7 = arith.constant dense<0.000000e+00> : vector<8x8xf32>
    %8 = tpu.matmul %6, %7, %cst_7 {dimension_numbers = #tpu.dot_dimension_numbers<[1], [0], [0], [1], [0, 0, 1, 1], [], []>} : vector<8x128xf32>, vector<128x8xf32>, vector<8x8xf32> -> vector<8x8xf32>
    %c0_8 = arith.constant 0 : index
    %c0_9 = arith.constant 0 : index
    %9 = vector.load %arg3[%c0_8, %c0_9] : memref<1x8xf32, #tpu.memory_space<vmem>>, vector<1x8xf32>
    %10 = vector.broadcast %9 : vector<1x8xf32> to vector<8x8xf32>
    %11 = arith.addf %8, %10 : vector<8x8xf32>
    %cst_10 = arith.constant 0.000000e+00 : f32
    %12 = vector.broadcast %cst_10 : f32 to vector<8x8xf32>
    %13 = arith.maximumf %11, %12 : vector<8x8xf32>
    %c0_11 = arith.constant 0 : index
    %c0_12 = arith.constant 0 : index
    %14 = vector.load %arg4[%c0_11, %c0_12] : memref<8x128xf32, #tpu.memory_space<vmem>>, vector<8x128xf32>
    %cst_13 = arith.constant dense<0.000000e+00> : vector<8x128xf32>
    %15 = tpu.matmul %13, %14, %cst_13 {dimension_numbers = #tpu.dot_dimension_numbers<[1], [0], [0], [1], [0, 0, 1, 1], [], []>} : vector<8x8xf32>, vector<8x128xf32>, vector<8x128xf32> -> vector<8x128xf32>
    %c0_14 = arith.constant 0 : index
    %c0_15 = arith.constant 0 : index
    %16 = vector.load %arg5[%c0_14, %c0_15] : memref<1x128xf32, #tpu.memory_space<vmem>>, vector<1x128xf32>
    %17 = vector.broadcast %16 : vector<1x128xf32> to vector<8x128xf32>
    %18 = arith.addf %15, %17 : vector<8x128xf32>
    %19 = vector.extract_strided_slice %18 {offsets = [0, 0], sizes = [4, 128], strides = [1, 1]} : vector<8x128xf32> to vector<4x128xf32>
    %20 = vector.extract_strided_slice %18 {offsets = [4, 0], sizes = [4, 128], strides = [1, 1]} : vector<8x128xf32> to vector<4x128xf32>
    %21 = arith.addf %19, %20 : vector<4x128xf32>
    %cst_16 = arith.constant 0.000000e+00 : f32
    %22 = vector.broadcast %cst_16 : f32 to vector<4x128xf32>
    %23 = arith.subf %22, %21 : vector<4x128xf32>
    %24 = math.exp %23 : vector<4x128xf32>
    %cst_17 = arith.constant 1.000000e+00 : f32
    %25 = vector.broadcast %cst_17 : f32 to vector<4x128xf32>
    %26 = arith.addf %25, %24 : vector<4x128xf32>
    %27 = tpu.reciprocal %26 : vector<4x128xf32> -> vector<4x128xf32>
    %28 = vector.shape_cast %27 : vector<4x128xf32> to vector<4x1x1x128xf32>
    %29 = vector.broadcast %28 : vector<4x1x1x128xf32> to vector<4x16x16x128xf32>
    %30 = arith.mulf %0, %29 : vector<4x16x16x128xf32>
    %cst_18 = arith.constant dense<0xFF800000> : vector<4x16x16xf32>
    %31 = vector.multi_reduction <maximumf>, %30, %cst_18 [3] : vector<4x16x16x128xf32> to vector<4x16x16xf32>
    %32 = vector.shape_cast %30 : vector<4x16x16x128xf32> to vector<1024x128xf32>
    %c0_19 = arith.constant 0 : index
    %c0_20 = arith.constant 0 : index
    %33 = vector.load %arg6[%c0_19, %c0_20] : memref<128x1xf32, #tpu.memory_space<vmem>>, vector<128x1xf32>
    %cst_21 = arith.constant dense<0.000000e+00> : vector<1024x1xf32>
    %34 = tpu.matmul %32, %33, %cst_21 {dimension_numbers = #tpu.dot_dimension_numbers<[1], [0], [0], [1], [0, 0, 1, 1], [], []>} : vector<1024x128xf32>, vector<128x1xf32>, vector<1024x1xf32> -> vector<1024x1xf32>
    %35 = vector.shape_cast %34 : vector<1024x1xf32> to vector<4x16x16xf32>
    %36 = tpu.concatenate %31, %35 in 2 : vector<4x16x16xf32>, vector<4x16x16xf32> -> vector<4x16x32xf32>
    %cst_22 = arith.constant 0.000000e+00 : f32
    %37 = vector.broadcast %cst_22 : f32 to vector<4x3x32xf32>
    %38 = tpu.concatenate %37, %36, %37 in 1 : vector<4x3x32xf32>, vector<4x16x32xf32>, vector<4x3x32xf32> -> vector<4x22x32xf32>
    %cst_23 = arith.constant 0.000000e+00 : f32
    %39 = vector.broadcast %cst_23 : f32 to vector<64x16xf32>
    %40 = vector.extract_strided_slice %38 {offsets = [0, 0, 0], sizes = [4, 16, 32], strides = [1, 1, 1]} : vector<4x22x32xf32> to vector<4x16x32xf32>
    %41 = vector.shape_cast %40 : vector<4x16x32xf32> to vector<64x32xf32>
    %c0_24 = arith.constant 0 : index
    %c0_25 = arith.constant 0 : index
    %c0_26 = arith.constant 0 : index
    %42 = vector.load %arg7[%c0_24, %c0_25, %c0_26] : memref<7x32x16xf32, #tpu.memory_space<vmem>>, vector<1x32x16xf32>
    %43 = vector.shape_cast %42 : vector<1x32x16xf32> to vector<32x16xf32>
    %cst_27 = arith.constant dense<0.000000e+00> : vector<64x16xf32>
    %44 = tpu.matmul %41, %43, %cst_27 {dimension_numbers = #tpu.dot_dimension_numbers<[1], [0], [0], [1], [0, 0, 1, 1], [], []>} : vector<64x32xf32>, vector<32x16xf32>, vector<64x16xf32> -> vector<64x16xf32>
    %45 = arith.addf %39, %44 : vector<64x16xf32>
    %46 = vector.extract_strided_slice %38 {offsets = [0, 1, 0], sizes = [4, 16, 32], strides = [1, 1, 1]} : vector<4x22x32xf32> to vector<4x16x32xf32>
    %47 = vector.shape_cast %46 : vector<4x16x32xf32> to vector<64x32xf32>
    %c1 = arith.constant 1 : index
    %c0_28 = arith.constant 0 : index
    %c0_29 = arith.constant 0 : index
    %48 = vector.load %arg7[%c1, %c0_28, %c0_29] : memref<7x32x16xf32, #tpu.memory_space<vmem>>, vector<1x32x16xf32>
    %49 = vector.shape_cast %48 : vector<1x32x16xf32> to vector<32x16xf32>
    %cst_30 = arith.constant dense<0.000000e+00> : vector<64x16xf32>
    %50 = tpu.matmul %47, %49, %cst_30 {dimension_numbers = #tpu.dot_dimension_numbers<[1], [0], [0], [1], [0, 0, 1, 1], [], []>} : vector<64x32xf32>, vector<32x16xf32>, vector<64x16xf32> -> vector<64x16xf32>
    %51 = arith.addf %45, %50 : vector<64x16xf32>
    %52 = vector.extract_strided_slice %38 {offsets = [0, 2, 0], sizes = [4, 16, 32], strides = [1, 1, 1]} : vector<4x22x32xf32> to vector<4x16x32xf32>
    %53 = vector.shape_cast %52 : vector<4x16x32xf32> to vector<64x32xf32>
    %c2 = arith.constant 2 : index
    %c0_31 = arith.constant 0 : index
    %c0_32 = arith.constant 0 : index
    %54 = vector.load %arg7[%c2, %c0_31, %c0_32] : memref<7x32x16xf32, #tpu.memory_space<vmem>>, vector<1x32x16xf32>
    %55 = vector.shape_cast %54 : vector<1x32x16xf32> to vector<32x16xf32>
    %cst_33 = arith.constant dense<0.000000e+00> : vector<64x16xf32>
    %56 = tpu.matmul %53, %55, %cst_33 {dimension_numbers = #tpu.dot_dimension_numbers<[1], [0], [0], [1], [0, 0, 1, 1], [], []>} : vector<64x32xf32>, vector<32x16xf32>, vector<64x16xf32> -> vector<64x16xf32>
    %57 = arith.addf %51, %56 : vector<64x16xf32>
    %58 = vector.extract_strided_slice %38 {offsets = [0, 3, 0], sizes = [4, 16, 32], strides = [1, 1, 1]} : vector<4x22x32xf32> to vector<4x16x32xf32>
    %59 = vector.shape_cast %58 : vector<4x16x32xf32> to vector<64x32xf32>
    %c3 = arith.constant 3 : index
    %c0_34 = arith.constant 0 : index
    %c0_35 = arith.constant 0 : index
    %60 = vector.load %arg7[%c3, %c0_34, %c0_35] : memref<7x32x16xf32, #tpu.memory_space<vmem>>, vector<1x32x16xf32>
    %61 = vector.shape_cast %60 : vector<1x32x16xf32> to vector<32x16xf32>
    %cst_36 = arith.constant dense<0.000000e+00> : vector<64x16xf32>
    %62 = tpu.matmul %59, %61, %cst_36 {dimension_numbers = #tpu.dot_dimension_numbers<[1], [0], [0], [1], [0, 0, 1, 1], [], []>} : vector<64x32xf32>, vector<32x16xf32>, vector<64x16xf32> -> vector<64x16xf32>
    %63 = arith.addf %57, %62 : vector<64x16xf32>
    %64 = vector.extract_strided_slice %38 {offsets = [0, 4, 0], sizes = [4, 16, 32], strides = [1, 1, 1]} : vector<4x22x32xf32> to vector<4x16x32xf32>
    %65 = vector.shape_cast %64 : vector<4x16x32xf32> to vector<64x32xf32>
    %c4 = arith.constant 4 : index
    %c0_37 = arith.constant 0 : index
    %c0_38 = arith.constant 0 : index
    %66 = vector.load %arg7[%c4, %c0_37, %c0_38] : memref<7x32x16xf32, #tpu.memory_space<vmem>>, vector<1x32x16xf32>
    %67 = vector.shape_cast %66 : vector<1x32x16xf32> to vector<32x16xf32>
    %cst_39 = arith.constant dense<0.000000e+00> : vector<64x16xf32>
    %68 = tpu.matmul %65, %67, %cst_39 {dimension_numbers = #tpu.dot_dimension_numbers<[1], [0], [0], [1], [0, 0, 1, 1], [], []>} : vector<64x32xf32>, vector<32x16xf32>, vector<64x16xf32> -> vector<64x16xf32>
    %69 = arith.addf %63, %68 : vector<64x16xf32>
    %70 = vector.extract_strided_slice %38 {offsets = [0, 5, 0], sizes = [4, 16, 32], strides = [1, 1, 1]} : vector<4x22x32xf32> to vector<4x16x32xf32>
    %71 = vector.shape_cast %70 : vector<4x16x32xf32> to vector<64x32xf32>
    %c5 = arith.constant 5 : index
    %c0_40 = arith.constant 0 : index
    %c0_41 = arith.constant 0 : index
    %72 = vector.load %arg7[%c5, %c0_40, %c0_41] : memref<7x32x16xf32, #tpu.memory_space<vmem>>, vector<1x32x16xf32>
    %73 = vector.shape_cast %72 : vector<1x32x16xf32> to vector<32x16xf32>
    %cst_42 = arith.constant dense<0.000000e+00> : vector<64x16xf32>
    %74 = tpu.matmul %71, %73, %cst_42 {dimension_numbers = #tpu.dot_dimension_numbers<[1], [0], [0], [1], [0, 0, 1, 1], [], []>} : vector<64x32xf32>, vector<32x16xf32>, vector<64x16xf32> -> vector<64x16xf32>
    %75 = arith.addf %69, %74 : vector<64x16xf32>
    %76 = vector.extract_strided_slice %38 {offsets = [0, 6, 0], sizes = [4, 16, 32], strides = [1, 1, 1]} : vector<4x22x32xf32> to vector<4x16x32xf32>
    %77 = vector.shape_cast %76 : vector<4x16x32xf32> to vector<64x32xf32>
    %c6 = arith.constant 6 : index
    %c0_43 = arith.constant 0 : index
    %c0_44 = arith.constant 0 : index
    %78 = vector.load %arg7[%c6, %c0_43, %c0_44] : memref<7x32x16xf32, #tpu.memory_space<vmem>>, vector<1x32x16xf32>
    %79 = vector.shape_cast %78 : vector<1x32x16xf32> to vector<32x16xf32>
    %cst_45 = arith.constant dense<0.000000e+00> : vector<64x16xf32>
    %80 = tpu.matmul %77, %79, %cst_45 {dimension_numbers = #tpu.dot_dimension_numbers<[1], [0], [0], [1], [0, 0, 1, 1], [], []>} : vector<64x32xf32>, vector<32x16xf32>, vector<64x16xf32> -> vector<64x16xf32>
    %81 = arith.addf %75, %80 : vector<64x16xf32>
    %c0_46 = arith.constant 0 : index
    %82 = memref.load %arg8[%c0_46] : memref<1xf32, #tpu.memory_space<smem>>
    %83 = vector.broadcast %82 : f32 to vector<64x16xf32>
    %84 = arith.addf %81, %83 : vector<64x16xf32>
    %cst_47 = arith.constant 0.000000e+00 : f32
    %85 = vector.broadcast %cst_47 : f32 to vector<64x16xf32>
    %86 = arith.subf %85, %84 : vector<64x16xf32>
    %87 = math.exp %86 : vector<64x16xf32>
    %cst_48 = arith.constant 1.000000e+00 : f32
    %88 = vector.broadcast %cst_48 : f32 to vector<64x16xf32>
    %89 = arith.addf %88, %87 : vector<64x16xf32>
    %90 = tpu.reciprocal %89 : vector<64x16xf32> -> vector<64x16xf32>
    %91 = vector.shape_cast %90 : vector<64x16xf32> to vector<4x16x16xf32>
    %92 = vector.shape_cast %91 : vector<4x16x16xf32> to vector<4x16x16x1xf32>
    %93 = vector.broadcast %92 : vector<4x16x16x1xf32> to vector<4x16x16x128xf32>
    %94 = arith.mulf %30, %93 : vector<4x16x16x128xf32>
    %c0_49 = arith.constant 0 : index
    %c0_50 = arith.constant 0 : index
    %c0_51 = arith.constant 0 : index
    %c0_52 = arith.constant 0 : index
    %95 = vector.load %arg9[%c0_49, %c0_50, %c0_51, %c0_52] : memref<4x16x16x128xf32, #tpu.memory_space<vmem>>, vector<4x16x16x128xf32>
    tpu.vector_store %arg9[%c0_49, %c0_50, %c0_51, %c0_52], %94 {strides = array<i32>} : memref<4x16x16x128xf32, #tpu.memory_space<vmem>>, vector<4x16x16x128xf32>,
    return
  }
  func.func @transform_0(%arg0: i32) -> (i32, i32, i32, i32) {
    %c0_i32 = arith.constant 0 : i32
    %c0_i32_0 = arith.constant 0 : i32
    %c0_i32_1 = arith.constant 0 : i32
    %c0_i32_2 = arith.constant 0 : i32
    return %arg0, %c0_i32, %c0_i32_0, %c0_i32_1 : i32, i32, i32, i32
  }
  func.func @transform_1(%arg0: i32) -> (i32, i32) {
    %c0_i32 = arith.constant 0 : i32
    %c0_i32_0 = arith.constant 0 : i32
    %c0_i32_1 = arith.constant 0 : i32
    return %c0_i32, %c0_i32_0 : i32, i32
  }
  func.func @transform_2(%arg0: i32) -> (i32, i32) {
    %c0_i32 = arith.constant 0 : i32
    %c0_i32_0 = arith.constant 0 : i32
    %c0_i32_1 = arith.constant 0 : i32
    return %c0_i32, %c0_i32_0 : i32, i32
  }
  func.func @transform_3(%arg0: i32) -> (i32, i32) {
    %c0_i32 = arith.constant 0 : i32
    %c0_i32_0 = arith.constant 0 : i32
    %c0_i32_1 = arith.constant 0 : i32
    return %c0_i32, %c0_i32_0 : i32, i32
  }
  func.func @transform_4(%arg0: i32) -> (i32, i32) {
    %c0_i32 = arith.constant 0 : i32
    %c0_i32_0 = arith.constant 0 : i32
    %c0_i32_1 = arith.constant 0 : i32
    return %c0_i32, %c0_i32_0 : i32, i32
  }
  func.func @transform_5(%arg0: i32) -> (i32, i32) {
    %c0_i32 = arith.constant 0 : i32
    %c0_i32_0 = arith.constant 0 : i32
    %c0_i32_1 = arith.constant 0 : i32
    return %c0_i32, %c0_i32_0 : i32, i32
  }
  func.func @transform_6(%arg0: i32) -> (i32, i32, i32) {
    %c0_i32 = arith.constant 0 : i32
    %c0_i32_0 = arith.constant 0 : i32
    %c0_i32_1 = arith.constant 0 : i32
    %c0_i32_2 = arith.constant 0 : i32
    return %c0_i32, %c0_i32_0, %c0_i32_1 : i32, i32, i32
  }
  func.func @transform_7(%arg0: i32) -> i32 {
    %c0_i32 = arith.constant 0 : i32
    %c0_i32_0 = arith.constant 0 : i32
    return %c0_i32 : i32
  }
  func.func @transform_8(%arg0: i32) -> (i32, i32, i32, i32) {
    %c0_i32 = arith.constant 0 : i32
    %c0_i32_0 = arith.constant 0 : i32
    %c0_i32_1 = arith.constant 0 : i32
    %c0_i32_2 = arith.constant 0 : i32
    return %arg0, %c0_i32, %c0_i32_0, %c0_i32_1 : i32, i32, i32, i32
  }
}

</mosaic_0001>

<llo_original>
// kernel: tpu_custom_call.1
$region0: #{tpu_custom_call.1}
  #allocation0 [shape = 'u32[]', space=smem, size = 0x4, offset = 0x4, fixed_abs, tag = 'smem constant byte address 0x4 - core index']
  #allocation1 [shape = 'u32[72,128]{1,0:T(1,128)}', space=vmem, size = 0x9000, scoped, tag = 'internal scratch']
  #allocation2 [shape = 'f32[1]{0:T(128)S(6)}', space=smem, size = 0x200, scoped, tag = 'scoped memory for tpu_custom_call.1']
  %s0 = inlined_call_operand.hbm [shape: f32[8,16,16,128], index: 0, kind: input, shape index: {}]
  %s1 = inlined_call_operand.vmem [shape: f32[128,8], index: 1, kind: input, shape index: {}]
  %s2 = inlined_call_operand.vmem [shape: f32[1,8], index: 2, kind: input, shape index: {}]
  %s3 = inlined_call_operand.vmem [shape: f32[8,128], index: 3, kind: input, shape index: {}]
  %s4 = inlined_call_operand.vmem [shape: f32[1,128], index: 4, kind: input, shape index: {}]
  %s5 = inlined_call_operand.vmem [shape: f32[128,1], index: 5, kind: input, shape index: {}]
  %s6 = inlined_call_operand.vmem [shape: f32[7,32,16], index: 6, kind: input, shape index: {}]
  %s7 = inlined_call_operand.<no memory space> [shape: f32[1], index: 7, kind: input, shape index: {}]
  %s8 = inlined_call_operand.hbm [shape: f32[8,16,16,128], index: 8, kind: output, shape index: {}]
  %s9 = sld [smem:[#allocation0]]
  $region69: #{tpu_custom_call.1} parent=0
    _
  %s11 = ssub.s32 1, %s9
  %s12 = scalar_select 0, %s11, %s9
  %13 = sst [smem:[#allocation2]] %s7
  $region1: #{tpu_custom_call.1} parent=0
    #allocation3 [shape = 'u8[1048576]{0}', space=vmem, size = 0x100000, scoped, tag = 'input window, operand 0']
    #allocation4 [shape = 's32[2]{0}', space=sflag, size = 0x8, scoped, tag = 'scoped memory for tpu_custom_call.1']
    #allocation5 [shape = 's32[2]{0}', space=sflag, size = 0x8, scoped, tag = 'scoped memory for tpu_custom_call.1']
    #allocation6 [shape = 'u8[1048576]{0}', space=vmem, size = 0x100000, scoped, tag = 'output window, operand 0']
    %14 = vsyncpa [#allocation4], 0
    %s15 = scalar_lea.sflag [#allocation4], 1
    %16 = vsyncpa %s15, 0
    %17 = vsyncpa [#allocation5], 0
    %s18 = scalar_lea.sflag [#allocation5], 1
    %19 = vsyncpa %s18, 0
    loop: start=0, step=1, limit=4
    $region2: #{tpu_custom_call.1} parent=1 // loop_pre_header
      _
    $region3: #{tpu_custom_call.1} parent=1 // loop_header
      %s21 = sphi 0, %s25
      %p22 = scmp.ge.s32.totalorder %s21, 4
      %s31 = sphi 0, %s33
      %s34 = sphi 0, %s31
      %s35 = sphi 0, %s34
      %s51 = sphi 0, %s35
      %s55 = sphi 0, %s55
      %s57 = sphi 0, %s55
      %s58 = sphi 0, %s57
      %s72 = sphi 0, %s58
      %s76 = sphi 0, %s76
      %s78 = sphi 0, %s76
      %s79 = sphi 0, %s78
      %s93 = sphi 0, %s79
      %s97 = sphi 0, %s97
      %s99 = sphi 0, %s97
      %s100 = sphi 0, %s99
      %s114 = sphi 0, %s100
      %s118 = sphi 0, %s118
      %s120 = sphi 0, %s118
      %s121 = sphi 0, %s120
      %s135 = sphi 0, %s121
      %s139 = sphi 0, %s139
      %s141 = sphi 0, %s139
      %s142 = sphi 0, %s141
      %s156 = sphi 0, %s142
      %s160 = sphi 0, %s160
      %s162 = sphi 0, %s160
      %s163 = sphi 0, %s162
      %s177 = sphi 0, %s163
      %s181 = sphi 0, %s181
      %s183 = sphi 0, %s181
      %s184 = sphi 0, %s183
      %s198 = sphi 0, %s184
      %s204 = sphi 0, %s206
      %s207 = sphi 0, %s204
      %s208 = sphi 0, %s207
      %s224 = sphi 0, %s208
    $region4: #{tpu_custom_call.1} parent=1 // loop_header_branch
      %24 = sbr.rel (%p22) target = $region8
    $region5: #{tpu_custom_call.1} parent=1 // loop_body
      %s26 = ssub.s32 %s21, 1
      %s27 = ssub.s32 %s21, 2
      %s28 = sadd.s32 %s21, 1
      %s29 = ssub.s32 %s21, %s28
      %p30 = scmp.eq.s32.totalorder %s29, 0
      %s32 = sadd.s32 %s31, 1
      %s33 = scalar_select %p30, %s31, %s32
      %p36 = pneg %p30
      %p37 = scmp.eq.s32.totalorder %s21, 1
      %p38 = por %p36, %p37
      %p39 = scmp.ne.s32.totalorder %s31, %s34
      %p40 = scmp.eq.s32.totalorder %s21, 0
      %p41 = por %p39, %p40
      %p42 = scmp.ne.s32.totalorder %s31, %s34
      %p43 = scmp.eq.s32.totalorder %s26, 1
      %p44 = por %p42, %p43
      %p45 = scmp.ne.s32.totalorder %s34, %s35
      %p46 = scmp.eq.s32.totalorder %s26, 0
      %p47 = por %p45, %p46
      %p48 = scmp.ne.s32.totalorder %s34, %s35
      %p49 = scmp.eq.s32.totalorder %s27, 1
      %p50 = por %p48, %p49
      %p52 = scmp.ne.s32.totalorder %s35, %s51
      %p53 = scmp.eq.s32.totalorder %s27, 0
      %p54 = por %p52, %p53
      %s56 = sadd.s32 %s55, 1
      %p59 = scmp.eq.s32.totalorder %s21, 1
      %p60 = scmp.ne.s32.totalorder %s55, %s57
      %p61 = scmp.eq.s32.totalorder %s21, 0
      %p62 = por %p60, %p61
      %p63 = scmp.ne.s32.totalorder %s55, %s57
      %p64 = scmp.eq.s32.totalorder %s26, 1
      %p65 = por %p63, %p64
      %p66 = scmp.ne.s32.totalorder %s57, %s58
      %p67 = scmp.eq.s32.totalorder %s26, 0
      %p68 = por %p66, %p67
      %p69 = scmp.ne.s32.totalorder %s57, %s58
      %p70 = scmp.eq.s32.totalorder %s27, 1
      %p71 = por %p69, %p70
      %p73 = scmp.ne.s32.totalorder %s58, %s72
      %p74 = scmp.eq.s32.totalorder %s27, 0
      %p75 = por %p73, %p74
      %s77 = sadd.s32 %s76, 1
      %p80 = scmp.eq.s32.totalorder %s21, 1
      %p81 = scmp.ne.s32.totalorder %s76, %s78
      %p82 = scmp.eq.s32.totalorder %s21, 0
      %p83 = por %p81, %p82
      %p84 = scmp.ne.s32.totalorder %s76, %s78
      %p85 = scmp.eq.s32.totalorder %s26, 1
      %p86 = por %p84, %p85
      %p87 = scmp.ne.s32.totalorder %s78, %s79
      %p88 = scmp.eq.s32.totalorder %s26, 0
      %p89 = por %p87, %p88
      %p90 = scmp.ne.s32.totalorder %s78, %s79
      %p91 = scmp.eq.s32.totalorder %s27, 1
      %p92 = por %p90, %p91
      %p94 = scmp.ne.s32.totalorder %s79, %s93
      %p95 = scmp.eq.s32.totalorder %s27, 0
      %p96 = por %p94, %p95
      %s98 = sadd.s32 %s97, 1
      %p101 = scmp.eq.s32.totalorder %s21, 1
      %p102 = scmp.ne.s32.totalorder %s97, %s99
      %p103 = scmp.eq.s32.totalorder %s21, 0
      %p104 = por %p102, %p103
      %p105 = scmp.ne.s32.totalorder %s97, %s99
      %p106 = scmp.eq.s32.totalorder %s26, 1
      %p107 = por %p105, %p106
      %p108 = scmp.ne.s32.totalorder %s99, %s100
      %p109 = scmp.eq.s32.totalorder %s26, 0
      %p110 = por %p108, %p109
      %p111 = scmp.ne.s32.totalorder %s99, %s100
      %p112 = scmp.eq.s32.totalorder %s27, 1
      %p113 = por %p111, %p112
      %p115 = scmp.ne.s32.totalorder %s100, %s114
      %p116 = scmp.eq.s32.totalorder %s27, 0
      %p117 = por %p115, %p116
      %s119 = sadd.s32 %s118, 1
      %p122 = scmp.eq.s32.totalorder %s21, 1
      %p123 = scmp.ne.s32.totalorder %s118, %s120
      %p124 = scmp.eq.s32.totalorder %s21, 0
      %p125 = por %p123, %p124
      %p126 = scmp.ne.s32.totalorder %s118, %s120
      %p127 = scmp.eq.s32.totalorder %s26, 1
      %p128 = por %p126, %p127
      %p129 = scmp.ne.s32.totalorder %s120, %s121
      %p130 = scmp.eq.s32.totalorder %s26, 0
      %p131 = por %p129, %p130
      %p132 = scmp.ne.s32.totalorder %s120, %s121
      %p133 = scmp.eq.s32.totalorder %s27, 1
      %p134 = por %p132, %p133
      %p136 = scmp.ne.s32.totalorder %s121, %s135
      %p137 = scmp.eq.s32.totalorder %s27, 0
      %p138 = por %p136, %p137
      %s140 = sadd.s32 %s139, 1
      %p143 = scmp.eq.s32.totalorder %s21, 1
      %p144 = scmp.ne.s32.totalorder %s139, %s141
      %p145 = scmp.eq.s32.totalorder %s21, 0
      %p146 = por %p144, %p145
      %p147 = scmp.ne.s32.totalorder %s139, %s141
      %p148 = scmp.eq.s32.totalorder %s26, 1
      %p149 = por %p147, %p148
      %p150 = scmp.ne.s32.totalorder %s141, %s142
      %p151 = scmp.eq.s32.totalorder %s26, 0
      %p152 = por %p150, %p151
      %p153 = scmp.ne.s32.totalorder %s141, %s142
      %p154 = scmp.eq.s32.totalorder %s27, 1
      %p155 = por %p153, %p154
      %p157 = scmp.ne.s32.totalorder %s142, %s156
      %p158 = scmp.eq.s32.totalorder %s27, 0
      %p159 = por %p157, %p158
      %s161 = sadd.s32 %s160, 1
      %p164 = scmp.eq.s32.totalorder %s21, 1
      %p165 = scmp.ne.s32.totalorder %s160, %s162
      %p166 = scmp.eq.s32.totalorder %s21, 0
      %p167 = por %p165, %p166
      %p168 = scmp.ne.s32.totalorder %s160, %s162
      %p169 = scmp.eq.s32.totalorder %s26, 1
      %p170 = por %p168, %p169
      %p171 = scmp.ne.s32.totalorder %s162, %s163
      %p172 = scmp.eq.s32.totalorder %s26, 0
      %p173 = por %p171, %p172
      %p174 = scmp.ne.s32.totalorder %s162, %s163
      %p175 = scmp.eq.s32.totalorder %s27, 1
      %p176 = por %p174, %p175
      %p178 = scmp.ne.s32.totalorder %s163, %s177
      %p179 = scmp.eq.s32.totalorder %s27, 0
      %p180 = por %p178, %p179
      %s182 = sadd.s32 %s181, 1
      %p185 = scmp.eq.s32.totalorder %s21, 1
      %p186 = scmp.ne.s32.totalorder %s181, %s183
      %p187 = scmp.eq.s32.totalorder %s21, 0
      %p188 = por %p186, %p187
      %p189 = scmp.ne.s32.totalorder %s181, %s183
      %p190 = scmp.eq.s32.totalorder %s26, 1
      %p191 = por %p189, %p190
      %p192 = scmp.ne.s32.totalorder %s183, %s184
      %p193 = scmp.eq.s32.totalorder %s26, 0
      %p194 = por %p192, %p193
      %p195 = scmp.ne.s32.totalorder %s183, %s184
      %p196 = scmp.eq.s32.totalorder %s27, 1
      %p197 = por %p195, %p196
      %p199 = scmp.ne.s32.totalorder %s184, %s198
      %p200 = scmp.eq.s32.totalorder %s27, 0
      %p201 = por %p199, %p200
      %s202 = ssub.s32 %s21, %s28
      %p203 = scmp.eq.s32.totalorder %s202, 0
      %s205 = sadd.s32 %s204, 1
      %s206 = scalar_select %p203, %s204, %s205
      %p209 = pneg %p203
      %p210 = scmp.eq.s32.totalorder %s21, 1
      %p211 = por %p209, %p210
      %p212 = scmp.ne.s32.totalorder %s204, %s207
      %p213 = scmp.eq.s32.totalorder %s21, 0
      %p214 = por %p212, %p213
      %p215 = scmp.ne.s32.totalorder %s204, %s207
      %p216 = scmp.eq.s32.totalorder %s26, 1
      %p217 = por %p215, %p216
      %p218 = scmp.ne.s32.totalorder %s207, %s208
      %p219 = scmp.eq.s32.totalorder %s26, 0
      %p220 = por %p218, %p219
      %p221 = scmp.ne.s32.totalorder %s207, %s208
      %p222 = scmp.eq.s32.totalorder %s27, 1
      %p223 = por %p221, %p222
      %p225 = scmp.ne.s32.totalorder %s208, %s224
      %p226 = scmp.eq.s32.totalorder %s27, 0
      %p227 = por %p225, %p226
      %p228 = scmp.le.s32.totalorder 1, %s21
      %p229 = scmp.lt.s32.totalorder %s21, 3
      %p230 = pnand %p228, %p229
      %p231 = pneg %p230
      // Predicated region
      $region9: #{tpu_custom_call.1} parent=5 // pred_check
        _
      $region10: #{tpu_custom_call.1} parent=5 // pred_check_branch
        %233 = sbr.rel (%p230) target = $region12
      $region11: #{tpu_custom_call.1} parent=5 // pred_region
        %s234 = ssub.s32 %s21, 1
        // Predicated region
        $region13: #{tpu_custom_call.1} parent=11 // pred_check
          %p235 = pneg %p68
        $region14: #{tpu_custom_call.1} parent=11 // pred_check_branch
          %237 = sbr.rel (%p235) target = $region16
        $region15: #{tpu_custom_call.1} parent=11 // pred_region
          _
        $region16: #{tpu_custom_call.1} parent=11 // pred_fallthru
          _
        // Predicated region
        $region17: #{tpu_custom_call.1} parent=11 // pred_check
          %p238 = pneg %p89
        $region18: #{tpu_custom_call.1} parent=11 // pred_check_branch
          %240 = sbr.rel (%p238) target = $region20
        $region19: #{tpu_custom_call.1} parent=11 // pred_region
          _
        $region20: #{tpu_custom_call.1} parent=11 // pred_fallthru
          _
        // Predicated region
        $region21: #{tpu_custom_call.1} parent=11 // pred_check
          %p241 = pneg %p110
        $region22: #{tpu_custom_call.1} parent=11 // pred_check_branch
          %243 = sbr.rel (%p241) target = $region24
        $region23: #{tpu_custom_call.1} parent=11 // pred_region
          _
        $region24: #{tpu_custom_call.1} parent=11 // pred_fallthru
          _
        // Predicated region
        $region25: #{tpu_custom_call.1} parent=11 // pred_check
          %p244 = pneg %p131
        $region26: #{tpu_custom_call.1} parent=11 // pred_check_branch
          %246 = sbr.rel (%p244) target = $region28
        $region27: #{tpu_custom_call.1} parent=11 // pred_region
          _
        $region28: #{tpu_custom_call.1} parent=11 // pred_fallthru
          _
        // Predicated region
        $region29: #{tpu_custom_call.1} parent=11 // pred_check
          %p247 = pneg %p152
        $region30: #{tpu_custom_call.1} parent=11 // pred_check_branch
          %249 = sbr.rel (%p247) target = $region32
        $region31: #{tpu_custom_call.1} parent=11 // pred_region
          _
        $region32: #{tpu_custom_call.1} parent=11 // pred_fallthru
          _
        // Predicated region
        $region33: #{tpu_custom_call.1} parent=11 // pred_check
          %p250 = pneg %p173
        $region34: #{tpu_custom_call.1} parent=11 // pred_check_branch
          %252 = sbr.rel (%p250) target = $region36
        $region35: #{tpu_custom_call.1} parent=11 // pred_region
          _
        $region36: #{tpu_custom_call.1} parent=11 // pred_fallthru
          _
        // Predicated region
        $region37: #{tpu_custom_call.1} parent=11 // pred_check
          %p253 = pneg %p194
        $region38: #{tpu_custom_call.1} parent=11 // pred_check_branch
          %255 = sbr.rel (%p253) target = $region40
        $region39: #{tpu_custom_call.1} parent=11 // pred_region
          _
        $region40: #{tpu_custom_call.1} parent=11 // pred_fallthru
          _
      $region12: #{tpu_custom_call.1} parent=5 // pred_fallthru
        _
      %p256 = scmp.lt.s32.totalorder %s21, 2
      // Predicated region
      $region41: #{tpu_custom_call.1} parent=5 // pred_check
        %p257 = pneg %p256
      $region42: #{tpu_custom_call.1} parent=5 // pred_check_branch
        %259 = sbr.rel (%p257) target = $region44
      $region43: #{tpu_custom_call.1} parent=5 // pred_region
        // Predicated region
        $region45: #{tpu_custom_call.1} parent=43 // pred_check
          %p260 = pneg %p41
        $region46: #{tpu_custom_call.1} parent=43 // pred_check_branch
          %262 = sbr.rel (%p260) target = $region48
        $region47: #{tpu_custom_call.1} parent=43 // pred_region
          %s263 = sand.u32 %s31, 1
          %s264 = scalar_lea.sflag [#allocation4], %s263
          %s265 = sand.u32 %s31, 1
          %s266 = smul.addr %s265, 1024
          %s267 = scalar_lea.vmem [#allocation3], %s266
          %s268 = smul.u32 4, %s21
          %270 = vsyncadd %s264, 0
          %s271 = smul.addr %s268, 32
          %s272 = smul.addr %s271, 8
          %s273 = scalar_lea.hbm %s0, %s272
          %s274 = sshll.u32 %s273, 4
          %s275 = int_to_ptr.hbm [resolvable:$true] %s274
          %s276 = sshll.u32 %s267, 4
          %s277 = int_to_ptr.vmem [resolvable:$true] %s276
          %282 = dma.hbm_to_vmem [thread:$0]  %s275, 16384, %s277, %s264, 128, 128, 8
        $region48: #{tpu_custom_call.1} parent=43 // pred_fallthru
          _
      $region44: #{tpu_custom_call.1} parent=5 // pred_fallthru
        _
      %p283 = scmp.le.s32.totalorder 1, %s21
      %p284 = scmp.lt.s32.totalorder %s21, 3
      %p285 = pnand %p283, %p284
      %p286 = pneg %p285
      // Predicated region
      $region49: #{tpu_custom_call.1} parent=5 // pred_check
        _
      $region50: #{tpu_custom_call.1} parent=5 // pred_check_branch
        %288 = sbr.rel (%p285) target = $region52
      $region51: #{tpu_custom_call.1} parent=5 // pred_region
        %s289 = ssub.s32 %s21, 1
        %s290 = sand.u32 %s34, 1
        %s291 = scalar_lea.sflag [#allocation4], %s290
        %s292 = sand.u32 %s34, 1
        %s293 = smul.addr %s292, 1024
        %s294 = scalar_lea.vmem [#allocation3], %s293
        // Predicated region
        $region53: #{tpu_custom_call.1} parent=51 // pred_check
          %p295 = pneg %p47
        $region54: #{tpu_custom_call.1} parent=51 // pred_check_branch
          %297 = sbr.rel (%p295) target = $region56
        $region55: #{tpu_custom_call.1} parent=51 // pred_region
          %299 = dma.done %s291, 16384
        $region56: #{tpu_custom_call.1} parent=51 // pred_fallthru
          _
        %s300 = sand.u32 %s34, 1
        %s301 = scalar_lea.sflag [#allocation4], %s300
        %s302 = sand.u32 %s34, 1
        %s303 = smul.addr %s302, 1024
        %s304 = scalar_lea.vmem [#allocation3], %s303
        %p305 = pneg %p47
        %p306 = pneg %p44
        %p307 = pneg %p68
        %p308 = pneg %p65
        %p309 = pneg %p89
        %p310 = pneg %p86
        %p311 = pneg %p110
        %p312 = pneg %p107
        %p313 = pneg %p131
        %p314 = pneg %p128
        %p315 = pneg %p152
        %p316 = pneg %p149
        %p317 = pneg %p173
        %p318 = pneg %p170
        %p319 = pneg %p194
        %p320 = pneg %p191
        %p321 = pneg %p220
        %p322 = pneg %p217
        %s323 = sand.u32 %s207, 1
        %s324 = scalar_lea.sflag [#allocation5], %s323
        %s325 = sand.u32 %s207, 1
        %s326 = smul.addr %s325, 1024
        %s327 = scalar_lea.vmem [#allocation6], %s326
        %s328 = smul.u32 4, %s26
        %s329 = smul.u32 4, %s26
        %v330 = vld [vmem:[%s294] sm:$0xff]
        %v331 = vld [vmem:[%s294 + $0x8] sm:$0xff]
        %v332 = vld [vmem:[%s294 + $0x10] sm:$0xff]
        %v333 = vld [vmem:[%s294 + $0x18] sm:$0xff]
        %v334 = vld [vmem:[%s294 + $0x20] sm:$0xff]
        %v335 = vld [vmem:[%s294 + $0x28] sm:$0xff]
        %v336 = vld [vmem:[%s294 + $0x30] sm:$0xff]
        %v337 = vld [vmem:[%s294 + $0x38] sm:$0xff]
        %v338 = vld [vmem:[%s294 + $0x40] sm:$0xff]
        %v339 = vld [vmem:[%s294 + $0x48] sm:$0xff]
        %v340 = vld [vmem:[%s294 + $0x50] sm:$0xff]
        %v341 = vld [vmem:[%s294 + $0x58] sm:$0xff]
        %v342 = vld [vmem:[%s294 + $0x60] sm:$0xff]
        %v343 = vld [vmem:[%s294 + $0x68] sm:$0xff]
        %v344 = vld [vmem:[%s294 + $0x70] sm:$0xff]
        %v345 = vld [vmem:[%s294 + $0x78] sm:$0xff]
        %v346 = vld [vmem:[%s294 + $0x80] sm:$0xff]
        %v347 = vld [vmem:[%s294 + $0x88] sm:$0xff]
        %v348 = vld [vmem:[%s294 + $0x90] sm:$0xff]
        %v349 = vld [vmem:[%s294 + $0x98] sm:$0xff]
        %v350 = vld [vmem:[%s294 + $0xa0] sm:$0xff]
        %v351 = vld [vmem:[%s294 + $0xa8] sm:$0xff]
        %v352 = vld [vmem:[%s294 + $0xb0] sm:$0xff]
        %v353 = vld [vmem:[%s294 + $0xb8] sm:$0xff]
        %v354 = vld [vmem:[%s294 + $0xc0] sm:$0xff]
        %v355 = vld [vmem:[%s294 + $0xc8] sm:$0xff]
        %v356 = vld [vmem:[%s294 + $0xd0] sm:$0xff]
        %v357 = vld [vmem:[%s294 + $0xd8] sm:$0xff]
        %v358 = vld [vmem:[%s294 + $0xe0] sm:$0xff]
        %v359 = vld [vmem:[%s294 + $0xe8] sm:$0xff]
        %v360 = vld [vmem:[%s294 + $0xf0] sm:$0xff]
        %v361 = vld [vmem:[%s294 + $0xf8] sm:$0xff]
        %v362 = vld [vmem:[%s294 + $0x100] sm:$0xff]
        %v363 = vld [vmem:[%s294 + $0x108] sm:$0xff]
        %v364 = vld [vmem:[%s294 + $0x110] sm:$0xff]
        %v365 = vld [vmem:[%s294 + $0x118] sm:$0xff]
        %v366 = vld [vmem:[%s294 + $0x120] sm:$0xff]
        %v367 = vld [vmem:[%s294 + $0x128] sm:$0xff]
        %v368 = vld [vmem:[%s294 + $0x130] sm:$0xff]
        %v369 = vld [vmem:[%s294 + $0x138] sm:$0xff]
        %v370 = vld [vmem:[%s294 + $0x140] sm:$0xff]
        %v371 = vld [vmem:[%s294 + $0x148] sm:$0xff]
        %v372 = vld [vmem:[%s294 + $0x150] sm:$0xff]
        %v373 = vld [vmem:[%s294 + $0x158] sm:$0xff]
        %v374 = vld [vmem:[%s294 + $0x160] sm:$0xff]
        %v375 = vld [vmem:[%s294 + $0x168] sm:$0xff]
        %v376 = vld [vmem:[%s294 + $0x170] sm:$0xff]
        %v377 = vld [vmem:[%s294 + $0x178] sm:$0xff]
        %v378 = vld [vmem:[%s294 + $0x180] sm:$0xff]
        %v379 = vld [vmem:[%s294 + $0x188] sm:$0xff]
        %v380 = vld [vmem:[%s294 + $0x190] sm:$0xff]
        %v381 = vld [vmem:[%s294 + $0x198] sm:$0xff]
        %v382 = vld [vmem:[%s294 + $0x1a0] sm:$0xff]
        %v383 = vld [vmem:[%s294 + $0x1a8] sm:$0xff]
        %v384 = vld [vmem:[%s294 + $0x1b0] sm:$0xff]
        %v385 = vld [vmem:[%s294 + $0x1b8] sm:$0xff]
        %v386 = vld [vmem:[%s294 + $0x1c0] sm:$0xff]
        %v387 = vld [vmem:[%s294 + $0x1c8] sm:$0xff]
        %v388 = vld [vmem:[%s294 + $0x1d0] sm:$0xff]
        %v389 = vld [vmem:[%s294 + $0x1d8] sm:$0xff]
        %v390 = vld [vmem:[%s294 + $0x1e0] sm:$0xff]
        %v391 = vld [vmem:[%s294 + $0x1e8] sm:$0xff]
        %v392 = vld [vmem:[%s294 + $0x1f0] sm:$0xff]
        %v393 = vld [vmem:[%s294 + $0x1f8] sm:$0xff]
        %v394 = vld [vmem:[%s294 + $0x200] sm:$0xff]
        %v395 = vld [vmem:[%s294 + $0x208] sm:$0xff]
        %v396 = vld [vmem:[%s294 + $0x210] sm:$0xff]
        %v397 = vld [vmem:[%s294 + $0x218] sm:$0xff]
        %v398 = vld [vmem:[%s294 + $0x220] sm:$0xff]
        %v399 = vld [vmem:[%s294 + $0x228] sm:$0xff]
        %v400 = vld [vmem:[%s294 + $0x230] sm:$0xff]
        %v401 = vld [vmem:[%s294 + $0x238] sm:$0xff]
        %v402 = vld [vmem:[%s294 + $0x240] sm:$0xff]
        %v403 = vld [vmem:[%s294 + $0x248] sm:$0xff]
        %v404 = vld [vmem:[%s294 + $0x250] sm:$0xff]
        %v405 = vld [vmem:[%s294 + $0x258] sm:$0xff]
        %v406 = vld [vmem:[%s294 + $0x260] sm:$0xff]
        %v407 = vld [vmem:[%s294 + $0x268] sm:$0xff]
        %v408 = vld [vmem:[%s294 + $0x270] sm:$0xff]
        %v409 = vld [vmem:[%s294 + $0x278] sm:$0xff]
        %v410 = vld [vmem:[%s294 + $0x280] sm:$0xff]
        %v411 = vld [vmem:[%s294 + $0x288] sm:$0xff]
        %v412 = vld [vmem:[%s294 + $0x290] sm:$0xff]
        %v413 = vld [vmem:[%s294 + $0x298] sm:$0xff]
        %v414 = vld [vmem:[%s294 + $0x2a0] sm:$0xff]
        %v415 = vld [vmem:[%s294 + $0x2a8] sm:$0xff]
        %v416 = vld [vmem:[%s294 + $0x2b0] sm:$0xff]
        %v417 = vld [vmem:[%s294 + $0x2b8] sm:$0xff]
        %v418 = vld [vmem:[%s294 + $0x2c0] sm:$0xff]
        %v419 = vld [vmem:[%s294 + $0x2c8] sm:$0xff]
        %v420 = vld [vmem:[%s294 + $0x2d0] sm:$0xff]
        %v421 = vld [vmem:[%s294 + $0x2d8] sm:$0xff]
        %v422 = vld [vmem:[%s294 + $0x2e0] sm:$0xff]
        %v423 = vld [vmem:[%s294 + $0x2e8] sm:$0xff]
        %v424 = vld [vmem:[%s294 + $0x2f0] sm:$0xff]
        %v425 = vld [vmem:[%s294 + $0x2f8] sm:$0xff]
        %v426 = vld [vmem:[%s294 + $0x300] sm:$0xff]
        %v427 = vld [vmem:[%s294 + $0x308] sm:$0xff]
        %v428 = vld [vmem:[%s294 + $0x310] sm:$0xff]
        %v429 = vld [vmem:[%s294 + $0x318] sm:$0xff]
        %v430 = vld [vmem:[%s294 + $0x320] sm:$0xff]
        %v431 = vld [vmem:[%s294 + $0x328] sm:$0xff]
        %v432 = vld [vmem:[%s294 + $0x330] sm:$0xff]
        %v433 = vld [vmem:[%s294 + $0x338] sm:$0xff]
        %v434 = vld [vmem:[%s294 + $0x340] sm:$0xff]
        %v435 = vld [vmem:[%s294 + $0x348] sm:$0xff]
        %v436 = vld [vmem:[%s294 + $0x350] sm:$0xff]
        %v437 = vld [vmem:[%s294 + $0x358] sm:$0xff]
        %v438 = vld [vmem:[%s294 + $0x360] sm:$0xff]
        %v439 = vld [vmem:[%s294 + $0x368] sm:$0xff]
        %v440 = vld [vmem:[%s294 + $0x370] sm:$0xff]
        %v441 = vld [vmem:[%s294 + $0x378] sm:$0xff]
        %v442 = vld [vmem:[%s294 + $0x380] sm:$0xff]
        %v443 = vld [vmem:[%s294 + $0x388] sm:$0xff]
        %v444 = vld [vmem:[%s294 + $0x390] sm:$0xff]
        %v445 = vld [vmem:[%s294 + $0x398] sm:$0xff]
        %v446 = vld [vmem:[%s294 + $0x3a0] sm:$0xff]
        %v447 = vld [vmem:[%s294 + $0x3a8] sm:$0xff]
        %v448 = vld [vmem:[%s294 + $0x3b0] sm:$0xff]
        %v449 = vld [vmem:[%s294 + $0x3b8] sm:$0xff]
        %v450 = vld [vmem:[%s294 + $0x3c0] sm:$0xff]
        %v451 = vld [vmem:[%s294 + $0x3c8] sm:$0xff]
        %v452 = vld [vmem:[%s294 + $0x3d0] sm:$0xff]
        %v453 = vld [vmem:[%s294 + $0x3d8] sm:$0xff]
        %v454 = vld [vmem:[%s294 + $0x3e0] sm:$0xff]
        %v455 = vld [vmem:[%s294 + $0x3e8] sm:$0xff]
        %v456 = vld [vmem:[%s294 + $0x3f0] sm:$0xff]
        %v457 = vld [vmem:[%s294 + $0x3f8] sm:$0xff]
        %v458 = vadd.f32 %v330, %v331
        %v459 = vadd.f32 %v458, %v332
        %v460 = vadd.f32 %v459, %v333
        %v461 = vadd.f32 %v460, %v334
        %v462 = vadd.f32 %v461, %v335
        %v463 = vadd.f32 %v462, %v336
        %v464 = vadd.f32 %v463, %v337
        %v465 = vadd.f32 %v464, %v338
        %v466 = vadd.f32 %v465, %v339
        %v467 = vadd.f32 %v466, %v340
        %v468 = vadd.f32 %v467, %v341
        %v469 = vadd.f32 %v468, %v342
        %v470 = vadd.f32 %v469, %v343
        %v471 = vadd.f32 %v470, %v344
        %v472 = vadd.f32 %v471, %v345
        %v473 = vadd.f32 %v472, %v346
        %v474 = vadd.f32 %v473, %v347
        %v475 = vadd.f32 %v474, %v348
        %v476 = vadd.f32 %v475, %v349
        %v477 = vadd.f32 %v476, %v350
        %v478 = vadd.f32 %v477, %v351
        %v479 = vadd.f32 %v478, %v352
        %v480 = vadd.f32 %v479, %v353
        %v481 = vadd.f32 %v480, %v354
        %v482 = vadd.f32 %v481, %v355
        %v483 = vadd.f32 %v482, %v356
        %v484 = vadd.f32 %v483, %v357
        %v485 = vadd.f32 %v484, %v358
        %v486 = vadd.f32 %v485, %v359
        %v487 = vadd.f32 %v486, %v360
        %v488 = vadd.f32 %v487, %v361
        %v489 = vrot.slane %v488, 4
        %v490 = vadd.f32 %v488, %v489
        %v491 = vrot.slane %v490, 2
        %v492 = vadd.f32 %v490, %v491
        %v493 = vrot.slane %v492, 1
        %v494 = vadd.f32 %v492, %v493
        %v495 = vadd.f32 %v362, %v363
        %v496 = vadd.f32 %v495, %v364
        %v497 = vadd.f32 %v496, %v365
        %v498 = vadd.f32 %v497, %v366
        %v499 = vadd.f32 %v498, %v367
        %v500 = vadd.f32 %v499, %v368
        %v501 = vadd.f32 %v500, %v369
        %v502 = vadd.f32 %v501, %v370
        %v503 = vadd.f32 %v502, %v371
        %v504 = vadd.f32 %v503, %v372
        %v505 = vadd.f32 %v504, %v373
        %v506 = vadd.f32 %v505, %v374
        %v507 = vadd.f32 %v506, %v375
        %v508 = vadd.f32 %v507, %v376
        %v509 = vadd.f32 %v508, %v377
        %v510 = vadd.f32 %v509, %v378
        %v511 = vadd.f32 %v510, %v379
        %v512 = vadd.f32 %v511, %v380
        %v513 = vadd.f32 %v512, %v381
        %v514 = vadd.f32 %v513, %v382
        %v515 = vadd.f32 %v514, %v383
        %v516 = vadd.f32 %v515, %v384
        %v517 = vadd.f32 %v516, %v385
        %v518 = vadd.f32 %v517, %v386
        %v519 = vadd.f32 %v518, %v387
        %v520 = vadd.f32 %v519, %v388
        %v521 = vadd.f32 %v520, %v389
        %v522 = vadd.f32 %v521, %v390
        %v523 = vadd.f32 %v522, %v391
        %v524 = vadd.f32 %v523, %v392
        %v525 = vadd.f32 %v524, %v393
        %v526 = vrot.slane %v525, 4
        %v527 = vadd.f32 %v525, %v526
        %v528 = vrot.slane %v527, 2
        %v529 = vadd.f32 %v527, %v528
        %v530 = vrot.slane %v529, 1
        %v531 = vadd.f32 %v529, %v530
        %v532 = vadd.f32 %v394, %v395
        %v533 = vadd.f32 %v532, %v396
        %v534 = vadd.f32 %v533, %v397
        %v535 = vadd.f32 %v534, %v398
        %v536 = vadd.f32 %v535, %v399
        %v537 = vadd.f32 %v536, %v400
        %v538 = vadd.f32 %v537, %v401
        %v539 = vadd.f32 %v538, %v402
        %v540 = vadd.f32 %v539, %v403
        %v541 = vadd.f32 %v540, %v404
        %v542 = vadd.f32 %v541, %v405
        %v543 = vadd.f32 %v542, %v406
        %v544 = vadd.f32 %v543, %v407
        %v545 = vadd.f32 %v544, %v408
        %v546 = vadd.f32 %v545, %v409
        %v547 = vadd.f32 %v546, %v410
        %v548 = vadd.f32 %v547, %v411
        %v549 = vadd.f32 %v548, %v412
        %v550 = vadd.f32 %v549, %v413
        %v551 = vadd.f32 %v550, %v414
        %v552 = vadd.f32 %v551, %v415
        %v553 = vadd.f32 %v552, %v416
        %v554 = vadd.f32 %v553, %v417
        %v555 = vadd.f32 %v554, %v418
        %v556 = vadd.f32 %v555, %v419
        %v557 = vadd.f32 %v556, %v420
        %v558 = vadd.f32 %v557, %v421
        %v559 = vadd.f32 %v558, %v422
        %v560 = vadd.f32 %v559, %v423
        %v561 = vadd.f32 %v560, %v424
        %v562 = vadd.f32 %v561, %v425
        %v563 = vrot.slane %v562, 4
        %v564 = vadd.f32 %v562, %v563
        %v565 = vrot.slane %v564, 2
        %v566 = vadd.f32 %v564, %v565
        %v567 = vrot.slane %v566, 1
        %v568 = vadd.f32 %v566, %v567
        %v569 = vadd.f32 %v426, %v427
        %v570 = vadd.f32 %v569, %v428
        %v571 = vadd.f32 %v570, %v429
        %v572 = vadd.f32 %v571, %v430
        %v573 = vadd.f32 %v572, %v431
        %v574 = vadd.f32 %v573, %v432
        %v575 = vadd.f32 %v574, %v433
        %v576 = vadd.f32 %v575, %v434
        %v577 = vadd.f32 %v576, %v435
        %v578 = vadd.f32 %v577, %v436
        %v579 = vadd.f32 %v578, %v437
        %v580 = vadd.f32 %v579, %v438
        %v581 = vadd.f32 %v580, %v439
        %v582 = vadd.f32 %v581, %v440
        %v583 = vadd.f32 %v582, %v441
        %v584 = vadd.f32 %v583, %v442
        %v585 = vadd.f32 %v584, %v443
        %v586 = vadd.f32 %v585, %v444
        %v587 = vadd.f32 %v586, %v445
        %v588 = vadd.f32 %v587, %v446
        %v589 = vadd.f32 %v588, %v447
        %v590 = vadd.f32 %v589, %v448
        %v591 = vadd.f32 %v590, %v449
        %v592 = vadd.f32 %v591, %v450
        %v593 = vadd.f32 %v592, %v451
        %v594 = vadd.f32 %v593, %v452
        %v595 = vadd.f32 %v594, %v453
        %v596 = vadd.f32 %v595, %v454
        %v597 = vadd.f32 %v596, %v455
        %v598 = vadd.f32 %v597, %v456
        %v599 = vadd.f32 %v598, %v457
        %v600 = vrot.slane %v599, 4
        %v601 = vadd.f32 %v599, %v600
        %v602 = vrot.slane %v601, 2
        %v603 = vadd.f32 %v601, %v602
        %v604 = vrot.slane %v603, 1
        %v605 = vadd.f32 %v603, %v604
        %v606 = vmul.f32 %v494, 0.00390625
        %v607 = vmul.f32 %v531, 0.00390625
        %v608 = vmul.f32 %v568, 0.00390625
        %v609 = vmul.f32 %v605, 0.00390625
        %v610 = vmax.f32 %v330, %v331
        %v611 = vmax.f32 %v610, %v332
        %v612 = vmax.f32 %v611, %v333
        %v613 = vmax.f32 %v612, %v334
        %v614 = vmax.f32 %v613, %v335
        %v615 = vmax.f32 %v614, %v336
        %v616 = vmax.f32 %v615, %v337
        %v617 = vmax.f32 %v616, %v338
        %v618 = vmax.f32 %v617, %v339
        %v619 = vmax.f32 %v618, %v340
        %v620 = vmax.f32 %v619, %v341
        %v621 = vmax.f32 %v620, %v342
        %v622 = vmax.f32 %v621, %v343
        %v623 = vmax.f32 %v622, %v344
        %v624 = vmax.f32 %v623, %v345
        %v625 = vmax.f32 %v624, %v346
        %v626 = vmax.f32 %v625, %v347
        %v627 = vmax.f32 %v626, %v348
        %v628 = vmax.f32 %v627, %v349
        %v629 = vmax.f32 %v628, %v350
        %v630 = vmax.f32 %v629, %v351
        %v631 = vmax.f32 %v630, %v352
        %v632 = vmax.f32 %v631, %v353
        %v633 = vmax.f32 %v632, %v354
        %v634 = vmax.f32 %v633, %v355
        %v635 = vmax.f32 %v634, %v356
        %v636 = vmax.f32 %v635, %v357
        %v637 = vmax.f32 %v636, %v358
        %v638 = vmax.f32 %v637, %v359
        %v639 = vmax.f32 %v638, %v360
        %v640 = vmax.f32 %v639, %v361
        %v641 = vrot.slane %v640, 4
        %v642 = vmax.f32 %v640, %v641
        %v643 = vrot.slane %v642, 2
        %v644 = vmax.f32 %v642, %v643
        %v645 = vrot.slane %v644, 1
        %v646 = vmax.f32 %v644, %v645
        %v647 = vmax.f32 %v362, %v363
        %v648 = vmax.f32 %v647, %v364
        %v649 = vmax.f32 %v648, %v365
        %v650 = vmax.f32 %v649, %v366
        %v651 = vmax.f32 %v650, %v367
        %v652 = vmax.f32 %v651, %v368
        %v653 = vmax.f32 %v652, %v369
        %v654 = vmax.f32 %v653, %v370
        %v655 = vmax.f32 %v654, %v371
        %v656 = vmax.f32 %v655, %v372
        %v657 = vmax.f32 %v656, %v373
        %v658 = vmax.f32 %v657, %v374
        %v659 = vmax.f32 %v658, %v375
        %v660 = vmax.f32 %v659, %v376
        %v661 = vmax.f32 %v660, %v377
        %v662 = vmax.f32 %v661, %v378
        %v663 = vmax.f32 %v662, %v379
        %v664 = vmax.f32 %v663, %v380
        %v665 = vmax.f32 %v664, %v381
        %v666 = vmax.f32 %v665, %v382
        %v667 = vmax.f32 %v666, %v383
        %v668 = vmax.f32 %v667, %v384
        %v669 = vmax.f32 %v668, %v385
        %v670 = vmax.f32 %v669, %v386
        %v671 = vmax.f32 %v670, %v387
        %v672 = vmax.f32 %v671, %v388
        %v673 = vmax.f32 %v672, %v389
        %v674 = vmax.f32 %v673, %v390
        %v675 = vmax.f32 %v674, %v391
        %v676 = vmax.f32 %v675, %v392
        %v677 = vmax.f32 %v676, %v393
        %v678 = vrot.slane %v677, 4
        %v679 = vmax.f32 %v677, %v678
        %v680 = vrot.slane %v679, 2
        %v681 = vmax.f32 %v679, %v680
        %v682 = vrot.slane %v681, 1
        %v683 = vmax.f32 %v681, %v682
        %v684 = vmax.f32 %v394, %v395
        %v685 = vmax.f32 %v684, %v396
        %v686 = vmax.f32 %v685, %v397
        %v687 = vmax.f32 %v686, %v398
        %v688 = vmax.f32 %v687, %v399
        %v689 = vmax.f32 %v688, %v400
        %v690 = vmax.f32 %v689, %v401
        %v691 = vmax.f32 %v690, %v402
        %v692 = vmax.f32 %v691, %v403
        %v693 = vmax.f32 %v692, %v404
        %v694 = vmax.f32 %v693, %v405
        %v695 = vmax.f32 %v694, %v406
        %v696 = vmax.f32 %v695, %v407
        %v697 = vmax.f32 %v696, %v408
        %v698 = vmax.f32 %v697, %v409
        %v699 = vmax.f32 %v698, %v410
        %v700 = vmax.f32 %v699, %v411
        %v701 = vmax.f32 %v700, %v412
        %v702 = vmax.f32 %v701, %v413
        %v703 = vmax.f32 %v702, %v414
        %v704 = vmax.f32 %v703, %v415
        %v705 = vmax.f32 %v704, %v416
        %v706 = vmax.f32 %v705, %v417
        %v707 = vmax.f32 %v706, %v418
        %v708 = vmax.f32 %v707, %v419
        %v709 = vmax.f32 %v708, %v420
        %v710 = vmax.f32 %v709, %v421
        %v711 = vmax.f32 %v710, %v422
        %v712 = vmax.f32 %v711, %v423
        %v713 = vmax.f32 %v712, %v424
        %v714 = vmax.f32 %v713, %v425
        %v715 = vrot.slane %v714, 4
        %v716 = vmax.f32 %v714, %v715
        %v717 = vrot.slane %v716, 2
        %v718 = vmax.f32 %v716, %v717
        %v719 = vrot.slane %v718, 1
        %v720 = vmax.f32 %v718, %v719
        %v721 = vmax.f32 %v426, %v427
        %v722 = vmax.f32 %v721, %v428
        %v723 = vmax.f32 %v722, %v429
        %v724 = vmax.f32 %v723, %v430
        %v725 = vmax.f32 %v724, %v431
        %v726 = vmax.f32 %v725, %v432
        %v727 = vmax.f32 %v726, %v433
        %v728 = vmax.f32 %v727, %v434
        %v729 = vmax.f32 %v728, %v435
        %v730 = vmax.f32 %v729, %v436
        %v731 = vmax.f32 %v730, %v437
        %v732 = vmax.f32 %v731, %v438
        %v733 = vmax.f32 %v732, %v439
        %v734 = vmax.f32 %v733, %v440
        %v735 = vmax.f32 %v734, %v441
        %v736 = vmax.f32 %v735, %v442
        %v737 = vmax.f32 %v736, %v443
        %v738 = vmax.f32 %v737, %v444
        %v739 = vmax.f32 %v738, %v445
        %v740 = vmax.f32 %v739, %v446
        %v741 = vmax.f32 %v740, %v447
        %v742 = vmax.f32 %v741, %v448
        %v743 = vmax.f32 %v742, %v449
        %v744 = vmax.f32 %v743, %v450
        %v745 = vmax.f32 %v744, %v451
        %v746 = vmax.f32 %v745, %v452
        %v747 = vmax.f32 %v746, %v453
        %v748 = vmax.f32 %v747, %v454
        %v749 = vmax.f32 %v748, %v455
        %v750 = vmax.f32 %v749, %v456
        %v751 = vmax.f32 %v750, %v457
        %v752 = vrot.slane %v751, 4
        %v753 = vmax.f32 %v751, %v752
        %v754 = vrot.slane %v753, 2
        %v755 = vmax.f32 %v753, %v754
        %v756 = vrot.slane %v755, 1
        %v757 = vmax.f32 %v755, %v756
        %vm762 = vcmask 1041409
        %v763 = vsel %vm762, %v607, %v606
        %vm764 = vcmask 1042434
        %v765 = vsel %vm764, %v608, %v763
        %vm766 = vcmask 1043459
        %v767 = vsel %vm766, %v609, %v765
        %vm773 = vcmask 1045509
        %v774 = vsel %vm773, %v683, %v646
        %vm775 = vcmask 1046534
        %v776 = vsel %vm775, %v720, %v774
        %vm777 = vcmask 1047559
        %v778 = vsel %vm777, %v757, %v776
        %vm780 = vcmask 1043456
        %v781 = vsel %vm780, %v767, %v778
        %v782 = vld [vmem:[%s1] sm:$0xff]
        %v783 = vld [vmem:[%s1 + $0x8] sm:$0xff]
        %v784 = vld [vmem:[%s1 + $0x10] sm:$0xff]
        %v785 = vld [vmem:[%s1 + $0x18] sm:$0xff]
        %v786 = vld [vmem:[%s1 + $0x20] sm:$0xff]
        %v787 = vld [vmem:[%s1 + $0x28] sm:$0xff]
        %v788 = vld [vmem:[%s1 + $0x30] sm:$0xff]
        %v789 = vld [vmem:[%s1 + $0x38] sm:$0xff]
        %v790 = vld [vmem:[%s1 + $0x40] sm:$0xff]
        %v791 = vld [vmem:[%s1 + $0x48] sm:$0xff]
        %v792 = vld [vmem:[%s1 + $0x50] sm:$0xff]
        %v793 = vld [vmem:[%s1 + $0x58] sm:$0xff]
        %v794 = vld [vmem:[%s1 + $0x60] sm:$0xff]
        %v795 = vld [vmem:[%s1 + $0x68] sm:$0xff]
        %v796 = vld [vmem:[%s1 + $0x70] sm:$0xff]
        %v797 = vld [vmem:[%s1 + $0x78] sm:$0xff]
        %v798 = vld [vmem:[%s2] sm:$0x1]
        %v800 = vperm.slane %v798, 0
        %802 = vmatpush.msra.mxu0 %v797
        %803 = vmatpush.msra.mxu0 %v796
        %804 = vmatpush.msra.mxu0 %v795
        %805 = vmatpush.msra.mxu0 %v794
        %806 = vmatpush.msra.mxu0 %v793
        %807 = vmatpush.msra.mxu0 %v792
        %808 = vmatpush.msra.mxu0 %v791
        %809 = vmatpush.msra.mxu0 %v790
        %810 = vmatpush.msra.mxu0 %v789
        %811 = vmatpush.msra.mxu0 %v788
        %812 = vmatpush.msra.mxu0 %v787
        %813 = vmatpush.msra.mxu0 %v786
        %814 = vmatpush.msra.mxu0 %v785
        %815 = vmatpush.msra.mxu0 %v784
        %816 = vmatpush.msra.mxu0 %v783
        %817 = vmatpush.msra.mxu0 %v782
        %818 = vmatmul.f32.gmra.mxu0 %v781
        %v819 = vpop.f32.mrf.mxu0
        %v820 = vadd.f32 %v800, %v819
        %821 = vdwg.mxu0
        %v822 = vmax.f32 %v820, 0.0
        %v823 = vld [vmem:[%s3] sm:$0xff]
        %v824 = vld [vmem:[%s4] sm:$0x1]
        %v826 = vperm.slane %v824, 0
        %vm828 = vcmask 64512
        %v830 = vsel %vm828, %v822, 0
        %832 = vmatpush.msra.mxu0 0.0
        %833 = vmatpush.msra.mxu0 0.0
        %834 = vmatpush.msra.mxu0 0.0
        %835 = vmatpush.msra.mxu0 0.0
        %836 = vmatpush.msra.mxu0 0.0
        %837 = vmatpush.msra.mxu0 0.0
        %838 = vmatpush.msra.mxu0 0.0
        %839 = vmatpush.msra.mxu0 0.0
        %840 = vmatpush.msra.mxu0 0.0
        %841 = vmatpush.msra.mxu0 0.0
        %842 = vmatpush.msra.mxu0 0.0
        %843 = vmatpush.msra.mxu0 0.0
        %844 = vmatpush.msra.mxu0 0.0
        %845 = vmatpush.msra.mxu0 0.0
        %846 = vmatpush.msra.mxu0 0.0
        %847 = vmatpush.msra.mxu0 %v823
        %848 = vmatmul.f32.gmra.mxu0 %v830
        %v849 = vpop.f32.mrf.mxu0
        %v850 = vadd.f32 %v826, %v849
        %851 = vdwg.mxu0
        %v853 = vrot.slane %v850, 4
        %v855 = vadd.f32 %v850, %v853
        %v856 = vsub.f32 0.0, %v855
        %v857 = vmul.f32 %v856, 1.442695
        %v858 = vpow.pop %v857
        %v859 = vadd.f32 %v858, 1.0
        %v860 = vrcp.pop %v859
        %v861 = vmul.f32 %v859, %v860
        %v862 = vsub.f32 1.0, %v861
        %v863 = vmul.f32 %v860, %v862
        %v864 = vadd.f32 %v860, %v863
        %vm865 = vweird.f32 %v859
        %vm866 = vweird.f32 %v860
        %vm867 = vmor %vm865, %vm866
        %v868 = vsel %vm867, %v860, %v864
        %v869 = vand.u32 2147483647, %v859
        %vm870 = vcmp.eq.f32.partialorder %v869, 8.507059e+37
        %v871 = vand.u32 %v859, 2147483648
        %v872 = vor.u32 1.1754944e-38, %v871
        %v873 = vsel %vm870, %v872, %v868
        %v875 = vrot.slane %v873, 1
        %v876 = vrot.slane %v873, 2
        %v877 = vrot.slane %v873, 3
        %v878 = vperm.slane %v873, 0
        %v879 = vperm.slane %v875, 0
        %v880 = vperm.slane %v876, 0
        %v881 = vperm.slane %v877, 0
        %v886 = vmul.f32 %v330, %v878
        %v887 = vmul.f32 %v331, %v878
        %v888 = vmul.f32 %v332, %v878
        %v889 = vmul.f32 %v333, %v878
        %v890 = vmul.f32 %v334, %v878
        %v891 = vmul.f32 %v335, %v878
        %v892 = vmul.f32 %v336, %v878
        %v893 = vmul.f32 %v337, %v878
        %v894 = vmul.f32 %v338, %v878
        %v895 = vmul.f32 %v339, %v878
        %v896 = vmul.f32 %v340, %v878
        %v897 = vmul.f32 %v341, %v878
        %v898 = vmul.f32 %v342, %v878
        %v899 = vmul.f32 %v343, %v878
        %v900 = vmul.f32 %v344, %v878
        %v901 = vmul.f32 %v345, %v878
        %v902 = vmul.f32 %v346, %v878
        %v903 = vmul.f32 %v347, %v878
        %v904 = vmul.f32 %v348, %v878
        %v905 = vmul.f32 %v349, %v878
        %v906 = vmul.f32 %v350, %v878
        %v907 = vmul.f32 %v351, %v878
        %v908 = vmul.f32 %v352, %v878
        %v909 = vmul.f32 %v353, %v878
        %v910 = vmul.f32 %v354, %v878
        %v911 = vmul.f32 %v355, %v878
        %v912 = vmul.f32 %v356, %v878
        %v913 = vmul.f32 %v357, %v878
        %v914 = vmul.f32 %v358, %v878
        %v915 = vmul.f32 %v359, %v878
        %v916 = vmul.f32 %v360, %v878
        %v917 = vmul.f32 %v361, %v878
        %v918 = vmul.f32 %v362, %v879
        %v919 = vmul.f32 %v363, %v879
        %v920 = vmul.f32 %v364, %v879
        %v921 = vmul.f32 %v365, %v879
        %v922 = vmul.f32 %v366, %v879
        %v923 = vmul.f32 %v367, %v879
        %v924 = vmul.f32 %v368, %v879
        %v925 = vmul.f32 %v369, %v879
        %v926 = vmul.f32 %v370, %v879
        %v927 = vmul.f32 %v371, %v879
        %v928 = vmul.f32 %v372, %v879
        %v929 = vmul.f32 %v373, %v879
        %v930 = vmul.f32 %v374, %v879
        %v931 = vmul.f32 %v375, %v879
        %v932 = vmul.f32 %v376, %v879
        %v933 = vmul.f32 %v377, %v879
        %v934 = vmul.f32 %v378, %v879
        %v935 = vmul.f32 %v379, %v879
        %v936 = vmul.f32 %v380, %v879
        %v937 = vmul.f32 %v381, %v879
        %v938 = vmul.f32 %v382, %v879
        %v939 = vmul.f32 %v383, %v879
        %v940 = vmul.f32 %v384, %v879
        %v941 = vmul.f32 %v385, %v879
        %v942 = vmul.f32 %v386, %v879
        %v943 = vmul.f32 %v387, %v879
        %v944 = vmul.f32 %v388, %v879
        %v945 = vmul.f32 %v389, %v879
        %v946 = vmul.f32 %v390, %v879
        %v947 = vmul.f32 %v391, %v879
        %v948 = vmul.f32 %v392, %v879
        %v949 = vmul.f32 %v393, %v879
        %v950 = vmul.f32 %v394, %v880
        %v951 = vmul.f32 %v395, %v880
        %v952 = vmul.f32 %v396, %v880
        %v953 = vmul.f32 %v397, %v880
        %v954 = vmul.f32 %v398, %v880
        %v955 = vmul.f32 %v399, %v880
        %v956 = vmul.f32 %v400, %v880
        %v957 = vmul.f32 %v401, %v880
        %v958 = vmul.f32 %v402, %v880
        %v959 = vmul.f32 %v403, %v880
        %v960 = vmul.f32 %v404, %v880
        %v961 = vmul.f32 %v405, %v880
        %v962 = vmul.f32 %v406, %v880
        %v963 = vmul.f32 %v407, %v880
        %v964 = vmul.f32 %v408, %v880
        %v965 = vmul.f32 %v409, %v880
        %v966 = vmul.f32 %v410, %v880
        %v967 = vmul.f32 %v411, %v880
        %v968 = vmul.f32 %v412, %v880
        %v969 = vmul.f32 %v413, %v880
        %v970 = vmul.f32 %v414, %v880
        %v971 = vmul.f32 %v415, %v880
        %v972 = vmul.f32 %v416, %v880
        %v973 = vmul.f32 %v417, %v880
        %v974 = vmul.f32 %v418, %v880
        %v975 = vmul.f32 %v419, %v880
        %v976 = vmul.f32 %v420, %v880
        %v977 = vmul.f32 %v421, %v880
        %v978 = vmul.f32 %v422, %v880
        %v979 = vmul.f32 %v423, %v880
        %v980 = vmul.f32 %v424, %v880
        %v981 = vmul.f32 %v425, %v880
        %v982 = vmul.f32 %v426, %v881
        %v983 = vmul.f32 %v427, %v881
        %v984 = vmul.f32 %v428, %v881
        %v985 = vmul.f32 %v429, %v881
        %v986 = vmul.f32 %v430, %v881
        %v987 = vmul.f32 %v431, %v881
        %v988 = vmul.f32 %v432, %v881
        %v989 = vmul.f32 %v433, %v881
        %v990 = vmul.f32 %v434, %v881
        %v991 = vmul.f32 %v435, %v881
        %v992 = vmul.f32 %v436, %v881
        %v993 = vmul.f32 %v437, %v881
        %v994 = vmul.f32 %v438, %v881
        %v995 = vmul.f32 %v439, %v881
        %v996 = vmul.f32 %v440, %v881
        %v997 = vmul.f32 %v441, %v881
        %v998 = vmul.f32 %v442, %v881
        %v999 = vmul.f32 %v443, %v881
        %v1000 = vmul.f32 %v444, %v881
        %v1001 = vmul.f32 %v445, %v881
        %v1002 = vmul.f32 %v446, %v881
        %v1003 = vmul.f32 %v447, %v881
        %v1004 = vmul.f32 %v448, %v881
        %v1005 = vmul.f32 %v449, %v881
        %v1006 = vmul.f32 %v450, %v881
        %v1007 = vmul.f32 %v451, %v881
        %v1008 = vmul.f32 %v452, %v881
        %v1009 = vmul.f32 %v453, %v881
        %v1010 = vmul.f32 %v454, %v881
        %v1011 = vmul.f32 %v455, %v881
        %v1012 = vmul.f32 %v456, %v881
        %v1013 = vmul.f32 %v457, %v881
        %1014 = vmax.xlane.f32.xlu0 %v886
        %v1015 = vpop.xlane.xlu0 %1014
        %1016 = vmax.xlane.f32.xlu0 %v887
        %v1017 = vpop.xlane.xlu0 %1016
        %1018 = vmax.xlane.f32.xlu0 %v888
        %v1019 = vpop.xlane.xlu0 %1018
        %1020 = vmax.xlane.f32.xlu0 %v889
        %v1021 = vpop.xlane.xlu0 %1020
        %1022 = vmax.xlane.f32.xlu0 %v890
        %v1023 = vpop.xlane.xlu0 %1022
        %1024 = vmax.xlane.f32.xlu0 %v891
        %v1025 = vpop.xlane.xlu0 %1024
        %1026 = vmax.xlane.f32.xlu0 %v892
        %v1027 = vpop.xlane.xlu0 %1026
        %1028 = vmax.xlane.f32.xlu0 %v893
        %v1029 = vpop.xlane.xlu0 %1028
        %1030 = vmax.xlane.f32.xlu0 %v894
        %v1031 = vpop.xlane.xlu0 %1030
        %1032 = vmax.xlane.f32.xlu0 %v895
        %v1033 = vpop.xlane.xlu0 %1032
        %1034 = vmax.xlane.f32.xlu0 %v896
        %v1035 = vpop.xlane.xlu0 %1034
        %1036 = vmax.xlane.f32.xlu0 %v897
        %v1037 = vpop.xlane.xlu0 %1036
        %1038 = vmax.xlane.f32.xlu0 %v898
        %v1039 = vpop.xlane.xlu0 %1038
        %1040 = vmax.xlane.f32.xlu0 %v899
        %v1041 = vpop.xlane.xlu0 %1040
        %1042 = vmax.xlane.f32.xlu0 %v900
        %v1043 = vpop.xlane.xlu0 %1042
        %1044 = vmax.xlane.f32.xlu0 %v901
        %v1045 = vpop.xlane.xlu0 %1044
        %1046 = vmax.xlane.f32.xlu0 %v902
        %v1047 = vpop.xlane.xlu0 %1046
        %1048 = vmax.xlane.f32.xlu0 %v903
        %v1049 = vpop.xlane.xlu0 %1048
        %1050 = vmax.xlane.f32.xlu0 %v904
        %v1051 = vpop.xlane.xlu0 %1050
        %1052 = vmax.xlane.f32.xlu0 %v905
        %v1053 = vpop.xlane.xlu0 %1052
        %1054 = vmax.xlane.f32.xlu0 %v906
        %v1055 = vpop.xlane.xlu0 %1054
        %1056 = vmax.xlane.f32.xlu0 %v907
        %v1057 = vpop.xlane.xlu0 %1056
        %1058 = vmax.xlane.f32.xlu0 %v908
        %v1059 = vpop.xlane.xlu0 %1058
        %1060 = vmax.xlane.f32.xlu0 %v909
        %v1061 = vpop.xlane.xlu0 %1060
        %1062 = vmax.xlane.f32.xlu0 %v910
        %v1063 = vpop.xlane.xlu0 %1062
        %1064 = vmax.xlane.f32.xlu0 %v911
        %v1065 = vpop.xlane.xlu0 %1064
        %1066 = vmax.xlane.f32.xlu0 %v912
        %v1067 = vpop.xlane.xlu0 %1066
        %1068 = vmax.xlane.f32.xlu0 %v913
        %v1069 = vpop.xlane.xlu0 %1068
        %1070 = vmax.xlane.f32.xlu0 %v914
        %v1071 = vpop.xlane.xlu0 %1070
        %1072 = vmax.xlane.f32.xlu0 %v915
        %v1073 = vpop.xlane.xlu0 %1072
        %1074 = vmax.xlane.f32.xlu0 %v916
        %v1075 = vpop.xlane.xlu0 %1074
        %1076 = vmax.xlane.f32.xlu0 %v917
        %v1077 = vpop.xlane.xlu0 %1076
        %1078 = vmax.xlane.f32.xlu0 %v918
        %v1079 = vpop.xlane.xlu0 %1078
        %1080 = vmax.xlane.f32.xlu0 %v919
        %v1081 = vpop.xlane.xlu0 %1080
        %1082 = vmax.xlane.f32.xlu0 %v920
        %v1083 = vpop.xlane.xlu0 %1082
        %1084 = vmax.xlane.f32.xlu0 %v921
        %v1085 = vpop.xlane.xlu0 %1084
        %1086 = vmax.xlane.f32.xlu0 %v922
        %v1087 = vpop.xlane.xlu0 %1086
        %1088 = vmax.xlane.f32.xlu0 %v923
        %v1089 = vpop.xlane.xlu0 %1088
        %1090 = vmax.xlane.f32.xlu0 %v924
        %v1091 = vpop.xlane.xlu0 %1090
        %1092 = vmax.xlane.f32.xlu0 %v925
        %v1093 = vpop.xlane.xlu0 %1092
        %1094 = vmax.xlane.f32.xlu0 %v926
        %v1095 = vpop.xlane.xlu0 %1094
        %1096 = vmax.xlane.f32.xlu0 %v927
        %v1097 = vpop.xlane.xlu0 %1096
        %1098 = vmax.xlane.f32.xlu0 %v928
        %v1099 = vpop.xlane.xlu0 %1098
        %1100 = vmax.xlane.f32.xlu0 %v929
        %v1101 = vpop.xlane.xlu0 %1100
        %1102 = vmax.xlane.f32.xlu0 %v930
        %v1103 = vpop.xlane.xlu0 %1102
        %1104 = vmax.xlane.f32.xlu0 %v931
        %v1105 = vpop.xlane.xlu0 %1104
        %1106 = vmax.xlane.f32.xlu0 %v932
        %v1107 = vpop.xlane.xlu0 %1106
        %1108 = vmax.xlane.f32.xlu0 %v933
        %v1109 = vpop.xlane.xlu0 %1108
        %1110 = vmax.xlane.f32.xlu0 %v934
        %v1111 = vpop.xlane.xlu0 %1110
        %1112 = vmax.xlane.f32.xlu0 %v935
        %v1113 = vpop.xlane.xlu0 %1112
        %1114 = vmax.xlane.f32.xlu0 %v936
        %v1115 = vpop.xlane.xlu0 %1114
        %1116 = vmax.xlane.f32.xlu0 %v937
        %v1117 = vpop.xlane.xlu0 %1116
        %1118 = vmax.xlane.f32.xlu0 %v938
        %v1119 = vpop.xlane.xlu0 %1118
        %1120 = vmax.xlane.f32.xlu0 %v939
        %v1121 = vpop.xlane.xlu0 %1120
        %1122 = vmax.xlane.f32.xlu0 %v940
        %v1123 = vpop.xlane.xlu0 %1122
        %1124 = vmax.xlane.f32.xlu0 %v941
        %v1125 = vpop.xlane.xlu0 %1124
        %1126 = vmax.xlane.f32.xlu0 %v942
        %v1127 = vpop.xlane.xlu0 %1126
        %1128 = vmax.xlane.f32.xlu0 %v943
        %v1129 = vpop.xlane.xlu0 %1128
        %1130 = vmax.xlane.f32.xlu0 %v944
        %v1131 = vpop.xlane.xlu0 %1130
        %1132 = vmax.xlane.f32.xlu0 %v945
        %v1133 = vpop.xlane.xlu0 %1132
        %1134 = vmax.xlane.f32.xlu0 %v946
        %v1135 = vpop.xlane.xlu0 %1134
        %1136 = vmax.xlane.f32.xlu0 %v947
        %v1137 = vpop.xlane.xlu0 %1136
        %1138 = vmax.xlane.f32.xlu0 %v948
        %v1139 = vpop.xlane.xlu0 %1138
        %1140 = vmax.xlane.f32.xlu0 %v949
        %v1141 = vpop.xlane.xlu0 %1140
        %1142 = vmax.xlane.f32.xlu0 %v950
        %v1143 = vpop.xlane.xlu0 %1142
        %1144 = vmax.xlane.f32.xlu0 %v951
        %v1145 = vpop.xlane.xlu0 %1144
        %1146 = vmax.xlane.f32.xlu0 %v952
        %v1147 = vpop.xlane.xlu0 %1146
        %1148 = vmax.xlane.f32.xlu0 %v953
        %v1149 = vpop.xlane.xlu0 %1148
        %1150 = vmax.xlane.f32.xlu0 %v954
        %v1151 = vpop.xlane.xlu0 %1150
        %1152 = vmax.xlane.f32.xlu0 %v955
        %v1153 = vpop.xlane.xlu0 %1152
        %1154 = vmax.xlane.f32.xlu0 %v956
        %v1155 = vpop.xlane.xlu0 %1154
        %1156 = vmax.xlane.f32.xlu0 %v957
        %v1157 = vpop.xlane.xlu0 %1156
        %1158 = vmax.xlane.f32.xlu0 %v958
        %v1159 = vpop.xlane.xlu0 %1158
        %1160 = vmax.xlane.f32.xlu0 %v959
        %v1161 = vpop.xlane.xlu0 %1160
        %1162 = vmax.xlane.f32.xlu0 %v960
        %v1163 = vpop.xlane.xlu0 %1162
        %1164 = vmax.xlane.f32.xlu0 %v961
        %v1165 = vpop.xlane.xlu0 %1164
        %1166 = vmax.xlane.f32.xlu0 %v962
        %v1167 = vpop.xlane.xlu0 %1166
        %1168 = vmax.xlane.f32.xlu0 %v963
        %v1169 = vpop.xlane.xlu0 %1168
        %1170 = vmax.xlane.f32.xlu0 %v964
        %v1171 = vpop.xlane.xlu0 %1170
        %1172 = vmax.xlane.f32.xlu0 %v965
        %v1173 = vpop.xlane.xlu0 %1172
        %1174 = vmax.xlane.f32.xlu0 %v966
        %v1175 = vpop.xlane.xlu0 %1174
        %1176 = vmax.xlane.f32.xlu0 %v967
        %v1177 = vpop.xlane.xlu0 %1176
        %1178 = vmax.xlane.f32.xlu0 %v968
        %v1179 = vpop.xlane.xlu0 %1178
        %1180 = vmax.xlane.f32.xlu0 %v969
        %v1181 = vpop.xlane.xlu0 %1180
        %1182 = vmax.xlane.f32.xlu0 %v970
        %v1183 = vpop.xlane.xlu0 %1182
        %1184 = vmax.xlane.f32.xlu0 %v971
        %v1185 = vpop.xlane.xlu0 %1184
        %1186 = vmax.xlane.f32.xlu0 %v972
        %v1187 = vpop.xlane.xlu0 %1186
        %1188 = vmax.xlane.f32.xlu0 %v973
        %v1189 = vpop.xlane.xlu0 %1188
        %1190 = vmax.xlane.f32.xlu0 %v974
        %v1191 = vpop.xlane.xlu0 %1190
        %1192 = vmax.xlane.f32.xlu0 %v975
        %v1193 = vpop.xlane.xlu0 %1192
        %1194 = vmax.xlane.f32.xlu0 %v976
        %v1195 = vpop.xlane.xlu0 %1194
        %1196 = vmax.xlane.f32.xlu0 %v977
        %v1197 = vpop.xlane.xlu0 %1196
        %1198 = vmax.xlane.f32.xlu0 %v978
        %v1199 = vpop.xlane.xlu0 %1198
        %1200 = vmax.xlane.f32.xlu0 %v979
        %v1201 = vpop.xlane.xlu0 %1200
        %1202 = vmax.xlane.f32.xlu0 %v980
        %v1203 = vpop.xlane.xlu0 %1202
        %1204 = vmax.xlane.f32.xlu0 %v981
        %v1205 = vpop.xlane.xlu0 %1204
        %1206 = vmax.xlane.f32.xlu0 %v982
        %v1207 = vpop.xlane.xlu0 %1206
        %1208 = vmax.xlane.f32.xlu0 %v983
        %v1209 = vpop.xlane.xlu0 %1208
        %1210 = vmax.xlane.f32.xlu0 %v984
        %v1211 = vpop.xlane.xlu0 %1210
        %1212 = vmax.xlane.f32.xlu0 %v985
        %v1213 = vpop.xlane.xlu0 %1212
        %1214 = vmax.xlane.f32.xlu0 %v986
        %v1215 = vpop.xlane.xlu0 %1214
        %1216 = vmax.xlane.f32.xlu0 %v987
        %v1217 = vpop.xlane.xlu0 %1216
        %1218 = vmax.xlane.f32.xlu0 %v988
        %v1219 = vpop.xlane.xlu0 %1218
        %1220 = vmax.xlane.f32.xlu0 %v989
        %v1221 = vpop.xlane.xlu0 %1220
        %1222 = vmax.xlane.f32.xlu0 %v990
        %v1223 = vpop.xlane.xlu0 %1222
        %1224 = vmax.xlane.f32.xlu0 %v991
        %v1225 = vpop.xlane.xlu0 %1224
        %1226 = vmax.xlane.f32.xlu0 %v992
        %v1227 = vpop.xlane.xlu0 %1226
        %1228 = vmax.xlane.f32.xlu0 %v993
        %v1229 = vpop.xlane.xlu0 %1228
        %1230 = vmax.xlane.f32.xlu0 %v994
        %v1231 = vpop.xlane.xlu0 %1230
        %1232 = vmax.xlane.f32.xlu0 %v995
        %v1233 = vpop.xlane.xlu0 %1232
        %1234 = vmax.xlane.f32.xlu0 %v996
        %v1235 = vpop.xlane.xlu0 %1234
        %1236 = vmax.xlane.f32.xlu0 %v997
        %v1237 = vpop.xlane.xlu0 %1236
        %1238 = vmax.xlane.f32.xlu0 %v998
        %v1239 = vpop.xlane.xlu0 %1238
        %1240 = vmax.xlane.f32.xlu0 %v999
        %v1241 = vpop.xlane.xlu0 %1240
        %1242 = vmax.xlane.f32.xlu0 %v1000
        %v1243 = vpop.xlane.xlu0 %1242
        %1244 = vmax.xlane.f32.xlu0 %v1001
        %v1245 = vpop.xlane.xlu0 %1244
        %1246 = vmax.xlane.f32.xlu0 %v1002
        %v1247 = vpop.xlane.xlu0 %1246
        %1248 = vmax.xlane.f32.xlu0 %v1003
        %v1249 = vpop.xlane.xlu0 %1248
        %1250 = vmax.xlane.f32.xlu0 %v1004
        %v1251 = vpop.xlane.xlu0 %1250
        %1252 = vmax.xlane.f32.xlu0 %v1005
        %v1253 = vpop.xlane.xlu0 %1252
        %1254 = vmax.xlane.f32.xlu0 %v1006
        %v1255 = vpop.xlane.xlu0 %1254
        %1256 = vmax.xlane.f32.xlu0 %v1007
        %v1257 = vpop.xlane.xlu0 %1256
        %1258 = vmax.xlane.f32.xlu0 %v1008
        %v1259 = vpop.xlane.xlu0 %1258
        %1260 = vmax.xlane.f32.xlu0 %v1009
        %v1261 = vpop.xlane.xlu0 %1260
        %1262 = vmax.xlane.f32.xlu0 %v1010
        %v1263 = vpop.xlane.xlu0 %1262
        %1264 = vmax.xlane.f32.xlu0 %v1011
        %v1265 = vpop.xlane.xlu0 %1264
        %1266 = vmax.xlane.f32.xlu0 %v1012
        %v1267 = vpop.xlane.xlu0 %1266
        %1268 = vmax.xlane.f32.xlu0 %v1013
        %v1269 = vpop.xlane.xlu0 %1268
        %v1270 = vld [vmem:[%s5] sm:$0xff]
        %v1271 = vld [vmem:[%s5 + $0x8] sm:$0xff]
        %v1272 = vld [vmem:[%s5 + $0x10] sm:$0xff]
        %v1273 = vld [vmem:[%s5 + $0x18] sm:$0xff]
        %v1274 = vld [vmem:[%s5 + $0x20] sm:$0xff]
        %v1275 = vld [vmem:[%s5 + $0x28] sm:$0xff]
        %v1276 = vld [vmem:[%s5 + $0x30] sm:$0xff]
        %v1277 = vld [vmem:[%s5 + $0x38] sm:$0xff]
        %v1278 = vld [vmem:[%s5 + $0x40] sm:$0xff]
        %v1279 = vld [vmem:[%s5 + $0x48] sm:$0xff]
        %v1280 = vld [vmem:[%s5 + $0x50] sm:$0xff]
        %v1281 = vld [vmem:[%s5 + $0x58] sm:$0xff]
        %v1282 = vld [vmem:[%s5 + $0x60] sm:$0xff]
        %v1283 = vld [vmem:[%s5 + $0x68] sm:$0xff]
        %v1284 = vld [vmem:[%s5 + $0x70] sm:$0xff]
        %v1285 = vld [vmem:[%s5 + $0x78] sm:$0xff]
        %1286 = vmatpush.msra.mxu0 %v1285
        %1287 = vmatpush.msra.mxu0 %v1284
        %1288 = vmatpush.msra.mxu0 %v1283
        %1289 = vmatpush.msra.mxu0 %v1282
        %1290 = vmatpush.msra.mxu0 %v1281
        %1291 = vmatpush.msra.mxu0 %v1280
        %1292 = vmatpush.msra.mxu0 %v1279
        %1293 = vmatpush.msra.mxu0 %v1278
        %1294 = vmatpush.msra.mxu0 %v1277
        %1295 = vmatpush.msra.mxu0 %v1276
        %1296 = vmatpush.msra.mxu0 %v1275
        %1297 = vmatpush.msra.mxu0 %v1274
        %1298 = vmatpush.msra.mxu0 %v1273
        %1299 = vmatpush.msra.mxu0 %v1272
        %1300 = vmatpush.msra.mxu0 %v1271
        %1301 = vmatpush.msra.mxu0 %v1270
        %1302 = vmatmul.f32.gmra.mxu0 %v886
        %v1303 = vpop.f32.mrf.mxu0
        %v1304 = vadd.f32 0.0, %v1303
        %1305 = vmatmul.f32.gmra.mxu0 %v887
        %v1306 = vpop.f32.mrf.mxu0
        %v1307 = vadd.f32 0.0, %v1306
        %1308 = vmatmul.f32.gmra.mxu0 %v888
        %v1309 = vpop.f32.mrf.mxu0
        %v1310 = vadd.f32 0.0, %v1309
        %1311 = vmatmul.f32.gmra.mxu0 %v889
        %v1312 = vpop.f32.mrf.mxu0
        %v1313 = vadd.f32 0.0, %v1312
        %1314 = vmatmul.f32.gmra.mxu0 %v890
        %v1315 = vpop.f32.mrf.mxu0
        %v1316 = vadd.f32 0.0, %v1315
        %1317 = vmatmul.f32.gmra.mxu0 %v891
        %v1318 = vpop.f32.mrf.mxu0
        %v1319 = vadd.f32 0.0, %v1318
        %1320 = vmatmul.f32.gmra.mxu0 %v892
        %v1321 = vpop.f32.mrf.mxu0
        %v1322 = vadd.f32 0.0, %v1321
        %1323 = vmatmul.f32.gmra.mxu0 %v893
        %v1324 = vpop.f32.mrf.mxu0
        %v1325 = vadd.f32 0.0, %v1324
        %1326 = vmatmul.f32.gmra.mxu0 %v894
        %v1327 = vpop.f32.mrf.mxu0
        %v1328 = vadd.f32 0.0, %v1327
        %1329 = vmatmul.f32.gmra.mxu0 %v895
        %v1330 = vpop.f32.mrf.mxu0
        %v1331 = vadd.f32 0.0, %v1330
        %1332 = vmatmul.f32.gmra.mxu0 %v896
        %v1333 = vpop.f32.mrf.mxu0
        %v1334 = vadd.f32 0.0, %v1333
        %1335 = vmatmul.f32.gmra.mxu0 %v897
        %v1336 = vpop.f32.mrf.mxu0
        %v1337 = vadd.f32 0.0, %v1336
        %1338 = vmatmul.f32.gmra.mxu0 %v898
        %v1339 = vpop.f32.mrf.mxu0
        %v1340 = vadd.f32 0.0, %v1339
        %1341 = vmatmul.f32.gmra.mxu0 %v899
        %v1342 = vpop.f32.mrf.mxu0
        %v1343 = vadd.f32 0.0, %v1342
        %1344 = vmatmul.f32.gmra.mxu0 %v900
        %v1345 = vpop.f32.mrf.mxu0
        %v1346 = vadd.f32 0.0, %v1345
        %1347 = vmatmul.f32.gmra.mxu0 %v901
        %v1348 = vpop.f32.mrf.mxu0
        %v1349 = vadd.f32 0.0, %v1348
        %1350 = vmatmul.f32.gmra.mxu0 %v902
        %v1351 = vpop.f32.mrf.mxu0
        %v1352 = vadd.f32 0.0, %v1351
        %1353 = vmatmul.f32.gmra.mxu0 %v903
        %v1354 = vpop.f32.mrf.mxu0
        %v1355 = vadd.f32 0.0, %v1354
        %1356 = vmatmul.f32.gmra.mxu0 %v904
        %v1357 = vpop.f32.mrf.mxu0
        %v1358 = vadd.f32 0.0, %v1357
        %1359 = vmatmul.f32.gmra.mxu0 %v905
        %v1360 = vpop.f32.mrf.mxu0
        %v1361 = vadd.f32 0.0, %v1360
        %1362 = vmatmul.f32.gmra.mxu0 %v906
        %v1363 = vpop.f32.mrf.mxu0
        %v1364 = vadd.f32 0.0, %v1363
        %1365 = vmatmul.f32.gmra.mxu0 %v907
        %v1366 = vpop.f32.mrf.mxu0
        %v1367 = vadd.f32 0.0, %v1366
        %1368 = vmatmul.f32.gmra.mxu0 %v908
        %v1369 = vpop.f32.mrf.mxu0
        %v1370 = vadd.f32 0.0, %v1369
        %1371 = vmatmul.f32.gmra.mxu0 %v909
        %v1372 = vpop.f32.mrf.mxu0
        %v1373 = vadd.f32 0.0, %v1372
        %1374 = vmatmul.f32.gmra.mxu0 %v910
        %v1375 = vpop.f32.mrf.mxu0
        %v1376 = vadd.f32 0.0, %v1375
        %1377 = vmatmul.f32.gmra.mxu0 %v911
        %v1378 = vpop.f32.mrf.mxu0
        %v1379 = vadd.f32 0.0, %v1378
        %1380 = vmatmul.f32.gmra.mxu0 %v912
        %v1381 = vpop.f32.mrf.mxu0
        %v1382 = vadd.f32 0.0, %v1381
        %1383 = vmatmul.f32.gmra.mxu0 %v913
        %v1384 = vpop.f32.mrf.mxu0
        %v1385 = vadd.f32 0.0, %v1384
        %1386 = vmatmul.f32.gmra.mxu0 %v914
        %v1387 = vpop.f32.mrf.mxu0
        %v1388 = vadd.f32 0.0, %v1387
        %1389 = vmatmul.f32.gmra.mxu0 %v915
        %v1390 = vpop.f32.mrf.mxu0
        %v1391 = vadd.f32 0.0, %v1390
        %1392 = vmatmul.f32.gmra.mxu0 %v916
        %v1393 = vpop.f32.mrf.mxu0
        %v1394 = vadd.f32 0.0, %v1393
        %1395 = vmatmul.f32.gmra.mxu0 %v917
        %v1396 = vpop.f32.mrf.mxu0
        %v1397 = vadd.f32 0.0, %v1396
        %1398 = vmatmul.f32.gmra.mxu0 %v918
        %v1399 = vpop.f32.mrf.mxu0
        %v1400 = vadd.f32 0.0, %v1399
        %1401 = vmatmul.f32.gmra.mxu0 %v919
        %v1402 = vpop.f32.mrf.mxu0
        %v1403 = vadd.f32 0.0, %v1402
        %1404 = vmatmul.f32.gmra.mxu0 %v920
        %v1405 = vpop.f32.mrf.mxu0
        %v1406 = vadd.f32 0.0, %v1405
        %1407 = vmatmul.f32.gmra.mxu0 %v921
        %v1408 = vpop.f32.mrf.mxu0
        %v1409 = vadd.f32 0.0, %v1408
        %1410 = vmatmul.f32.gmra.mxu0 %v922
        %v1411 = vpop.f32.mrf.mxu0
        %v1412 = vadd.f32 0.0, %v1411
        %1413 = vmatmul.f32.gmra.mxu0 %v923
        %v1414 = vpop.f32.mrf.mxu0
        %v1415 = vadd.f32 0.0, %v1414
        %1416 = vmatmul.f32.gmra.mxu0 %v924
        %v1417 = vpop.f32.mrf.mxu0
        %v1418 = vadd.f32 0.0, %v1417
        %1419 = vmatmul.f32.gmra.mxu0 %v925
        %v1420 = vpop.f32.mrf.mxu0
        %v1421 = vadd.f32 0.0, %v1420
        %1422 = vmatmul.f32.gmra.mxu0 %v926
        %v1423 = vpop.f32.mrf.mxu0
        %v1424 = vadd.f32 0.0, %v1423
        %1425 = vmatmul.f32.gmra.mxu0 %v927
        %v1426 = vpop.f32.mrf.mxu0
        %v1427 = vadd.f32 0.0, %v1426
        %1428 = vmatmul.f32.gmra.mxu0 %v928
        %v1429 = vpop.f32.mrf.mxu0
        %v1430 = vadd.f32 0.0, %v1429
        %1431 = vmatmul.f32.gmra.mxu0 %v929
        %v1432 = vpop.f32.mrf.mxu0
        %v1433 = vadd.f32 0.0, %v1432
        %1434 = vmatmul.f32.gmra.mxu0 %v930
        %v1435 = vpop.f32.mrf.mxu0
        %v1436 = vadd.f32 0.0, %v1435
        %1437 = vmatmul.f32.gmra.mxu0 %v931
        %v1438 = vpop.f32.mrf.mxu0
        %v1439 = vadd.f32 0.0, %v1438
        %1440 = vmatmul.f32.gmra.mxu0 %v932
        %v1441 = vpop.f32.mrf.mxu0
        %v1442 = vadd.f32 0.0, %v1441
        %1443 = vmatmul.f32.gmra.mxu0 %v933
        %v1444 = vpop.f32.mrf.mxu0
        %v1445 = vadd.f32 0.0, %v1444
        %1446 = vmatmul.f32.gmra.mxu0 %v934
        %v1447 = vpop.f32.mrf.mxu0
        %v1448 = vadd.f32 0.0, %v1447
        %1449 = vmatmul.f32.gmra.mxu0 %v935
        %v1450 = vpop.f32.mrf.mxu0
        %v1451 = vadd.f32 0.0, %v1450
        %1452 = vmatmul.f32.gmra.mxu0 %v936
        %v1453 = vpop.f32.mrf.mxu0
        %v1454 = vadd.f32 0.0, %v1453
        %1455 = vmatmul.f32.gmra.mxu0 %v937
        %v1456 = vpop.f32.mrf.mxu0
        %v1457 = vadd.f32 0.0, %v1456
        %1458 = vmatmul.f32.gmra.mxu0 %v938
        %v1459 = vpop.f32.mrf.mxu0
        %v1460 = vadd.f32 0.0, %v1459
        %1461 = vmatmul.f32.gmra.mxu0 %v939
        %v1462 = vpop.f32.mrf.mxu0
        %v1463 = vadd.f32 0.0, %v1462
        %1464 = vmatmul.f32.gmra.mxu0 %v940
        %v1465 = vpop.f32.mrf.mxu0
        %v1466 = vadd.f32 0.0, %v1465
        %1467 = vmatmul.f32.gmra.mxu0 %v941
        %v1468 = vpop.f32.mrf.mxu0
        %v1469 = vadd.f32 0.0, %v1468
        %1470 = vmatmul.f32.gmra.mxu0 %v942
        %v1471 = vpop.f32.mrf.mxu0
        %v1472 = vadd.f32 0.0, %v1471
        %1473 = vmatmul.f32.gmra.mxu0 %v943
        %v1474 = vpop.f32.mrf.mxu0
        %v1475 = vadd.f32 0.0, %v1474
        %1476 = vmatmul.f32.gmra.mxu0 %v944
        %v1477 = vpop.f32.mrf.mxu0
        %v1478 = vadd.f32 0.0, %v1477
        %1479 = vmatmul.f32.gmra.mxu0 %v945
        %v1480 = vpop.f32.mrf.mxu0
        %v1481 = vadd.f32 0.0, %v1480
        %1482 = vmatmul.f32.gmra.mxu0 %v946
        %v1483 = vpop.f32.mrf.mxu0
        %v1484 = vadd.f32 0.0, %v1483
        %1485 = vmatmul.f32.gmra.mxu0 %v947
        %v1486 = vpop.f32.mrf.mxu0
        %v1487 = vadd.f32 0.0, %v1486
        %1488 = vmatmul.f32.gmra.mxu0 %v948
        %v1489 = vpop.f32.mrf.mxu0
        %v1490 = vadd.f32 0.0, %v1489
        %1491 = vmatmul.f32.gmra.mxu0 %v949
        %v1492 = vpop.f32.mrf.mxu0
        %v1493 = vadd.f32 0.0, %v1492
        %1494 = vmatmul.f32.gmra.mxu0 %v950
        %v1495 = vpop.f32.mrf.mxu0
        %v1496 = vadd.f32 0.0, %v1495
        %1497 = vmatmul.f32.gmra.mxu0 %v951
        %v1498 = vpop.f32.mrf.mxu0
        %v1499 = vadd.f32 0.0, %v1498
        %1500 = vmatmul.f32.gmra.mxu0 %v952
        %v1501 = vpop.f32.mrf.mxu0
        %v1502 = vadd.f32 0.0, %v1501
        %1503 = vmatmul.f32.gmra.mxu0 %v953
        %v1504 = vpop.f32.mrf.mxu0
        %v1505 = vadd.f32 0.0, %v1504
        %1506 = vmatmul.f32.gmra.mxu0 %v954
        %v1507 = vpop.f32.mrf.mxu0
        %v1508 = vadd.f32 0.0, %v1507
        %1509 = vmatmul.f32.gmra.mxu0 %v955
        %v1510 = vpop.f32.mrf.mxu0
        %v1511 = vadd.f32 0.0, %v1510
        %1512 = vmatmul.f32.gmra.mxu0 %v956
        %v1513 = vpop.f32.mrf.mxu0
        %v1514 = vadd.f32 0.0, %v1513
        %1515 = vmatmul.f32.gmra.mxu0 %v957
        %v1516 = vpop.f32.mrf.mxu0
        %v1517 = vadd.f32 0.0, %v1516
        %1518 = vmatmul.f32.gmra.mxu0 %v958
        %v1519 = vpop.f32.mrf.mxu0
        %v1520 = vadd.f32 0.0, %v1519
        %1521 = vmatmul.f32.gmra.mxu0 %v959
        %v1522 = vpop.f32.mrf.mxu0
        %v1523 = vadd.f32 0.0, %v1522
        %1524 = vmatmul.f32.gmra.mxu0 %v960
        %v1525 = vpop.f32.mrf.mxu0
        %v1526 = vadd.f32 0.0, %v1525
        %1527 = vmatmul.f32.gmra.mxu0 %v961
        %v1528 = vpop.f32.mrf.mxu0
        %v1529 = vadd.f32 0.0, %v1528
        %1530 = vmatmul.f32.gmra.mxu0 %v962
        %v1531 = vpop.f32.mrf.mxu0
        %v1532 = vadd.f32 0.0, %v1531
        %1533 = vmatmul.f32.gmra.mxu0 %v963
        %v1534 = vpop.f32.mrf.mxu0
        %v1535 = vadd.f32 0.0, %v1534
        %1536 = vmatmul.f32.gmra.mxu0 %v964
        %v1537 = vpop.f32.mrf.mxu0
        %v1538 = vadd.f32 0.0, %v1537
        %1539 = vmatmul.f32.gmra.mxu0 %v965
        %v1540 = vpop.f32.mrf.mxu0
        %v1541 = vadd.f32 0.0, %v1540
        %1542 = vmatmul.f32.gmra.mxu0 %v966
        %v1543 = vpop.f32.mrf.mxu0
        %v1544 = vadd.f32 0.0, %v1543
        %1545 = vmatmul.f32.gmra.mxu0 %v967
        %v1546 = vpop.f32.mrf.mxu0
        %v1547 = vadd.f32 0.0, %v1546
        %1548 = vmatmul.f32.gmra.mxu0 %v968
        %v1549 = vpop.f32.mrf.mxu0
        %v1550 = vadd.f32 0.0, %v1549
        %1551 = vmatmul.f32.gmra.mxu0 %v969
        %v1552 = vpop.f32.mrf.mxu0
        %v1553 = vadd.f32 0.0, %v1552
        %1554 = vmatmul.f32.gmra.mxu0 %v970
        %v1555 = vpop.f32.mrf.mxu0
        %v1556 = vadd.f32 0.0, %v1555
        %1557 = vmatmul.f32.gmra.mxu0 %v971
        %v1558 = vpop.f32.mrf.mxu0
        %v1559 = vadd.f32 0.0, %v1558
        %1560 = vmatmul.f32.gmra.mxu0 %v972
        %v1561 = vpop.f32.mrf.mxu0
        %v1562 = vadd.f32 0.0, %v1561
        %1563 = vmatmul.f32.gmra.mxu0 %v973
        %v1564 = vpop.f32.mrf.mxu0
        %v1565 = vadd.f32 0.0, %v1564
        %1566 = vmatmul.f32.gmra.mxu0 %v974
        %v1567 = vpop.f32.mrf.mxu0
        %v1568 = vadd.f32 0.0, %v1567
        %1569 = vmatmul.f32.gmra.mxu0 %v975
        %v1570 = vpop.f32.mrf.mxu0
        %v1571 = vadd.f32 0.0, %v1570
        %1572 = vmatmul.f32.gmra.mxu0 %v976
        %v1573 = vpop.f32.mrf.mxu0
        %v1574 = vadd.f32 0.0, %v1573
        %1575 = vmatmul.f32.gmra.mxu0 %v977
        %v1576 = vpop.f32.mrf.mxu0
        %v1577 = vadd.f32 0.0, %v1576
        %1578 = vmatmul.f32.gmra.mxu0 %v978
        %v1579 = vpop.f32.mrf.mxu0
        %v1580 = vadd.f32 0.0, %v1579
        %1581 = vmatmul.f32.gmra.mxu0 %v979
        %v1582 = vpop.f32.mrf.mxu0
        %v1583 = vadd.f32 0.0, %v1582
        %1584 = vmatmul.f32.gmra.mxu0 %v980
        %v1585 = vpop.f32.mrf.mxu0
        %v1586 = vadd.f32 0.0, %v1585
        %1587 = vmatmul.f32.gmra.mxu0 %v981
        %v1588 = vpop.f32.mrf.mxu0
        %v1589 = vadd.f32 0.0, %v1588
        %1590 = vmatmul.f32.gmra.mxu0 %v982
        %v1591 = vpop.f32.mrf.mxu0
        %v1592 = vadd.f32 0.0, %v1591
        %1593 = vmatmul.f32.gmra.mxu0 %v983
        %v1594 = vpop.f32.mrf.mxu0
        %v1595 = vadd.f32 0.0, %v1594
        %1596 = vmatmul.f32.gmra.mxu0 %v984
        %v1597 = vpop.f32.mrf.mxu0
        %v1598 = vadd.f32 0.0, %v1597
        %1599 = vmatmul.f32.gmra.mxu0 %v985
        %v1600 = vpop.f32.mrf.mxu0
        %v1601 = vadd.f32 0.0, %v1600
        %1602 = vmatmul.f32.gmra.mxu0 %v986
        %v1603 = vpop.f32.mrf.mxu0
        %v1604 = vadd.f32 0.0, %v1603
        %1605 = vmatmul.f32.gmra.mxu0 %v987
        %v1606 = vpop.f32.mrf.mxu0
        %v1607 = vadd.f32 0.0, %v1606
        %1608 = vmatmul.f32.gmra.mxu0 %v988
        %v1609 = vpop.f32.mrf.mxu0
        %v1610 = vadd.f32 0.0, %v1609
        %1611 = vmatmul.f32.gmra.mxu0 %v989
        %v1612 = vpop.f32.mrf.mxu0
        %v1613 = vadd.f32 0.0, %v1612
        %1614 = vmatmul.f32.gmra.mxu0 %v990
        %v1615 = vpop.f32.mrf.mxu0
        %v1616 = vadd.f32 0.0, %v1615
        %1617 = vmatmul.f32.gmra.mxu0 %v991
        %v1618 = vpop.f32.mrf.mxu0
        %v1619 = vadd.f32 0.0, %v1618
        %1620 = vmatmul.f32.gmra.mxu0 %v992
        %v1621 = vpop.f32.mrf.mxu0
        %v1622 = vadd.f32 0.0, %v1621
        %1623 = vmatmul.f32.gmra.mxu0 %v993
        %v1624 = vpop.f32.mrf.mxu0
        %v1625 = vadd.f32 0.0, %v1624
        %1626 = vmatmul.f32.gmra.mxu0 %v994
        %v1627 = vpop.f32.mrf.mxu0
        %v1628 = vadd.f32 0.0, %v1627
        %1629 = vmatmul.f32.gmra.mxu0 %v995
        %v1630 = vpop.f32.mrf.mxu0
        %v1631 = vadd.f32 0.0, %v1630
        %1632 = vmatmul.f32.gmra.mxu0 %v996
        %v1633 = vpop.f32.mrf.mxu0
        %v1634 = vadd.f32 0.0, %v1633
        %1635 = vmatmul.f32.gmra.mxu0 %v997
        %v1636 = vpop.f32.mrf.mxu0
        %v1637 = vadd.f32 0.0, %v1636
        %1638 = vmatmul.f32.gmra.mxu0 %v998
        %v1639 = vpop.f32.mrf.mxu0
        %v1640 = vadd.f32 0.0, %v1639
        %1641 = vmatmul.f32.gmra.mxu0 %v999
        %v1642 = vpop.f32.mrf.mxu0
        %v1643 = vadd.f32 0.0, %v1642
        %1644 = vmatmul.f32.gmra.mxu0 %v1000
        %v1645 = vpop.f32.mrf.mxu0
        %v1646 = vadd.f32 0.0, %v1645
        %1647 = vmatmul.f32.gmra.mxu0 %v1001
        %v1648 = vpop.f32.mrf.mxu0
        %v1649 = vadd.f32 0.0, %v1648
        %1650 = vmatmul.f32.gmra.mxu0 %v1002
        %v1651 = vpop.f32.mrf.mxu0
        %v1652 = vadd.f32 0.0, %v1651
        %1653 = vmatmul.f32.gmra.mxu0 %v1003
        %v1654 = vpop.f32.mrf.mxu0
        %v1655 = vadd.f32 0.0, %v1654
        %1656 = vmatmul.f32.gmra.mxu0 %v1004
        %v1657 = vpop.f32.mrf.mxu0
        %v1658 = vadd.f32 0.0, %v1657
        %1659 = vmatmul.f32.gmra.mxu0 %v1005
        %v1660 = vpop.f32.mrf.mxu0
        %v1661 = vadd.f32 0.0, %v1660
        %1662 = vmatmul.f32.gmra.mxu0 %v1006
        %v1663 = vpop.f32.mrf.mxu0
        %v1664 = vadd.f32 0.0, %v1663
        %1665 = vmatmul.f32.gmra.mxu0 %v1007
        %v1666 = vpop.f32.mrf.mxu0
        %v1667 = vadd.f32 0.0, %v1666
        %1668 = vmatmul.f32.gmra.mxu0 %v1008
        %v1669 = vpop.f32.mrf.mxu0
        %v1670 = vadd.f32 0.0, %v1669
        %1671 = vmatmul.f32.gmra.mxu0 %v1009
        %v1672 = vpop.f32.mrf.mxu0
        %v1673 = vadd.f32 0.0, %v1672
        %1674 = vmatmul.f32.gmra.mxu0 %v1010
        %v1675 = vpop.f32.mrf.mxu0
        %v1676 = vadd.f32 0.0, %v1675
        %1677 = vmatmul.f32.gmra.mxu0 %v1011
        %v1678 = vpop.f32.mrf.mxu0
        %v1679 = vadd.f32 0.0, %v1678
        %1680 = vmatmul.f32.gmra.mxu0 %v1012
        %v1681 = vpop.f32.mrf.mxu0
        %v1682 = vadd.f32 0.0, %v1681
        %1683 = vmatmul.f32.gmra.mxu0 %v1013
        %v1684 = vpop.f32.mrf.mxu0
        %v1685 = vadd.f32 0.0, %v1684
        %1686 = vdwg.mxu0
        %v1815 = vlaneseq
        %v1816 = vand.u32 %v1815, 127
        %v1817 = vperm.slane %v1015, %v1816
        %v1818 = vadd.s32 %v1816, 4294967288
        %v1819 = vperm.slane %v1017, %v1818
        %vm1820 = vcmask 130112
        %v1821 = vsel %vm1820, %v1819, %v1817
        %v1822 = vperm.slane %v1019, %v1816
        %v1823 = vperm.slane %v1021, %v1818
        %v1824 = vsel %vm1820, %v1823, %v1822
        %v1825 = vperm.slane %v1023, %v1816
        %v1826 = vperm.slane %v1025, %v1818
        %v1827 = vsel %vm1820, %v1826, %v1825
        %v1828 = vperm.slane %v1027, %v1816
        %v1829 = vperm.slane %v1029, %v1818
        %v1830 = vsel %vm1820, %v1829, %v1828
        %v1831 = vperm.slane %v1031, %v1816
        %v1832 = vperm.slane %v1033, %v1818
        %v1833 = vsel %vm1820, %v1832, %v1831
        %v1834 = vperm.slane %v1035, %v1816
        %v1835 = vperm.slane %v1037, %v1818
        %v1836 = vsel %vm1820, %v1835, %v1834
        %v1837 = vperm.slane %v1039, %v1816
        %v1838 = vperm.slane %v1041, %v1818
        %v1839 = vsel %vm1820, %v1838, %v1837
        %v1840 = vperm.slane %v1043, %v1816
        %v1841 = vperm.slane %v1045, %v1818
        %v1842 = vsel %vm1820, %v1841, %v1840
        %v1843 = vperm.slane %v1047, %v1816
        %v1844 = vperm.slane %v1049, %v1818
        %v1845 = vsel %vm1820, %v1844, %v1843
        %v1846 = vperm.slane %v1051, %v1816
        %v1847 = vperm.slane %v1053, %v1818
        %v1848 = vsel %vm1820, %v1847, %v1846
        %v1849 = vperm.slane %v1055, %v1816
        %v1850 = vperm.slane %v1057, %v1818
        %v1851 = vsel %vm1820, %v1850, %v1849
        %v1852 = vperm.slane %v1059, %v1816
        %v1853 = vperm.slane %v1061, %v1818
        %v1854 = vsel %vm1820, %v1853, %v1852
        %v1855 = vperm.slane %v1063, %v1816
        %v1856 = vperm.slane %v1065, %v1818
        %v1857 = vsel %vm1820, %v1856, %v1855
        %v1858 = vperm.slane %v1067, %v1816
        %v1859 = vperm.slane %v1069, %v1818
        %v1860 = vsel %vm1820, %v1859, %v1858
        %v1861 = vperm.slane %v1071, %v1816
        %v1862 = vperm.slane %v1073, %v1818
        %v1863 = vsel %vm1820, %v1862, %v1861
        %v1864 = vperm.slane %v1075, %v1816
        %v1865 = vperm.slane %v1077, %v1818
        %v1866 = vsel %vm1820, %v1865, %v1864
        %v1867 = vperm.slane %v1079, %v1816
        %v1868 = vperm.slane %v1081, %v1818
        %v1869 = vsel %vm1820, %v1868, %v1867
        %v1870 = vperm.slane %v1083, %v1816
        %v1871 = vperm.slane %v1085, %v1818
        %v1872 = vsel %vm1820, %v1871, %v1870
        %v1873 = vperm.slane %v1087, %v1816
        %v1874 = vperm.slane %v1089, %v1818
        %v1875 = vsel %vm1820, %v1874, %v1873
        %v1876 = vperm.slane %v1091, %v1816
        %v1877 = vperm.slane %v1093, %v1818
        %v1878 = vsel %vm1820, %v1877, %v1876
        %v1879 = vperm.slane %v1095, %v1816
        %v1880 = vperm.slane %v1097, %v1818
        %v1881 = vsel %vm1820, %v1880, %v1879
        %v1882 = vperm.slane %v1099, %v1816
        %v1883 = vperm.slane %v1101, %v1818
        %v1884 = vsel %vm1820, %v1883, %v1882
        %v1885 = vperm.slane %v1103, %v1816
        %v1886 = vperm.slane %v1105, %v1818
        %v1887 = vsel %vm1820, %v1886, %v1885
        %v1888 = vperm.slane %v1107, %v1816
        %v1889 = vperm.slane %v1109, %v1818
        %v1890 = vsel %vm1820, %v1889, %v1888
        %v1891 = vperm.slane %v1111, %v1816
        %v1892 = vperm.slane %v1113, %v1818
        %v1893 = vsel %vm1820, %v1892, %v1891
        %v1894 = vperm.slane %v1115, %v1816
        %v1895 = vperm.slane %v1117, %v1818
        %v1896 = vsel %vm1820, %v1895, %v1894
        %v1897 = vperm.slane %v1119, %v1816
        %v1898 = vperm.slane %v1121, %v1818
        %v1899 = vsel %vm1820, %v1898, %v1897
        %v1900 = vperm.slane %v1123, %v1816
        %v1901 = vperm.slane %v1125, %v1818
        %v1902 = vsel %vm1820, %v1901, %v1900
        %v1903 = vperm.slane %v1127, %v1816
        %v1904 = vperm.slane %v1129, %v1818
        %v1905 = vsel %vm1820, %v1904, %v1903
        %v1906 = vperm.slane %v1131, %v1816
        %v1907 = vperm.slane %v1133, %v1818
        %v1908 = vsel %vm1820, %v1907, %v1906
        %v1909 = vperm.slane %v1135, %v1816
        %v1910 = vperm.slane %v1137, %v1818
        %v1911 = vsel %vm1820, %v1910, %v1909
        %v1912 = vperm.slane %v1139, %v1816
        %v1913 = vperm.slane %v1141, %v1818
        %v1914 = vsel %vm1820, %v1913, %v1912
        %v1915 = vperm.slane %v1143, %v1816
        %v1916 = vperm.slane %v1145, %v1818
        %v1917 = vsel %vm1820, %v1916, %v1915
        %v1918 = vperm.slane %v1147, %v1816
        %v1919 = vperm.slane %v1149, %v1818
        %v1920 = vsel %vm1820, %v1919, %v1918
        %v1921 = vperm.slane %v1151, %v1816
        %v1922 = vperm.slane %v1153, %v1818
        %v1923 = vsel %vm1820, %v1922, %v1921
        %v1924 = vperm.slane %v1155, %v1816
        %v1925 = vperm.slane %v1157, %v1818
        %v1926 = vsel %vm1820, %v1925, %v1924
        %v1927 = vperm.slane %v1159, %v1816
        %v1928 = vperm.slane %v1161, %v1818
        %v1929 = vsel %vm1820, %v1928, %v1927
        %v1930 = vperm.slane %v1163, %v1816
        %v1931 = vperm.slane %v1165, %v1818
        %v1932 = vsel %vm1820, %v1931, %v1930
        %v1933 = vperm.slane %v1167, %v1816
        %v1934 = vperm.slane %v1169, %v1818
        %v1935 = vsel %vm1820, %v1934, %v1933
        %v1936 = vperm.slane %v1171, %v1816
        %v1937 = vperm.slane %v1173, %v1818
        %v1938 = vsel %vm1820, %v1937, %v1936
        %v1939 = vperm.slane %v1175, %v1816
        %v1940 = vperm.slane %v1177, %v1818
        %v1941 = vsel %vm1820, %v1940, %v1939
        %v1942 = vperm.slane %v1179, %v1816
        %v1943 = vperm.slane %v1181, %v1818
        %v1944 = vsel %vm1820, %v1943, %v1942
        %v1945 = vperm.slane %v1183, %v1816
        %v1946 = vperm.slane %v1185, %v1818
        %v1947 = vsel %vm1820, %v1946, %v1945
        %v1948 = vperm.slane %v1187, %v1816
        %v1949 = vperm.slane %v1189, %v1818
        %v1950 = vsel %vm1820, %v1949, %v1948
        %v1951 = vperm.slane %v1191, %v1816
        %v1952 = vperm.slane %v1193, %v1818
        %v1953 = vsel %vm1820, %v1952, %v1951
        %v1954 = vperm.slane %v1195, %v1816
        %v1955 = vperm.slane %v1197, %v1818
        %v1956 = vsel %vm1820, %v1955, %v1954
        %v1957 = vperm.slane %v1199, %v1816
        %v1958 = vperm.slane %v1201, %v1818
        %v1959 = vsel %vm1820, %v1958, %v1957
        %v1960 = vperm.slane %v1203, %v1816
        %v1961 = vperm.slane %v1205, %v1818
        %v1962 = vsel %vm1820, %v1961, %v1960
        %v1963 = vperm.slane %v1207, %v1816
        %v1964 = vperm.slane %v1209, %v1818
        %v1965 = vsel %vm1820, %v1964, %v1963
        %v1966 = vperm.slane %v1211, %v1816
        %v1967 = vperm.slane %v1213, %v1818
        %v1968 = vsel %vm1820, %v1967, %v1966
        %v1969 = vperm.slane %v1215, %v1816
        %v1970 = vperm.slane %v1217, %v1818
        %v1971 = vsel %vm1820, %v1970, %v1969
        %v1972 = vperm.slane %v1219, %v1816
        %v1973 = vperm.slane %v1221, %v1818
        %v1974 = vsel %vm1820, %v1973, %v1972
        %v1975 = vperm.slane %v1223, %v1816
        %v1976 = vperm.slane %v1225, %v1818
        %v1977 = vsel %vm1820, %v1976, %v1975
        %v1978 = vperm.slane %v1227, %v1816
        %v1979 = vperm.slane %v1229, %v1818
        %v1980 = vsel %vm1820, %v1979, %v1978
        %v1981 = vperm.slane %v1231, %v1816
        %v1982 = vperm.slane %v1233, %v1818
        %v1983 = vsel %vm1820, %v1982, %v1981
        %v1984 = vperm.slane %v1235, %v1816
        %v1985 = vperm.slane %v1237, %v1818
        %v1986 = vsel %vm1820, %v1985, %v1984
        %v1987 = vperm.slane %v1239, %v1816
        %v1988 = vperm.slane %v1241, %v1818
        %v1989 = vsel %vm1820, %v1988, %v1987
        %v1990 = vperm.slane %v1243, %v1816
        %v1991 = vperm.slane %v1245, %v1818
        %v1992 = vsel %vm1820, %v1991, %v1990
        %v1993 = vperm.slane %v1247, %v1816
        %v1994 = vperm.slane %v1249, %v1818
        %v1995 = vsel %vm1820, %v1994, %v1993
        %v1996 = vperm.slane %v1251, %v1816
        %v1997 = vperm.slane %v1253, %v1818
        %v1998 = vsel %vm1820, %v1997, %v1996
        %v1999 = vperm.slane %v1255, %v1816
        %v2000 = vperm.slane %v1257, %v1818
        %v2001 = vsel %vm1820, %v2000, %v1999
        %v2002 = vperm.slane %v1259, %v1816
        %v2003 = vperm.slane %v1261, %v1818
        %v2004 = vsel %vm1820, %v2003, %v2002
        %v2005 = vperm.slane %v1263, %v1816
        %v2006 = vperm.slane %v1265, %v1818
        %v2007 = vsel %vm1820, %v2006, %v2005
        %v2008 = vperm.slane %v1267, %v1816
        %v2009 = vperm.slane %v1269, %v1818
        %v2010 = vsel %vm1820, %v2009, %v2008
        %v2011 = vsel %vm762, %v1824, %v1821
        %v2012 = vsel %vm764, %v1827, %v2011
        %v2013 = vsel %vm766, %v1830, %v2012
        %vm2014 = vcmask 1044484
        %v2015 = vsel %vm2014, %v1833, %v2013
        %v2016 = vsel %vm773, %v1836, %v2015
        %v2017 = vsel %vm775, %v1839, %v2016
        %v2018 = vsel %vm777, %v1842, %v2017
        %v2019 = vsel %vm762, %v1848, %v1845
        %v2020 = vsel %vm764, %v1851, %v2019
        %v2021 = vsel %vm766, %v1854, %v2020
        %v2022 = vsel %vm2014, %v1857, %v2021
        %v2023 = vsel %vm773, %v1860, %v2022
        %v2024 = vsel %vm775, %v1863, %v2023
        %v2025 = vsel %vm777, %v1866, %v2024
        %v2026 = vsel %vm762, %v1872, %v1869
        %v2027 = vsel %vm764, %v1875, %v2026
        %v2028 = vsel %vm766, %v1878, %v2027
        %v2029 = vsel %vm2014, %v1881, %v2028
        %v2030 = vsel %vm773, %v1884, %v2029
        %v2031 = vsel %vm775, %v1887, %v2030
        %v2032 = vsel %vm777, %v1890, %v2031
        %v2033 = vsel %vm762, %v1896, %v1893
        %v2034 = vsel %vm764, %v1899, %v2033
        %v2035 = vsel %vm766, %v1902, %v2034
        %v2036 = vsel %vm2014, %v1905, %v2035
        %v2037 = vsel %vm773, %v1908, %v2036
        %v2038 = vsel %vm775, %v1911, %v2037
        %v2039 = vsel %vm777, %v1914, %v2038
        %v2040 = vsel %vm762, %v1920, %v1917
        %v2041 = vsel %vm764, %v1923, %v2040
        %v2042 = vsel %vm766, %v1926, %v2041
        %v2043 = vsel %vm2014, %v1929, %v2042
        %v2044 = vsel %vm773, %v1932, %v2043
        %v2045 = vsel %vm775, %v1935, %v2044
        %v2046 = vsel %vm777, %v1938, %v2045
        %v2047 = vsel %vm762, %v1944, %v1941
        %v2048 = vsel %vm764, %v1947, %v2047
        %v2049 = vsel %vm766, %v1950, %v2048
        %v2050 = vsel %vm2014, %v1953, %v2049
        %v2051 = vsel %vm773, %v1956, %v2050
        %v2052 = vsel %vm775, %v1959, %v2051
        %v2053 = vsel %vm777, %v1962, %v2052
        %v2054 = vsel %vm762, %v1968, %v1965
        %v2055 = vsel %vm764, %v1971, %v2054
        %v2056 = vsel %vm766, %v1974, %v2055
        %v2057 = vsel %vm2014, %v1977, %v2056
        %v2058 = vsel %vm773, %v1980, %v2057
        %v2059 = vsel %vm775, %v1983, %v2058
        %v2060 = vsel %vm777, %v1986, %v2059
        %v2061 = vsel %vm762, %v1992, %v1989
        %v2062 = vsel %vm764, %v1995, %v2061
        %v2063 = vsel %vm766, %v1998, %v2062
        %v2064 = vsel %vm2014, %v2001, %v2063
        %v2065 = vsel %vm773, %v2004, %v2064
        %v2066 = vsel %vm775, %v2007, %v2065
        %v2067 = vsel %vm777, %v2010, %v2066
        %2204 = vset.pattern.permute.xlu0 0
        %2205 = vperm.xlu0 %2204, %v1304
        %v2206 = vpop.permute.xlu0 %2205
        %2207 = vset.pattern.permute.xlu0 0
        %2208 = vperm.xlu0 %2207, %v1307
        %v2209 = vpop.permute.xlu0 %2208
        %2210 = vset.pattern.permute.xlu0 0
        %2211 = vperm.xlu0 %2210, %v1310
        %v2212 = vpop.permute.xlu0 %2211
        %2213 = vset.pattern.permute.xlu0 0
        %2214 = vperm.xlu0 %2213, %v1313
        %v2215 = vpop.permute.xlu0 %2214
        %2216 = vset.pattern.permute.xlu0 0
        %2217 = vperm.xlu0 %2216, %v1316
        %v2218 = vpop.permute.xlu0 %2217
        %2219 = vset.pattern.permute.xlu0 0
        %2220 = vperm.xlu0 %2219, %v1319
        %v2221 = vpop.permute.xlu0 %2220
        %2222 = vset.pattern.permute.xlu0 0
        %2223 = vperm.xlu0 %2222, %v1322
        %v2224 = vpop.permute.xlu0 %2223
        %2225 = vset.pattern.permute.xlu0 0
        %2226 = vperm.xlu0 %2225, %v1325
        %v2227 = vpop.permute.xlu0 %2226
        %2228 = vset.pattern.permute.xlu0 0
        %2229 = vperm.xlu0 %2228, %v1328
        %v2230 = vpop.permute.xlu0 %2229
        %2231 = vset.pattern.permute.xlu0 0
        %2232 = vperm.xlu0 %2231, %v1331
        %v2233 = vpop.permute.xlu0 %2232
        %2234 = vset.pattern.permute.xlu0 0
        %2235 = vperm.xlu0 %2234, %v1334
        %v2236 = vpop.permute.xlu0 %2235
        %2237 = vset.pattern.permute.xlu0 0
        %2238 = vperm.xlu0 %2237, %v1337
        %v2239 = vpop.permute.xlu0 %2238
        %2240 = vset.pattern.permute.xlu0 0
        %2241 = vperm.xlu0 %2240, %v1340
        %v2242 = vpop.permute.xlu0 %2241
        %2243 = vset.pattern.permute.xlu0 0
        %2244 = vperm.xlu0 %2243, %v1343
        %v2245 = vpop.permute.xlu0 %2244
        %2246 = vset.pattern.permute.xlu0 0
        %2247 = vperm.xlu0 %2246, %v1346
        %v2248 = vpop.permute.xlu0 %2247
        %2249 = vset.pattern.permute.xlu0 0
        %2250 = vperm.xlu0 %2249, %v1349
        %v2251 = vpop.permute.xlu0 %2250
        %2252 = vset.pattern.permute.xlu0 0
        %2253 = vperm.xlu0 %2252, %v1352
        %v2254 = vpop.permute.xlu0 %2253
        %2255 = vset.pattern.permute.xlu0 0
        %2256 = vperm.xlu0 %2255, %v1355
        %v2257 = vpop.permute.xlu0 %2256
        %2258 = vset.pattern.permute.xlu0 0
        %2259 = vperm.xlu0 %2258, %v1358
        %v2260 = vpop.permute.xlu0 %2259
        %2261 = vset.pattern.permute.xlu0 0
        %2262 = vperm.xlu0 %2261, %v1361
        %v2263 = vpop.permute.xlu0 %2262
        %2264 = vset.pattern.permute.xlu0 0
        %2265 = vperm.xlu0 %2264, %v1364
        %v2266 = vpop.permute.xlu0 %2265
        %2267 = vset.pattern.permute.xlu0 0
        %2268 = vperm.xlu0 %2267, %v1367
        %v2269 = vpop.permute.xlu0 %2268
        %2270 = vset.pattern.permute.xlu0 0
        %2271 = vperm.xlu0 %2270, %v1370
        %v2272 = vpop.permute.xlu0 %2271
        %2273 = vset.pattern.permute.xlu0 0
        %2274 = vperm.xlu0 %2273, %v1373
        %v2275 = vpop.permute.xlu0 %2274
        %2276 = vset.pattern.permute.xlu0 0
        %2277 = vperm.xlu0 %2276, %v1376
        %v2278 = vpop.permute.xlu0 %2277
        %2279 = vset.pattern.permute.xlu0 0
        %2280 = vperm.xlu0 %2279, %v1379
        %v2281 = vpop.permute.xlu0 %2280
        %2282 = vset.pattern.permute.xlu0 0
        %2283 = vperm.xlu0 %2282, %v1382
        %v2284 = vpop.permute.xlu0 %2283
        %2285 = vset.pattern.permute.xlu0 0
        %2286 = vperm.xlu0 %2285, %v1385
        %v2287 = vpop.permute.xlu0 %2286
        %2288 = vset.pattern.permute.xlu0 0
        %2289 = vperm.xlu0 %2288, %v1388
        %v2290 = vpop.permute.xlu0 %2289
        %2291 = vset.pattern.permute.xlu0 0
        %2292 = vperm.xlu0 %2291, %v1391
        %v2293 = vpop.permute.xlu0 %2292
        %2294 = vset.pattern.permute.xlu0 0
        %2295 = vperm.xlu0 %2294, %v1394
        %v2296 = vpop.permute.xlu0 %2295
        %2297 = vset.pattern.permute.xlu0 0
        %2298 = vperm.xlu0 %2297, %v1397
        %v2299 = vpop.permute.xlu0 %2298
        %2300 = vset.pattern.permute.xlu0 0
        %2301 = vperm.xlu0 %2300, %v1400
        %v2302 = vpop.permute.xlu0 %2301
        %2303 = vset.pattern.permute.xlu0 0
        %2304 = vperm.xlu0 %2303, %v1403
        %v2305 = vpop.permute.xlu0 %2304
        %2306 = vset.pattern.permute.xlu0 0
        %2307 = vperm.xlu0 %2306, %v1406
        %v2308 = vpop.permute.xlu0 %2307
        %2309 = vset.pattern.permute.xlu0 0
        %2310 = vperm.xlu0 %2309, %v1409
        %v2311 = vpop.permute.xlu0 %2310
        %2312 = vset.pattern.permute.xlu0 0
        %2313 = vperm.xlu0 %2312, %v1412
        %v2314 = vpop.permute.xlu0 %2313
        %2315 = vset.pattern.permute.xlu0 0
        %2316 = vperm.xlu0 %2315, %v1415
        %v2317 = vpop.permute.xlu0 %2316
        %2318 = vset.pattern.permute.xlu0 0
        %2319 = vperm.xlu0 %2318, %v1418
        %v2320 = vpop.permute.xlu0 %2319
        %2321 = vset.pattern.permute.xlu0 0
        %2322 = vperm.xlu0 %2321, %v1421
        %v2323 = vpop.permute.xlu0 %2322
        %2324 = vset.pattern.permute.xlu0 0
        %2325 = vperm.xlu0 %2324, %v1424
        %v2326 = vpop.permute.xlu0 %2325
        %2327 = vset.pattern.permute.xlu0 0
        %2328 = vperm.xlu0 %2327, %v1427
        %v2329 = vpop.permute.xlu0 %2328
        %2330 = vset.pattern.permute.xlu0 0
        %2331 = vperm.xlu0 %2330, %v1430
        %v2332 = vpop.permute.xlu0 %2331
        %2333 = vset.pattern.permute.xlu0 0
        %2334 = vperm.xlu0 %2333, %v1433
        %v2335 = vpop.permute.xlu0 %2334
        %2336 = vset.pattern.permute.xlu0 0
        %2337 = vperm.xlu0 %2336, %v1436
        %v2338 = vpop.permute.xlu0 %2337
        %2339 = vset.pattern.permute.xlu0 0
        %2340 = vperm.xlu0 %2339, %v1439
        %v2341 = vpop.permute.xlu0 %2340
        %2342 = vset.pattern.permute.xlu0 0
        %2343 = vperm.xlu0 %2342, %v1442
        %v2344 = vpop.permute.xlu0 %2343
        %2345 = vset.pattern.permute.xlu0 0
        %2346 = vperm.xlu0 %2345, %v1445
        %v2347 = vpop.permute.xlu0 %2346
        %2348 = vset.pattern.permute.xlu0 0
        %2349 = vperm.xlu0 %2348, %v1448
        %v2350 = vpop.permute.xlu0 %2349
        %2351 = vset.pattern.permute.xlu0 0
        %2352 = vperm.xlu0 %2351, %v1451
        %v2353 = vpop.permute.xlu0 %2352
        %2354 = vset.pattern.permute.xlu0 0
        %2355 = vperm.xlu0 %2354, %v1454
        %v2356 = vpop.permute.xlu0 %2355
        %2357 = vset.pattern.permute.xlu0 0
        %2358 = vperm.xlu0 %2357, %v1457
        %v2359 = vpop.permute.xlu0 %2358
        %2360 = vset.pattern.permute.xlu0 0
        %2361 = vperm.xlu0 %2360, %v1460
        %v2362 = vpop.permute.xlu0 %2361
        %2363 = vset.pattern.permute.xlu0 0
        %2364 = vperm.xlu0 %2363, %v1463
        %v2365 = vpop.permute.xlu0 %2364
        %2366 = vset.pattern.permute.xlu0 0
        %2367 = vperm.xlu0 %2366, %v1466
        %v2368 = vpop.permute.xlu0 %2367
        %2369 = vset.pattern.permute.xlu0 0
        %2370 = vperm.xlu0 %2369, %v1469
        %v2371 = vpop.permute.xlu0 %2370
        %2372 = vset.pattern.permute.xlu0 0
        %2373 = vperm.xlu0 %2372, %v1472
        %v2374 = vpop.permute.xlu0 %2373
        %2375 = vset.pattern.permute.xlu0 0
        %2376 = vperm.xlu0 %2375, %v1475
        %v2377 = vpop.permute.xlu0 %2376
        %2378 = vset.pattern.permute.xlu0 0
        %2379 = vperm.xlu0 %2378, %v1478
        %v2380 = vpop.permute.xlu0 %2379
        %2381 = vset.pattern.permute.xlu0 0
        %2382 = vperm.xlu0 %2381, %v1481
        %v2383 = vpop.permute.xlu0 %2382
        %2384 = vset.pattern.permute.xlu0 0
        %2385 = vperm.xlu0 %2384, %v1484
        %v2386 = vpop.permute.xlu0 %2385
        %2387 = vset.pattern.permute.xlu0 0
        %2388 = vperm.xlu0 %2387, %v1487
        %v2389 = vpop.permute.xlu0 %2388
        %2390 = vset.pattern.permute.xlu0 0
        %2391 = vperm.xlu0 %2390, %v1490
        %v2392 = vpop.permute.xlu0 %2391
        %2393 = vset.pattern.permute.xlu0 0
        %2394 = vperm.xlu0 %2393, %v1493
        %v2395 = vpop.permute.xlu0 %2394
        %2396 = vset.pattern.permute.xlu0 0
        %2397 = vperm.xlu0 %2396, %v1496
        %v2398 = vpop.permute.xlu0 %2397
        %2399 = vset.pattern.permute.xlu0 0
        %2400 = vperm.xlu0 %2399, %v1499
        %v2401 = vpop.permute.xlu0 %2400
        %2402 = vset.pattern.permute.xlu0 0
        %2403 = vperm.xlu0 %2402, %v1502
        %v2404 = vpop.permute.xlu0 %2403
        %2405 = vset.pattern.permute.xlu0 0
        %2406 = vperm.xlu0 %2405, %v1505
        %v2407 = vpop.permute.xlu0 %2406
        %2408 = vset.pattern.permute.xlu0 0
        %2409 = vperm.xlu0 %2408, %v1508
        %v2410 = vpop.permute.xlu0 %2409
        %2411 = vset.pattern.permute.xlu0 0
        %2412 = vperm.xlu0 %2411, %v1511
        %v2413 = vpop.permute.xlu0 %2412
        %2414 = vset.pattern.permute.xlu0 0
        %2415 = vperm.xlu0 %2414, %v1514
        %v2416 = vpop.permute.xlu0 %2415
        %2417 = vset.pattern.permute.xlu0 0
        %2418 = vperm.xlu0 %2417, %v1517
        %v2419 = vpop.permute.xlu0 %2418
        %2420 = vset.pattern.permute.xlu0 0
        %2421 = vperm.xlu0 %2420, %v1520
        %v2422 = vpop.permute.xlu0 %2421
        %2423 = vset.pattern.permute.xlu0 0
        %2424 = vperm.xlu0 %2423, %v1523
        %v2425 = vpop.permute.xlu0 %2424
        %2426 = vset.pattern.permute.xlu0 0
        %2427 = vperm.xlu0 %2426, %v1526
        %v2428 = vpop.permute.xlu0 %2427
        %2429 = vset.pattern.permute.xlu0 0
        %2430 = vperm.xlu0 %2429, %v1529
        %v2431 = vpop.permute.xlu0 %2430
        %2432 = vset.pattern.permute.xlu0 0
        %2433 = vperm.xlu0 %2432, %v1532
        %v2434 = vpop.permute.xlu0 %2433
        %2435 = vset.pattern.permute.xlu0 0
        %2436 = vperm.xlu0 %2435, %v1535
        %v2437 = vpop.permute.xlu0 %2436
        %2438 = vset.pattern.permute.xlu0 0
        %2439 = vperm.xlu0 %2438, %v1538
        %v2440 = vpop.permute.xlu0 %2439
        %2441 = vset.pattern.permute.xlu0 0
        %2442 = vperm.xlu0 %2441, %v1541
        %v2443 = vpop.permute.xlu0 %2442
        %2444 = vset.pattern.permute.xlu0 0
        %2445 = vperm.xlu0 %2444, %v1544
        %v2446 = vpop.permute.xlu0 %2445
        %2447 = vset.pattern.permute.xlu0 0
        %2448 = vperm.xlu0 %2447, %v1547
        %v2449 = vpop.permute.xlu0 %2448
        %2450 = vset.pattern.permute.xlu0 0
        %2451 = vperm.xlu0 %2450, %v1550
        %v2452 = vpop.permute.xlu0 %2451
        %2453 = vset.pattern.permute.xlu0 0
        %2454 = vperm.xlu0 %2453, %v1553
        %v2455 = vpop.permute.xlu0 %2454
        %2456 = vset.pattern.permute.xlu0 0
        %2457 = vperm.xlu0 %2456, %v1556
        %v2458 = vpop.permute.xlu0 %2457
        %2459 = vset.pattern.permute.xlu0 0
        %2460 = vperm.xlu0 %2459, %v1559
        %v2461 = vpop.permute.xlu0 %2460
        %2462 = vset.pattern.permute.xlu0 0
        %2463 = vperm.xlu0 %2462, %v1562
        %v2464 = vpop.permute.xlu0 %2463
        %2465 = vset.pattern.permute.xlu0 0
        %2466 = vperm.xlu0 %2465, %v1565
        %v2467 = vpop.permute.xlu0 %2466
        %2468 = vset.pattern.permute.xlu0 0
        %2469 = vperm.xlu0 %2468, %v1568
        %v2470 = vpop.permute.xlu0 %2469
        %2471 = vset.pattern.permute.xlu0 0
        %2472 = vperm.xlu0 %2471, %v1571
        %v2473 = vpop.permute.xlu0 %2472
        %2474 = vset.pattern.permute.xlu0 0
        %2475 = vperm.xlu0 %2474, %v1574
        %v2476 = vpop.permute.xlu0 %2475
        %2477 = vset.pattern.permute.xlu0 0
        %2478 = vperm.xlu0 %2477, %v1577
        %v2479 = vpop.permute.xlu0 %2478
        %2480 = vset.pattern.permute.xlu0 0
        %2481 = vperm.xlu0 %2480, %v1580
        %v2482 = vpop.permute.xlu0 %2481
        %2483 = vset.pattern.permute.xlu0 0
        %2484 = vperm.xlu0 %2483, %v1583
        %v2485 = vpop.permute.xlu0 %2484
        %2486 = vset.pattern.permute.xlu0 0
        %2487 = vperm.xlu0 %2486, %v1586
        %v2488 = vpop.permute.xlu0 %2487
        %2489 = vset.pattern.permute.xlu0 0
        %2490 = vperm.xlu0 %2489, %v1589
        %v2491 = vpop.permute.xlu0 %2490
        %2492 = vset.pattern.permute.xlu0 0
        %2493 = vperm.xlu0 %2492, %v1592
        %v2494 = vpop.permute.xlu0 %2493
        %2495 = vset.pattern.permute.xlu0 0
        %2496 = vperm.xlu0 %2495, %v1595
        %v2497 = vpop.permute.xlu0 %2496
        %2498 = vset.pattern.permute.xlu0 0
        %2499 = vperm.xlu0 %2498, %v1598
        %v2500 = vpop.permute.xlu0 %2499
        %2501 = vset.pattern.permute.xlu0 0
        %2502 = vperm.xlu0 %2501, %v1601
        %v2503 = vpop.permute.xlu0 %2502
        %2504 = vset.pattern.permute.xlu0 0
        %2505 = vperm.xlu0 %2504, %v1604
        %v2506 = vpop.permute.xlu0 %2505
        %2507 = vset.pattern.permute.xlu0 0
        %2508 = vperm.xlu0 %2507, %v1607
        %v2509 = vpop.permute.xlu0 %2508
        %2510 = vset.pattern.permute.xlu0 0
        %2511 = vperm.xlu0 %2510, %v1610
        %v2512 = vpop.permute.xlu0 %2511
        %2513 = vset.pattern.permute.xlu0 0
        %2514 = vperm.xlu0 %2513, %v1613
        %v2515 = vpop.permute.xlu0 %2514
        %2516 = vset.pattern.permute.xlu0 0
        %2517 = vperm.xlu0 %2516, %v1616
        %v2518 = vpop.permute.xlu0 %2517
        %2519 = vset.pattern.permute.xlu0 0
        %2520 = vperm.xlu0 %2519, %v1619
        %v2521 = vpop.permute.xlu0 %2520
        %2522 = vset.pattern.permute.xlu0 0
        %2523 = vperm.xlu0 %2522, %v1622
        %v2524 = vpop.permute.xlu0 %2523
        %2525 = vset.pattern.permute.xlu0 0
        %2526 = vperm.xlu0 %2525, %v1625
        %v2527 = vpop.permute.xlu0 %2526
        %2528 = vset.pattern.permute.xlu0 0
        %2529 = vperm.xlu0 %2528, %v1628
        %v2530 = vpop.permute.xlu0 %2529
        %2531 = vset.pattern.permute.xlu0 0
        %2532 = vperm.xlu0 %2531, %v1631
        %v2533 = vpop.permute.xlu0 %2532
        %2534 = vset.pattern.permute.xlu0 0
        %2535 = vperm.xlu0 %2534, %v1634
        %v2536 = vpop.permute.xlu0 %2535
        %2537 = vset.pattern.permute.xlu0 0
        %2538 = vperm.xlu0 %2537, %v1637
        %v2539 = vpop.permute.xlu0 %2538
        %2540 = vset.pattern.permute.xlu0 0
        %2541 = vperm.xlu0 %2540, %v1640
        %v2542 = vpop.permute.xlu0 %2541
        %2543 = vset.pattern.permute.xlu0 0
        %2544 = vperm.xlu0 %2543, %v1643
        %v2545 = vpop.permute.xlu0 %2544
        %2546 = vset.pattern.permute.xlu0 0
        %2547 = vperm.xlu0 %2546, %v1646
        %v2548 = vpop.permute.xlu0 %2547
        %2549 = vset.pattern.permute.xlu0 0
        %2550 = vperm.xlu0 %2549, %v1649
        %v2551 = vpop.permute.xlu0 %2550
        %2552 = vset.pattern.permute.xlu0 0
        %2553 = vperm.xlu0 %2552, %v1652
        %v2554 = vpop.permute.xlu0 %2553
        %2555 = vset.pattern.permute.xlu0 0
        %2556 = vperm.xlu0 %2555, %v1655
        %v2557 = vpop.permute.xlu0 %2556
        %2558 = vset.pattern.permute.xlu0 0
        %2559 = vperm.xlu0 %2558, %v1658
        %v2560 = vpop.permute.xlu0 %2559
        %2561 = vset.pattern.permute.xlu0 0
        %2562 = vperm.xlu0 %2561, %v1661
        %v2563 = vpop.permute.xlu0 %2562
        %2564 = vset.pattern.permute.xlu0 0
        %2565 = vperm.xlu0 %2564, %v1664
        %v2566 = vpop.permute.xlu0 %2565
        %2567 = vset.pattern.permute.xlu0 0
        %2568 = vperm.xlu0 %2567, %v1667
        %v2569 = vpop.permute.xlu0 %2568
        %2570 = vset.pattern.permute.xlu0 0
        %2571 = vperm.xlu0 %2570, %v1670
        %v2572 = vpop.permute.xlu0 %2571
        %2573 = vset.pattern.permute.xlu0 0
        %2574 = vperm.xlu0 %2573, %v1673
        %v2575 = vpop.permute.xlu0 %2574
        %2576 = vset.pattern.permute.xlu0 0
        %2577 = vperm.xlu0 %2576, %v1676
        %v2578 = vpop.permute.xlu0 %2577
        %2579 = vset.pattern.permute.xlu0 0
        %2580 = vperm.xlu0 %2579, %v1679
        %v2581 = vpop.permute.xlu0 %2580
        %2582 = vset.pattern.permute.xlu0 0
        %2583 = vperm.xlu0 %2582, %v1682
        %v2584 = vpop.permute.xlu0 %2583
        %2585 = vset.pattern.permute.xlu0 0
        %2586 = vperm.xlu0 %2585, %v1685
        %v2587 = vpop.permute.xlu0 %2586
        %v2588 = vadd.s32 %v1816, 4294967280
        %v2589 = vperm.slane %v2206, %v2588
        %v2590 = vadd.s32 %v1816, 4294967272
        %v2591 = vperm.slane %v2209, %v2590
        %vm2592 = vcmask 261312
        %v2593 = vsel %vm2592, %v2591, %v2589
        %v2594 = vperm.slane %v2212, %v2588
        %v2595 = vperm.slane %v2215, %v2590
        %v2596 = vsel %vm2592, %v2595, %v2594
        %v2597 = vperm.slane %v2218, %v2588
        %v2598 = vperm.slane %v2221, %v2590
        %v2599 = vsel %vm2592, %v2598, %v2597
        %v2600 = vperm.slane %v2224, %v2588
        %v2601 = vperm.slane %v2227, %v2590
        %v2602 = vsel %vm2592, %v2601, %v2600
        %v2603 = vperm.slane %v2230, %v2588
        %v2604 = vperm.slane %v2233, %v2590
        %v2605 = vsel %vm2592, %v2604, %v2603
        %v2606 = vperm.slane %v2236, %v2588
        %v2607 = vperm.slane %v2239, %v2590
        %v2608 = vsel %vm2592, %v2607, %v2606
        %v2609 = vperm.slane %v2242, %v2588
        %v2610 = vperm.slane %v2245, %v2590
        %v2611 = vsel %vm2592, %v2610, %v2609
        %v2612 = vperm.slane %v2248, %v2588
        %v2613 = vperm.slane %v2251, %v2590
        %v2614 = vsel %vm2592, %v2613, %v2612
        %v2615 = vperm.slane %v2254, %v2588
        %v2616 = vperm.slane %v2257, %v2590
        %v2617 = vsel %vm2592, %v2616, %v2615
        %v2618 = vperm.slane %v2260, %v2588
        %v2619 = vperm.slane %v2263, %v2590
        %v2620 = vsel %vm2592, %v2619, %v2618
        %v2621 = vperm.slane %v2266, %v2588
        %v2622 = vperm.slane %v2269, %v2590
        %v2623 = vsel %vm2592, %v2622, %v2621
        %v2624 = vperm.slane %v2272, %v2588
        %v2625 = vperm.slane %v2275, %v2590
        %v2626 = vsel %vm2592, %v2625, %v2624
        %v2627 = vperm.slane %v2278, %v2588
        %v2628 = vperm.slane %v2281, %v2590
        %v2629 = vsel %vm2592, %v2628, %v2627
        %v2630 = vperm.slane %v2284, %v2588
        %v2631 = vperm.slane %v2287, %v2590
        %v2632 = vsel %vm2592, %v2631, %v2630
        %v2633 = vperm.slane %v2290, %v2588
        %v2634 = vperm.slane %v2293, %v2590
        %v2635 = vsel %vm2592, %v2634, %v2633
        %v2636 = vperm.slane %v2296, %v2588
        %v2637 = vperm.slane %v2299, %v2590
        %v2638 = vsel %vm2592, %v2637, %v2636
        %v2639 = vperm.slane %v2302, %v2588
        %v2640 = vperm.slane %v2305, %v2590
        %v2641 = vsel %vm2592, %v2640, %v2639
        %v2642 = vperm.slane %v2308, %v2588
        %v2643 = vperm.slane %v2311, %v2590
        %v2644 = vsel %vm2592, %v2643, %v2642
        %v2645 = vperm.slane %v2314, %v2588
        %v2646 = vperm.slane %v2317, %v2590
        %v2647 = vsel %vm2592, %v2646, %v2645
        %v2648 = vperm.slane %v2320, %v2588
        %v2649 = vperm.slane %v2323, %v2590
        %v2650 = vsel %vm2592, %v2649, %v2648
        %v2651 = vperm.slane %v2326, %v2588
        %v2652 = vperm.slane %v2329, %v2590
        %v2653 = vsel %vm2592, %v2652, %v2651
        %v2654 = vperm.slane %v2332, %v2588
        %v2655 = vperm.slane %v2335, %v2590
        %v2656 = vsel %vm2592, %v2655, %v2654
        %v2657 = vperm.slane %v2338, %v2588
        %v2658 = vperm.slane %v2341, %v2590
        %v2659 = vsel %vm2592, %v2658, %v2657
        %v2660 = vperm.slane %v2344, %v2588
        %v2661 = vperm.slane %v2347, %v2590
        %v2662 = vsel %vm2592, %v2661, %v2660
        %v2663 = vperm.slane %v2350, %v2588
        %v2664 = vperm.slane %v2353, %v2590
        %v2665 = vsel %vm2592, %v2664, %v2663
        %v2666 = vperm.slane %v2356, %v2588
        %v2667 = vperm.slane %v2359, %v2590
        %v2668 = vsel %vm2592, %v2667, %v2666
        %v2669 = vperm.slane %v2362, %v2588
        %v2670 = vperm.slane %v2365, %v2590
        %v2671 = vsel %vm2592, %v2670, %v2669
        %v2672 = vperm.slane %v2368, %v2588
        %v2673 = vperm.slane %v2371, %v2590
        %v2674 = vsel %vm2592, %v2673, %v2672
        %v2675 = vperm.slane %v2374, %v2588
        %v2676 = vperm.slane %v2377, %v2590
        %v2677 = vsel %vm2592, %v2676, %v2675
        %v2678 = vperm.slane %v2380, %v2588
        %v2679 = vperm.slane %v2383, %v2590
        %v2680 = vsel %vm2592, %v2679, %v2678
        %v2681 = vperm.slane %v2386, %v2588
        %v2682 = vperm.slane %v2389, %v2590
        %v2683 = vsel %vm2592, %v2682, %v2681
        %v2684 = vperm.slane %v2392, %v2588
        %v2685 = vperm.slane %v2395, %v2590
        %v2686 = vsel %vm2592, %v2685, %v2684
        %v2687 = vperm.slane %v2398, %v2588
        %v2688 = vperm.slane %v2401, %v2590
        %v2689 = vsel %vm2592, %v2688, %v2687
        %v2690 = vperm.slane %v2404, %v2588
        %v2691 = vperm.slane %v2407, %v2590
        %v2692 = vsel %vm2592, %v2691, %v2690
        %v2693 = vperm.slane %v2410, %v2588
        %v2694 = vperm.slane %v2413, %v2590
        %v2695 = vsel %vm2592, %v2694, %v2693
        %v2696 = vperm.slane %v2416, %v2588
        %v2697 = vperm.slane %v2419, %v2590
        %v2698 = vsel %vm2592, %v2697, %v2696
        %v2699 = vperm.slane %v2422, %v2588
        %v2700 = vperm.slane %v2425, %v2590
        %v2701 = vsel %vm2592, %v2700, %v2699
        %v2702 = vperm.slane %v2428, %v2588
        %v2703 = vperm.slane %v2431, %v2590
        %v2704 = vsel %vm2592, %v2703, %v2702
        %v2705 = vperm.slane %v2434, %v2588
        %v2706 = vperm.slane %v2437, %v2590
        %v2707 = vsel %vm2592, %v2706, %v2705
        %v2708 = vperm.slane %v2440, %v2588
        %v2709 = vperm.slane %v2443, %v2590
        %v2710 = vsel %vm2592, %v2709, %v2708
        %v2711 = vperm.slane %v2446, %v2588
        %v2712 = vperm.slane %v2449, %v2590
        %v2713 = vsel %vm2592, %v2712, %v2711
        %v2714 = vperm.slane %v2452, %v2588
        %v2715 = vperm.slane %v2455, %v2590
        %v2716 = vsel %vm2592, %v2715, %v2714
        %v2717 = vperm.slane %v2458, %v2588
        %v2718 = vperm.slane %v2461, %v2590
        %v2719 = vsel %vm2592, %v2718, %v2717
        %v2720 = vperm.slane %v2464, %v2588
        %v2721 = vperm.slane %v2467, %v2590
        %v2722 = vsel %vm2592, %v2721, %v2720
        %v2723 = vperm.slane %v2470, %v2588
        %v2724 = vperm.slane %v2473, %v2590
        %v2725 = vsel %vm2592, %v2724, %v2723
        %v2726 = vperm.slane %v2476, %v2588
        %v2727 = vperm.slane %v2479, %v2590
        %v2728 = vsel %vm2592, %v2727, %v2726
        %v2729 = vperm.slane %v2482, %v2588
        %v2730 = vperm.slane %v2485, %v2590
        %v2731 = vsel %vm2592, %v2730, %v2729
        %v2732 = vperm.slane %v2488, %v2588
        %v2733 = vperm.slane %v2491, %v2590
        %v2734 = vsel %vm2592, %v2733, %v2732
        %v2735 = vperm.slane %v2494, %v2588
        %v2736 = vperm.slane %v2497, %v2590
        %v2737 = vsel %vm2592, %v2736, %v2735
        %v2738 = vperm.slane %v2500, %v2588
        %v2739 = vperm.slane %v2503, %v2590
        %v2740 = vsel %vm2592, %v2739, %v2738
        %v2741 = vperm.slane %v2506, %v2588
        %v2742 = vperm.slane %v2509, %v2590
        %v2743 = vsel %vm2592, %v2742, %v2741
        %v2744 = vperm.slane %v2512, %v2588
        %v2745 = vperm.slane %v2515, %v2590
        %v2746 = vsel %vm2592, %v2745, %v2744
        %v2747 = vperm.slane %v2518, %v2588
        %v2748 = vperm.slane %v2521, %v2590
        %v2749 = vsel %vm2592, %v2748, %v2747
        %v2750 = vperm.slane %v2524, %v2588
        %v2751 = vperm.slane %v2527, %v2590
        %v2752 = vsel %vm2592, %v2751, %v2750
        %v2753 = vperm.slane %v2530, %v2588
        %v2754 = vperm.slane %v2533, %v2590
        %v2755 = vsel %vm2592, %v2754, %v2753
        %v2756 = vperm.slane %v2536, %v2588
        %v2757 = vperm.slane %v2539, %v2590
        %v2758 = vsel %vm2592, %v2757, %v2756
        %v2759 = vperm.slane %v2542, %v2588
        %v2760 = vperm.slane %v2545, %v2590
        %v2761 = vsel %vm2592, %v2760, %v2759
        %v2762 = vperm.slane %v2548, %v2588
        %v2763 = vperm.slane %v2551, %v2590
        %v2764 = vsel %vm2592, %v2763, %v2762
        %v2765 = vperm.slane %v2554, %v2588
        %v2766 = vperm.slane %v2557, %v2590
        %v2767 = vsel %vm2592, %v2766, %v2765
        %v2768 = vperm.slane %v2560, %v2588
        %v2769 = vperm.slane %v2563, %v2590
        %v2770 = vsel %vm2592, %v2769, %v2768
        %v2771 = vperm.slane %v2566, %v2588
        %v2772 = vperm.slane %v2569, %v2590
        %v2773 = vsel %vm2592, %v2772, %v2771
        %v2774 = vperm.slane %v2572, %v2588
        %v2775 = vperm.slane %v2575, %v2590
        %v2776 = vsel %vm2592, %v2775, %v2774
        %v2777 = vperm.slane %v2578, %v2588
        %v2778 = vperm.slane %v2581, %v2590
        %v2779 = vsel %vm2592, %v2778, %v2777
        %v2780 = vperm.slane %v2584, %v2588
        %v2781 = vperm.slane %v2587, %v2590
        %v2782 = vsel %vm2592, %v2781, %v2780
        %v2783 = vsel %vm762, %v2596, %v2593
        %v2784 = vsel %vm764, %v2599, %v2783
        %v2785 = vsel %vm766, %v2602, %v2784
        %v2786 = vsel %vm2014, %v2605, %v2785
        %v2787 = vsel %vm773, %v2608, %v2786
        %v2788 = vsel %vm775, %v2611, %v2787
        %v2789 = vsel %vm777, %v2614, %v2788
        %v2790 = vsel %vm762, %v2620, %v2617
        %v2791 = vsel %vm764, %v2623, %v2790
        %v2792 = vsel %vm766, %v2626, %v2791
        %v2793 = vsel %vm2014, %v2629, %v2792
        %v2794 = vsel %vm773, %v2632, %v2793
        %v2795 = vsel %vm775, %v2635, %v2794
        %v2796 = vsel %vm777, %v2638, %v2795
        %v2797 = vsel %vm762, %v2644, %v2641
        %v2798 = vsel %vm764, %v2647, %v2797
        %v2799 = vsel %vm766, %v2650, %v2798
        %v2800 = vsel %vm2014, %v2653, %v2799
        %v2801 = vsel %vm773, %v2656, %v2800
        %v2802 = vsel %vm775, %v2659, %v2801
        %v2803 = vsel %vm777, %v2662, %v2802
        %v2804 = vsel %vm762, %v2668, %v2665
        %v2805 = vsel %vm764, %v2671, %v2804
        %v2806 = vsel %vm766, %v2674, %v2805
        %v2807 = vsel %vm2014, %v2677, %v2806
        %v2808 = vsel %vm773, %v2680, %v2807
        %v2809 = vsel %vm775, %v2683, %v2808
        %v2810 = vsel %vm777, %v2686, %v2809
        %v2811 = vsel %vm762, %v2692, %v2689
        %v2812 = vsel %vm764, %v2695, %v2811
        %v2813 = vsel %vm766, %v2698, %v2812
        %v2814 = vsel %vm2014, %v2701, %v2813
        %v2815 = vsel %vm773, %v2704, %v2814
        %v2816 = vsel %vm775, %v2707, %v2815
        %v2817 = vsel %vm777, %v2710, %v2816
        %v2818 = vsel %vm762, %v2716, %v2713
        %v2819 = vsel %vm764, %v2719, %v2818
        %v2820 = vsel %vm766, %v2722, %v2819
        %v2821 = vsel %vm2014, %v2725, %v2820
        %v2822 = vsel %vm773, %v2728, %v2821
        %v2823 = vsel %vm775, %v2731, %v2822
        %v2824 = vsel %vm777, %v2734, %v2823
        %v2825 = vsel %vm762, %v2740, %v2737
        %v2826 = vsel %vm764, %v2743, %v2825
        %v2827 = vsel %vm766, %v2746, %v2826
        %v2828 = vsel %vm2014, %v2749, %v2827
        %v2829 = vsel %vm773, %v2752, %v2828
        %v2830 = vsel %vm775, %v2755, %v2829
        %v2831 = vsel %vm777, %v2758, %v2830
        %v2832 = vsel %vm762, %v2764, %v2761
        %v2833 = vsel %vm764, %v2767, %v2832
        %v2834 = vsel %vm766, %v2770, %v2833
        %v2835 = vsel %vm2014, %v2773, %v2834
        %v2836 = vsel %vm773, %v2776, %v2835
        %v2837 = vsel %vm775, %v2779, %v2836
        %v2838 = vsel %vm777, %v2782, %v2837
        %vm2847 = vcmask 130048
        %v2848 = vsel %vm2847, %v2018, %v2789
        %v2849 = vsel %vm2847, %v2025, %v2796
        %v2850 = vsel %vm2847, %v2032, %v2803
        %v2851 = vsel %vm2847, %v2039, %v2810
        %v2852 = vsel %vm2847, %v2046, %v2817
        %v2853 = vsel %vm2847, %v2053, %v2824
        %v2854 = vsel %vm2847, %v2060, %v2831
        %v2855 = vsel %vm2847, %v2067, %v2838
        %vm2864 = vcmask 1042432
        %v2865 = vrot.slane %v2848, 5
        %v2866 = vrot.slane %v2849, 5
        %v2867 = vsel %vm2864, %v2865, %v2866
        %v2868 = vrot.slane %v2850, 5
        %v2869 = vrot.slane %v2851, 5
        %v2870 = vsel %vm2864, %v2868, %v2869
        %v2871 = vrot.slane %v2852, 5
        %v2872 = vrot.slane %v2853, 5
        %v2873 = vsel %vm2864, %v2871, %v2872
        %v2874 = vrot.slane %v2854, 5
        %v2875 = vrot.slane %v2855, 5
        %v2876 = vsel %vm2864, %v2874, %v2875
        %v2885 = vsel %vm2864, 0.0, %v2865
        %v2886 = vsel %vm2864, 0.0, %v2868
        %v2887 = vsel %vm2864, 0.0, %v2871
        %v2888 = vsel %vm2864, 0.0, %v2874
        %v2889 = vsel %vm2864, %v2866, 0.0
        %v2890 = vsel %vm2864, %v2869, 0.0
        %v2891 = vsel %vm2864, %v2872, 0.0
        %v2892 = vsel %vm2864, %v2875, 0.0
        %v2893 = vld [vmem:[%s6] sm:$0xff]
        %v2894 = vld [vmem:[%s6 + $0x8] sm:$0xff]
        %v2895 = vld [vmem:[%s6 + $0x10] sm:$0xff]
        %v2896 = vld [vmem:[%s6 + $0x18] sm:$0xff]
        %vm2905 = vcmask 1046528
        %v2906 = vrot.slane %v2885, 1
        %v2907 = vrot.slane %v2867, 1
        %v2908 = vsel %vm2905, %v2906, %v2907
        %v2909 = vrot.slane %v2889, 1
        %v2910 = vsel %vm2905, %v2907, %v2909
        %v2911 = vrot.slane %v2886, 1
        %v2912 = vrot.slane %v2870, 1
        %v2913 = vsel %vm2905, %v2911, %v2912
        %v2914 = vrot.slane %v2890, 1
        %v2915 = vsel %vm2905, %v2912, %v2914
        %v2916 = vrot.slane %v2887, 1
        %v2917 = vrot.slane %v2873, 1
        %v2918 = vsel %vm2905, %v2916, %v2917
        %v2919 = vrot.slane %v2891, 1
        %v2920 = vsel %vm2905, %v2917, %v2919
        %v2921 = vrot.slane %v2888, 1
        %v2922 = vrot.slane %v2876, 1
        %v2923 = vsel %vm2905, %v2921, %v2922
        %v2924 = vrot.slane %v2892, 1
        %v2925 = vsel %vm2905, %v2922, %v2924
        %s2926 = scalar_lea.vmem %s6, 32
        %v2927 = vld [vmem:[%s2926] sm:$0xff]
        %v2928 = vld [vmem:[%s2926 + $0x8] sm:$0xff]
        %v2929 = vld [vmem:[%s2926 + $0x10] sm:$0xff]
        %v2930 = vld [vmem:[%s2926 + $0x18] sm:$0xff]
        %vm2931 = vcmask 261120
        %v2932 = vsel %vm2931, %v2908, 0
        %v2934 = vsel %vm2931, %v2910, 0
        %v2936 = vsel %vm2931, %v2913, 0
        %v2938 = vsel %vm2931, %v2915, 0
        %v2940 = vsel %vm2931, %v2918, 0
        %v2942 = vsel %vm2931, %v2920, 0
        %v2944 = vsel %vm2931, %v2923, 0
        %v2946 = vsel %vm2931, %v2925, 0
        %2948 = vmatpush.msra.mxu0 0.0
        %2949 = vmatpush.msra.mxu0 0.0
        %2950 = vmatpush.msra.mxu0 0.0
        %2951 = vmatpush.msra.mxu0 0.0
        %2952 = vmatpush.msra.mxu0 0.0
        %2953 = vmatpush.msra.mxu0 0.0
        %2954 = vmatpush.msra.mxu0 0.0
        %2955 = vmatpush.msra.mxu0 0.0
        %2956 = vmatpush.msra.mxu0 0.0
        %2957 = vmatpush.msra.mxu0 0.0
        %2958 = vmatpush.msra.mxu0 0.0
        %2959 = vmatpush.msra.mxu0 0.0
        %2960 = vmatpush.msra.mxu0 %v2930
        %2961 = vmatpush.msra.mxu0 %v2929
        %2962 = vmatpush.msra.mxu0 %v2928
        %2963 = vmatpush.msra.mxu0 %v2927
        %2964 = vmatmul.f32.gmra.mxu0 %v2932
        %v2965 = vpop.f32.mrf.mxu0
        %v2966 = vadd.f32 0.0, %v2965
        %2967 = vmatmul.f32.gmra.mxu0 %v2934
        %v2968 = vpop.f32.mrf.mxu0
        %v2969 = vadd.f32 0.0, %v2968
        %2970 = vmatmul.f32.gmra.mxu0 %v2936
        %v2971 = vpop.f32.mrf.mxu0
        %v2972 = vadd.f32 0.0, %v2971
        %2973 = vmatmul.f32.gmra.mxu0 %v2938
        %v2974 = vpop.f32.mrf.mxu0
        %v2975 = vadd.f32 0.0, %v2974
        %2976 = vmatmul.f32.gmra.mxu0 %v2940
        %v2977 = vpop.f32.mrf.mxu0
        %v2978 = vadd.f32 0.0, %v2977
        %2979 = vmatmul.f32.gmra.mxu0 %v2942
        %v2980 = vpop.f32.mrf.mxu0
        %v2981 = vadd.f32 0.0, %v2980
        %2982 = vmatmul.f32.gmra.mxu0 %v2944
        %v2983 = vpop.f32.mrf.mxu0
        %v2984 = vadd.f32 0.0, %v2983
        %2985 = vmatmul.f32.gmra.mxu0 %v2946
        %v2986 = vpop.f32.mrf.mxu0
        %v2987 = vadd.f32 0.0, %v2986
        %2988 = vdwg.mxu0
        %v2989 = vsel %vm2931, %v2885, 0
        %v2991 = vsel %vm2931, %v2867, 0
        %v2993 = vsel %vm2931, %v2886, 0
        %v2995 = vsel %vm2931, %v2870, 0
        %v2997 = vsel %vm2931, %v2887, 0
        %v2999 = vsel %vm2931, %v2873, 0
        %v3001 = vsel %vm2931, %v2888, 0
        %v3003 = vsel %vm2931, %v2876, 0
        %3005 = vmatpush.msra.mxu0 0.0
        %3006 = vmatpush.msra.mxu0 0.0
        %3007 = vmatpush.msra.mxu0 0.0
        %3008 = vmatpush.msra.mxu0 0.0
        %3009 = vmatpush.msra.mxu0 0.0
        %3010 = vmatpush.msra.mxu0 0.0
        %3011 = vmatpush.msra.mxu0 0.0
        %3012 = vmatpush.msra.mxu0 0.0
        %3013 = vmatpush.msra.mxu0 0.0
        %3014 = vmatpush.msra.mxu0 0.0
        %3015 = vmatpush.msra.mxu0 0.0
        %3016 = vmatpush.msra.mxu0 0.0
        %3017 = vmatpush.msra.mxu0 %v2896
        %3018 = vmatpush.msra.mxu0 %v2895
        %3019 = vmatpush.msra.mxu0 %v2894
        %3020 = vmatpush.msra.mxu0 %v2893
        %3021 = vmatmul.f32.gmra.mxu0 %v2989
        %v3022 = vpop.f32.mrf.mxu0
        %v3023 = vadd.f32 %v2966, %v3022
        %3024 = vmatmul.f32.gmra.mxu0 %v2991
        %v3025 = vpop.f32.mrf.mxu0
        %v3026 = vadd.f32 %v2969, %v3025
        %3027 = vmatmul.f32.gmra.mxu0 %v2993
        %v3028 = vpop.f32.mrf.mxu0
        %v3029 = vadd.f32 %v2972, %v3028
        %3030 = vmatmul.f32.gmra.mxu0 %v2995
        %v3031 = vpop.f32.mrf.mxu0
        %v3032 = vadd.f32 %v2975, %v3031
        %3033 = vmatmul.f32.gmra.mxu0 %v2997
        %v3034 = vpop.f32.mrf.mxu0
        %v3035 = vadd.f32 %v2978, %v3034
        %3036 = vmatmul.f32.gmra.mxu0 %v2999
        %v3037 = vpop.f32.mrf.mxu0
        %v3038 = vadd.f32 %v2981, %v3037
        %3039 = vmatmul.f32.gmra.mxu0 %v3001
        %v3040 = vpop.f32.mrf.mxu0
        %v3041 = vadd.f32 %v2984, %v3040
        %3042 = vmatmul.f32.gmra.mxu0 %v3003
        %v3043 = vpop.f32.mrf.mxu0
        %v3044 = vadd.f32 %v2987, %v3043
        %3045 = vdwg.mxu0
        %vm3046 = vcmask 1045504
        %v3047 = vrot.slane %v2885, 2
        %v3048 = vrot.slane %v2867, 2
        %v3049 = vsel %vm3046, %v3047, %v3048
        %v3050 = vrot.slane %v2889, 2
        %v3051 = vsel %vm3046, %v3048, %v3050
        %v3052 = vrot.slane %v2886, 2
        %v3053 = vrot.slane %v2870, 2
        %v3054 = vsel %vm3046, %v3052, %v3053
        %v3055 = vrot.slane %v2890, 2
        %v3056 = vsel %vm3046, %v3053, %v3055
        %v3057 = vrot.slane %v2887, 2
        %v3058 = vrot.slane %v2873, 2
        %v3059 = vsel %vm3046, %v3057, %v3058
        %v3060 = vrot.slane %v2891, 2
        %v3061 = vsel %vm3046, %v3058, %v3060
        %v3062 = vrot.slane %v2888, 2
        %v3063 = vrot.slane %v2876, 2
        %v3064 = vsel %vm3046, %v3062, %v3063
        %v3065 = vrot.slane %v2892, 2
        %v3066 = vsel %vm3046, %v3063, %v3065
        %s3067 = scalar_lea.vmem %s6, 64
        %v3068 = vld [vmem:[%s3067] sm:$0xff]
        %v3069 = vld [vmem:[%s3067 + $0x8] sm:$0xff]
        %v3070 = vld [vmem:[%s3067 + $0x10] sm:$0xff]
        %v3071 = vld [vmem:[%s3067 + $0x18] sm:$0xff]
        %v3072 = vsel %vm2931, %v3049, 0
        %v3074 = vsel %vm2931, %v3051, 0
        %v3076 = vsel %vm2931, %v3054, 0
        %v3078 = vsel %vm2931, %v3056, 0
        %v3080 = vsel %vm2931, %v3059, 0
        %v3082 = vsel %vm2931, %v3061, 0
        %v3084 = vsel %vm2931, %v3064, 0
        %v3086 = vsel %vm2931, %v3066, 0
        %3088 = vmatpush.msra.mxu0 0.0
        %3089 = vmatpush.msra.mxu0 0.0
        %3090 = vmatpush.msra.mxu0 0.0
        %3091 = vmatpush.msra.mxu0 0.0
        %3092 = vmatpush.msra.mxu0 0.0
        %3093 = vmatpush.msra.mxu0 0.0
        %3094 = vmatpush.msra.mxu0 0.0
        %3095 = vmatpush.msra.mxu0 0.0
        %3096 = vmatpush.msra.mxu0 0.0
        %3097 = vmatpush.msra.mxu0 0.0
        %3098 = vmatpush.msra.mxu0 0.0
        %3099 = vmatpush.msra.mxu0 0.0
        %3100 = vmatpush.msra.mxu0 %v3071
        %3101 = vmatpush.msra.mxu0 %v3070
        %3102 = vmatpush.msra.mxu0 %v3069
        %3103 = vmatpush.msra.mxu0 %v3068
        %3104 = vmatmul.f32.gmra.mxu0 %v3072
        %v3105 = vpop.f32.mrf.mxu0
        %v3106 = vadd.f32 0.0, %v3105
        %3107 = vmatmul.f32.gmra.mxu0 %v3074
        %v3108 = vpop.f32.mrf.mxu0
        %v3109 = vadd.f32 0.0, %v3108
        %3110 = vmatmul.f32.gmra.mxu0 %v3076
        %v3111 = vpop.f32.mrf.mxu0
        %v3112 = vadd.f32 0.0, %v3111
        %3113 = vmatmul.f32.gmra.mxu0 %v3078
        %v3114 = vpop.f32.mrf.mxu0
        %v3115 = vadd.f32 0.0, %v3114
        %3116 = vmatmul.f32.gmra.mxu0 %v3080
        %v3117 = vpop.f32.mrf.mxu0
        %v3118 = vadd.f32 0.0, %v3117
        %3119 = vmatmul.f32.gmra.mxu0 %v3082
        %v3120 = vpop.f32.mrf.mxu0
        %v3121 = vadd.f32 0.0, %v3120
        %3122 = vmatmul.f32.gmra.mxu0 %v3084
        %v3123 = vpop.f32.mrf.mxu0
        %v3124 = vadd.f32 0.0, %v3123
        %3125 = vmatmul.f32.gmra.mxu0 %v3086
        %v3126 = vpop.f32.mrf.mxu0
        %v3127 = vadd.f32 0.0, %v3126
        %3128 = vdwg.mxu0
        %v3129 = vadd.f32 %v3023, %v3106
        %v3130 = vadd.f32 %v3026, %v3109
        %v3131 = vadd.f32 %v3029, %v3112
        %v3132 = vadd.f32 %v3032, %v3115
        %v3133 = vadd.f32 %v3035, %v3118
        %v3134 = vadd.f32 %v3038, %v3121
        %v3135 = vadd.f32 %v3041, %v3124
        %v3136 = vadd.f32 %v3044, %v3127
        %vm3137 = vcmask 1044480
        %v3138 = vrot.slane %v2885, 3
        %v3139 = vrot.slane %v2867, 3
        %v3140 = vsel %vm3137, %v3138, %v3139
        %v3141 = vrot.slane %v2889, 3
        %v3142 = vsel %vm3137, %v3139, %v3141
        %v3143 = vrot.slane %v2886, 3
        %v3144 = vrot.slane %v2870, 3
        %v3145 = vsel %vm3137, %v3143, %v3144
        %v3146 = vrot.slane %v2890, 3
        %v3147 = vsel %vm3137, %v3144, %v3146
        %v3148 = vrot.slane %v2887, 3
        %v3149 = vrot.slane %v2873, 3
        %v3150 = vsel %vm3137, %v3148, %v3149
        %v3151 = vrot.slane %v2891, 3
        %v3152 = vsel %vm3137, %v3149, %v3151
        %v3153 = vrot.slane %v2888, 3
        %v3154 = vrot.slane %v2876, 3
        %v3155 = vsel %vm3137, %v3153, %v3154
        %v3156 = vrot.slane %v2892, 3
        %v3157 = vsel %vm3137, %v3154, %v3156
        %s3158 = scalar_lea.vmem %s6, 96
        %v3159 = vld [vmem:[%s3158] sm:$0xff]
        %v3160 = vld [vmem:[%s3158 + $0x8] sm:$0xff]
        %v3161 = vld [vmem:[%s3158 + $0x10] sm:$0xff]
        %v3162 = vld [vmem:[%s3158 + $0x18] sm:$0xff]
        %v3163 = vsel %vm2931, %v3140, 0
        %v3165 = vsel %vm2931, %v3142, 0
        %v3167 = vsel %vm2931, %v3145, 0
        %v3169 = vsel %vm2931, %v3147, 0
        %v3171 = vsel %vm2931, %v3150, 0
        %v3173 = vsel %vm2931, %v3152, 0
        %v3175 = vsel %vm2931, %v3155, 0
        %v3177 = vsel %vm2931, %v3157, 0
        %3179 = vmatpush.msra.mxu0 0.0
        %3180 = vmatpush.msra.mxu0 0.0
        %3181 = vmatpush.msra.mxu0 0.0
        %3182 = vmatpush.msra.mxu0 0.0
        %3183 = vmatpush.msra.mxu0 0.0
        %3184 = vmatpush.msra.mxu0 0.0
        %3185 = vmatpush.msra.mxu0 0.0
        %3186 = vmatpush.msra.mxu0 0.0
        %3187 = vmatpush.msra.mxu0 0.0
        %3188 = vmatpush.msra.mxu0 0.0
        %3189 = vmatpush.msra.mxu0 0.0
        %3190 = vmatpush.msra.mxu0 0.0
        %3191 = vmatpush.msra.mxu0 %v3162
        %3192 = vmatpush.msra.mxu0 %v3161
        %3193 = vmatpush.msra.mxu0 %v3160
        %3194 = vmatpush.msra.mxu0 %v3159
        %3195 = vmatmul.f32.gmra.mxu0 %v3163
        %v3196 = vpop.f32.mrf.mxu0
        %v3197 = vadd.f32 0.0, %v3196
        %3198 = vmatmul.f32.gmra.mxu0 %v3165
        %v3199 = vpop.f32.mrf.mxu0
        %v3200 = vadd.f32 0.0, %v3199
        %3201 = vmatmul.f32.gmra.mxu0 %v3167
        %v3202 = vpop.f32.mrf.mxu0
        %v3203 = vadd.f32 0.0, %v3202
        %3204 = vmatmul.f32.gmra.mxu0 %v3169
        %v3205 = vpop.f32.mrf.mxu0
        %v3206 = vadd.f32 0.0, %v3205
        %3207 = vmatmul.f32.gmra.mxu0 %v3171
        %v3208 = vpop.f32.mrf.mxu0
        %v3209 = vadd.f32 0.0, %v3208
        %3210 = vmatmul.f32.gmra.mxu0 %v3173
        %v3211 = vpop.f32.mrf.mxu0
        %v3212 = vadd.f32 0.0, %v3211
        %3213 = vmatmul.f32.gmra.mxu0 %v3175
        %v3214 = vpop.f32.mrf.mxu0
        %v3215 = vadd.f32 0.0, %v3214
        %3216 = vmatmul.f32.gmra.mxu0 %v3177
        %v3217 = vpop.f32.mrf.mxu0
        %v3218 = vadd.f32 0.0, %v3217
        %3219 = vdwg.mxu0
        %v3220 = vadd.f32 %v3129, %v3197
        %v3221 = vadd.f32 %v3130, %v3200
        %v3222 = vadd.f32 %v3131, %v3203
        %v3223 = vadd.f32 %v3132, %v3206
        %v3224 = vadd.f32 %v3133, %v3209
        %v3225 = vadd.f32 %v3134, %v3212
        %v3226 = vadd.f32 %v3135, %v3215
        %v3227 = vadd.f32 %v3136, %v3218
        %v3228 = vrot.slane %v2885, 4
        %v3229 = vrot.slane %v2867, 4
        %v3230 = vsel %vm780, %v3228, %v3229
        %v3231 = vrot.slane %v2889, 4
        %v3232 = vsel %vm780, %v3229, %v3231
        %v3233 = vrot.slane %v2886, 4
        %v3234 = vrot.slane %v2870, 4
        %v3235 = vsel %vm780, %v3233, %v3234
        %v3236 = vrot.slane %v2890, 4
        %v3237 = vsel %vm780, %v3234, %v3236
        %v3238 = vrot.slane %v2887, 4
        %v3239 = vrot.slane %v2873, 4
        %v3240 = vsel %vm780, %v3238, %v3239
        %v3241 = vrot.slane %v2891, 4
        %v3242 = vsel %vm780, %v3239, %v3241
        %v3243 = vrot.slane %v2888, 4
        %v3244 = vrot.slane %v2876, 4
        %v3245 = vsel %vm780, %v3243, %v3244
        %v3246 = vrot.slane %v2892, 4
        %v3247 = vsel %vm780, %v3244, %v3246
        %s3248 = scalar_lea.vmem %s6, 128
        %v3249 = vld [vmem:[%s3248] sm:$0xff]
        %v3250 = vld [vmem:[%s3248 + $0x8] sm:$0xff]
        %v3251 = vld [vmem:[%s3248 + $0x10] sm:$0xff]
        %v3252 = vld [vmem:[%s3248 + $0x18] sm:$0xff]
        %v3253 = vsel %vm2931, %v3230, 0
        %v3255 = vsel %vm2931, %v3232, 0
        %v3257 = vsel %vm2931, %v3235, 0
        %v3259 = vsel %vm2931, %v3237, 0
        %v3261 = vsel %vm2931, %v3240, 0
        %v3263 = vsel %vm2931, %v3242, 0
        %v3265 = vsel %vm2931, %v3245, 0
        %v3267 = vsel %vm2931, %v3247, 0
        %3269 = vmatpush.msra.mxu0 0.0
        %3270 = vmatpush.msra.mxu0 0.0
        %3271 = vmatpush.msra.mxu0 0.0
        %3272 = vmatpush.msra.mxu0 0.0
        %3273 = vmatpush.msra.mxu0 0.0
        %3274 = vmatpush.msra.mxu0 0.0
        %3275 = vmatpush.msra.mxu0 0.0
        %3276 = vmatpush.msra.mxu0 0.0
        %3277 = vmatpush.msra.mxu0 0.0
        %3278 = vmatpush.msra.mxu0 0.0
        %3279 = vmatpush.msra.mxu0 0.0
        %3280 = vmatpush.msra.mxu0 0.0
        %3281 = vmatpush.msra.mxu0 %v3252
        %3282 = vmatpush.msra.mxu0 %v3251
        %3283 = vmatpush.msra.mxu0 %v3250
        %3284 = vmatpush.msra.mxu0 %v3249
        %3285 = vmatmul.f32.gmra.mxu0 %v3253
        %v3286 = vpop.f32.mrf.mxu0
        %v3287 = vadd.f32 0.0, %v3286
        %3288 = vmatmul.f32.gmra.mxu0 %v3255
        %v3289 = vpop.f32.mrf.mxu0
        %v3290 = vadd.f32 0.0, %v3289
        %3291 = vmatmul.f32.gmra.mxu0 %v3257
        %v3292 = vpop.f32.mrf.mxu0
        %v3293 = vadd.f32 0.0, %v3292
        %3294 = vmatmul.f32.gmra.mxu0 %v3259
        %v3295 = vpop.f32.mrf.mxu0
        %v3296 = vadd.f32 0.0, %v3295
        %3297 = vmatmul.f32.gmra.mxu0 %v3261
        %v3298 = vpop.f32.mrf.mxu0
        %v3299 = vadd.f32 0.0, %v3298
        %3300 = vmatmul.f32.gmra.mxu0 %v3263
        %v3301 = vpop.f32.mrf.mxu0
        %v3302 = vadd.f32 0.0, %v3301
        %3303 = vmatmul.f32.gmra.mxu0 %v3265
        %v3304 = vpop.f32.mrf.mxu0
        %v3305 = vadd.f32 0.0, %v3304
        %3306 = vmatmul.f32.gmra.mxu0 %v3267
        %v3307 = vpop.f32.mrf.mxu0
        %v3308 = vadd.f32 0.0, %v3307
        %3309 = vdwg.mxu0
        %v3310 = vadd.f32 %v3220, %v3287
        %v3311 = vadd.f32 %v3221, %v3290
        %v3312 = vadd.f32 %v3222, %v3293
        %v3313 = vadd.f32 %v3223, %v3296
        %v3314 = vadd.f32 %v3224, %v3299
        %v3315 = vadd.f32 %v3225, %v3302
        %v3316 = vadd.f32 %v3226, %v3305
        %v3317 = vadd.f32 %v3227, %v3308
        %v3318 = vrot.slane %v2885, 5
        %v3319 = vrot.slane %v2867, 5
        %v3320 = vsel %vm2864, %v3318, %v3319
        %v3321 = vrot.slane %v2889, 5
        %v3322 = vsel %vm2864, %v3319, %v3321
        %v3323 = vrot.slane %v2886, 5
        %v3324 = vrot.slane %v2870, 5
        %v3325 = vsel %vm2864, %v3323, %v3324
        %v3326 = vrot.slane %v2890, 5
        %v3327 = vsel %vm2864, %v3324, %v3326
        %v3328 = vrot.slane %v2887, 5
        %v3329 = vrot.slane %v2873, 5
        %v3330 = vsel %vm2864, %v3328, %v3329
        %v3331 = vrot.slane %v2891, 5
        %v3332 = vsel %vm2864, %v3329, %v3331
        %v3333 = vrot.slane %v2888, 5
        %v3334 = vrot.slane %v2876, 5
        %v3335 = vsel %vm2864, %v3333, %v3334
        %v3336 = vrot.slane %v2892, 5
        %v3337 = vsel %vm2864, %v3334, %v3336
        %s3338 = scalar_lea.vmem %s6, 160
        %v3339 = vld [vmem:[%s3338] sm:$0xff]
        %v3340 = vld [vmem:[%s3338 + $0x8] sm:$0xff]
        %v3341 = vld [vmem:[%s3338 + $0x10] sm:$0xff]
        %v3342 = vld [vmem:[%s3338 + $0x18] sm:$0xff]
        %v3343 = vsel %vm2931, %v3320, 0
        %v3345 = vsel %vm2931, %v3322, 0
        %v3347 = vsel %vm2931, %v3325, 0
        %v3349 = vsel %vm2931, %v3327, 0
        %v3351 = vsel %vm2931, %v3330, 0
        %v3353 = vsel %vm2931, %v3332, 0
        %v3355 = vsel %vm2931, %v3335, 0
        %v3357 = vsel %vm2931, %v3337, 0
        %3359 = vmatpush.msra.mxu0 0.0
        %3360 = vmatpush.msra.mxu0 0.0
        %3361 = vmatpush.msra.mxu0 0.0
        %3362 = vmatpush.msra.mxu0 0.0
        %3363 = vmatpush.msra.mxu0 0.0
        %3364 = vmatpush.msra.mxu0 0.0
        %3365 = vmatpush.msra.mxu0 0.0
        %3366 = vmatpush.msra.mxu0 0.0
        %3367 = vmatpush.msra.mxu0 0.0
        %3368 = vmatpush.msra.mxu0 0.0
        %3369 = vmatpush.msra.mxu0 0.0
        %3370 = vmatpush.msra.mxu0 0.0
        %3371 = vmatpush.msra.mxu0 %v3342
        %3372 = vmatpush.msra.mxu0 %v3341
        %3373 = vmatpush.msra.mxu0 %v3340
        %3374 = vmatpush.msra.mxu0 %v3339
        %3375 = vmatmul.f32.gmra.mxu0 %v3343
        %v3376 = vpop.f32.mrf.mxu0
        %v3377 = vadd.f32 0.0, %v3376
        %3378 = vmatmul.f32.gmra.mxu0 %v3345
        %v3379 = vpop.f32.mrf.mxu0
        %v3380 = vadd.f32 0.0, %v3379
        %3381 = vmatmul.f32.gmra.mxu0 %v3347
        %v3382 = vpop.f32.mrf.mxu0
        %v3383 = vadd.f32 0.0, %v3382
        %3384 = vmatmul.f32.gmra.mxu0 %v3349
        %v3385 = vpop.f32.mrf.mxu0
        %v3386 = vadd.f32 0.0, %v3385
        %3387 = vmatmul.f32.gmra.mxu0 %v3351
        %v3388 = vpop.f32.mrf.mxu0
        %v3389 = vadd.f32 0.0, %v3388
        %3390 = vmatmul.f32.gmra.mxu0 %v3353
        %v3391 = vpop.f32.mrf.mxu0
        %v3392 = vadd.f32 0.0, %v3391
        %3393 = vmatmul.f32.gmra.mxu0 %v3355
        %v3394 = vpop.f32.mrf.mxu0
        %v3395 = vadd.f32 0.0, %v3394
        %3396 = vmatmul.f32.gmra.mxu0 %v3357
        %v3397 = vpop.f32.mrf.mxu0
        %v3398 = vadd.f32 0.0, %v3397
        %3399 = vdwg.mxu0
        %v3400 = vadd.f32 %v3310, %v3377
        %v3401 = vadd.f32 %v3311, %v3380
        %v3402 = vadd.f32 %v3312, %v3383
        %v3403 = vadd.f32 %v3313, %v3386
        %v3404 = vadd.f32 %v3314, %v3389
        %v3405 = vadd.f32 %v3315, %v3392
        %v3406 = vadd.f32 %v3316, %v3395
        %v3407 = vadd.f32 %v3317, %v3398
        %vm3408 = vcmask 1041408
        %v3409 = vrot.slane %v2885, 6
        %v3410 = vrot.slane %v2867, 6
        %v3411 = vsel %vm3408, %v3409, %v3410
        %v3412 = vrot.slane %v2889, 6
        %v3413 = vsel %vm3408, %v3410, %v3412
        %v3414 = vrot.slane %v2886, 6
        %v3415 = vrot.slane %v2870, 6
        %v3416 = vsel %vm3408, %v3414, %v3415
        %v3417 = vrot.slane %v2890, 6
        %v3418 = vsel %vm3408, %v3415, %v3417
        %v3419 = vrot.slane %v2887, 6
        %v3420 = vrot.slane %v2873, 6
        %v3421 = vsel %vm3408, %v3419, %v3420
        %v3422 = vrot.slane %v2891, 6
        %v3423 = vsel %vm3408, %v3420, %v3422
        %v3424 = vrot.slane %v2888, 6
        %v3425 = vrot.slane %v2876, 6
        %v3426 = vsel %vm3408, %v3424, %v3425
        %v3427 = vrot.slane %v2892, 6
        %v3428 = vsel %vm3408, %v3425, %v3427
        %s3429 = scalar_lea.vmem %s6, 192
        %v3430 = vld [vmem:[%s3429] sm:$0xff]
        %v3431 = vld [vmem:[%s3429 + $0x8] sm:$0xff]
        %v3432 = vld [vmem:[%s3429 + $0x10] sm:$0xff]
        %v3433 = vld [vmem:[%s3429 + $0x18] sm:$0xff]
        %v3434 = vsel %vm2931, %v3411, 0
        %v3436 = vsel %vm2931, %v3413, 0
        %v3438 = vsel %vm2931, %v3416, 0
        %v3440 = vsel %vm2931, %v3418, 0
        %v3442 = vsel %vm2931, %v3421, 0
        %v3444 = vsel %vm2931, %v3423, 0
        %v3446 = vsel %vm2931, %v3426, 0
        %v3448 = vsel %vm2931, %v3428, 0
        %3450 = vmatpush.msra.mxu0 0.0
        %3451 = vmatpush.msra.mxu0 0.0
        %3452 = vmatpush.msra.mxu0 0.0
        %3453 = vmatpush.msra.mxu0 0.0
        %3454 = vmatpush.msra.mxu0 0.0
        %3455 = vmatpush.msra.mxu0 0.0
        %3456 = vmatpush.msra.mxu0 0.0
        %3457 = vmatpush.msra.mxu0 0.0
        %3458 = vmatpush.msra.mxu0 0.0
        %3459 = vmatpush.msra.mxu0 0.0
        %3460 = vmatpush.msra.mxu0 0.0
        %3461 = vmatpush.msra.mxu0 0.0
        %3462 = vmatpush.msra.mxu0 %v3433
        %3463 = vmatpush.msra.mxu0 %v3432
        %3464 = vmatpush.msra.mxu0 %v3431
        %3465 = vmatpush.msra.mxu0 %v3430
        %3466 = vmatmul.f32.gmra.mxu0 %v3434
        %v3467 = vpop.f32.mrf.mxu0
        %v3468 = vadd.f32 0.0, %v3467
        %3469 = vmatmul.f32.gmra.mxu0 %v3436
        %v3470 = vpop.f32.mrf.mxu0
        %v3471 = vadd.f32 0.0, %v3470
        %3472 = vmatmul.f32.gmra.mxu0 %v3438
        %v3473 = vpop.f32.mrf.mxu0
        %v3474 = vadd.f32 0.0, %v3473
        %3475 = vmatmul.f32.gmra.mxu0 %v3440
        %v3476 = vpop.f32.mrf.mxu0
        %v3477 = vadd.f32 0.0, %v3476
        %3478 = vmatmul.f32.gmra.mxu0 %v3442
        %v3479 = vpop.f32.mrf.mxu0
        %v3480 = vadd.f32 0.0, %v3479
        %3481 = vmatmul.f32.gmra.mxu0 %v3444
        %v3482 = vpop.f32.mrf.mxu0
        %v3483 = vadd.f32 0.0, %v3482
        %3484 = vmatmul.f32.gmra.mxu0 %v3446
        %v3485 = vpop.f32.mrf.mxu0
        %v3486 = vadd.f32 0.0, %v3485
        %3487 = vmatmul.f32.gmra.mxu0 %v3448
        %v3488 = vpop.f32.mrf.mxu0
        %v3489 = vadd.f32 0.0, %v3488
        %3490 = vdwg.mxu0
        %v3491 = vadd.f32 %v3400, %v3468
        %v3492 = vadd.f32 %v3401, %v3471
        %v3493 = vadd.f32 %v3402, %v3474
        %v3494 = vadd.f32 %v3403, %v3477
        %v3495 = vadd.f32 %v3404, %v3480
        %v3496 = vadd.f32 %v3405, %v3483
        %v3497 = vadd.f32 %v3406, %v3486
        %v3498 = vadd.f32 %v3407, %v3489
        %s3499 = sld [smem:[#allocation2]]
        %v3500 = vstv %s3499
        %v3501 = vadd.f32 %v3491, %v3500
        %v3502 = vadd.f32 %v3492, %v3500
        %v3503 = vadd.f32 %v3493, %v3500
        %v3504 = vadd.f32 %v3494, %v3500
        %v3505 = vadd.f32 %v3495, %v3500
        %v3506 = vadd.f32 %v3496, %v3500
        %v3507 = vadd.f32 %v3497, %v3500
        %v3508 = vadd.f32 %v3498, %v3500
        %v3509 = vsub.f32 0.0, %v3501
        %v3510 = vsub.f32 0.0, %v3502
        %v3511 = vsub.f32 0.0, %v3503
        %v3512 = vsub.f32 0.0, %v3504
        %v3513 = vsub.f32 0.0, %v3505
        %v3514 = vsub.f32 0.0, %v3506
        %v3515 = vsub.f32 0.0, %v3507
        %v3516 = vsub.f32 0.0, %v3508
        %v3517 = vmul.f32 %v3509, 1.442695
        %v3518 = vpow.pop %v3517
        %v3519 = vmul.f32 %v3510, 1.442695
        %v3520 = vpow.pop %v3519
        %v3521 = vmul.f32 %v3511, 1.442695
        %v3522 = vpow.pop %v3521
        %v3523 = vmul.f32 %v3512, 1.442695
        %v3524 = vpow.pop %v3523
        %v3525 = vmul.f32 %v3513, 1.442695
        %v3526 = vpow.pop %v3525
        %v3527 = vmul.f32 %v3514, 1.442695
        %v3528 = vpow.pop %v3527
        %v3529 = vmul.f32 %v3515, 1.442695
        %v3530 = vpow.pop %v3529
        %v3531 = vmul.f32 %v3516, 1.442695
        %v3532 = vpow.pop %v3531
        %v3533 = vadd.f32 %v3518, 1.0
        %v3534 = vadd.f32 %v3520, 1.0
        %v3535 = vadd.f32 %v3522, 1.0
        %v3536 = vadd.f32 %v3524, 1.0
        %v3537 = vadd.f32 %v3526, 1.0
        %v3538 = vadd.f32 %v3528, 1.0
        %v3539 = vadd.f32 %v3530, 1.0
        %v3540 = vadd.f32 %v3532, 1.0
        %v3541 = vrcp.pop %v3533
        %v3542 = vmul.f32 %v3533, %v3541
        %v3543 = vsub.f32 1.0, %v3542
        %v3544 = vmul.f32 %v3541, %v3543
        %v3545 = vadd.f32 %v3541, %v3544
        %vm3546 = vweird.f32 %v3533
        %vm3547 = vweird.f32 %v3541
        %vm3548 = vmor %vm3546, %vm3547
        %v3549 = vsel %vm3548, %v3541, %v3545
        %v3550 = vand.u32 2147483647, %v3533
        %vm3551 = vcmp.eq.f32.partialorder %v3550, 8.507059e+37
        %v3552 = vand.u32 %v3533, 2147483648
        %v3553 = vor.u32 1.1754944e-38, %v3552
        %v3554 = vsel %vm3551, %v3553, %v3549
        %v3555 = vrcp.pop %v3534
        %v3556 = vmul.f32 %v3534, %v3555
        %v3557 = vsub.f32 1.0, %v3556
        %v3558 = vmul.f32 %v3555, %v3557
        %v3559 = vadd.f32 %v3555, %v3558
        %vm3560 = vweird.f32 %v3534
        %vm3561 = vweird.f32 %v3555
        %vm3562 = vmor %vm3560, %vm3561
        %v3563 = vsel %vm3562, %v3555, %v3559
        %v3564 = vand.u32 2147483647, %v3534
        %vm3565 = vcmp.eq.f32.partialorder %v3564, 8.507059e+37
        %v3566 = vand.u32 %v3534, 2147483648
        %v3567 = vor.u32 1.1754944e-38, %v3566
        %v3568 = vsel %vm3565, %v3567, %v3563
        %v3569 = vrcp.pop %v3535
        %v3570 = vmul.f32 %v3535, %v3569
        %v3571 = vsub.f32 1.0, %v3570
        %v3572 = vmul.f32 %v3569, %v3571
        %v3573 = vadd.f32 %v3569, %v3572
        %vm3574 = vweird.f32 %v3535
        %vm3575 = vweird.f32 %v3569
        %vm3576 = vmor %vm3574, %vm3575
        %v3577 = vsel %vm3576, %v3569, %v3573
        %v3578 = vand.u32 2147483647, %v3535
        %vm3579 = vcmp.eq.f32.partialorder %v3578, 8.507059e+37
        %v3580 = vand.u32 %v3535, 2147483648
        %v3581 = vor.u32 1.1754944e-38, %v3580
        %v3582 = vsel %vm3579, %v3581, %v3577
        %v3583 = vrcp.pop %v3536
        %v3584 = vmul.f32 %v3536, %v3583
        %v3585 = vsub.f32 1.0, %v3584
        %v3586 = vmul.f32 %v3583, %v3585
        %v3587 = vadd.f32 %v3583, %v3586
        %vm3588 = vweird.f32 %v3536
        %vm3589 = vweird.f32 %v3583
        %vm3590 = vmor %vm3588, %vm3589
        %v3591 = vsel %vm3590, %v3583, %v3587
        %v3592 = vand.u32 2147483647, %v3536
        %vm3593 = vcmp.eq.f32.partialorder %v3592, 8.507059e+37
        %v3594 = vand.u32 %v3536, 2147483648
        %v3595 = vor.u32 1.1754944e-38, %v3594
        %v3596 = vsel %vm3593, %v3595, %v3591
        %v3597 = vrcp.pop %v3537
        %v3598 = vmul.f32 %v3537, %v3597
        %v3599 = vsub.f32 1.0, %v3598
        %v3600 = vmul.f32 %v3597, %v3599
        %v3601 = vadd.f32 %v3597, %v3600
        %vm3602 = vweird.f32 %v3537
        %vm3603 = vweird.f32 %v3597
        %vm3604 = vmor %vm3602, %vm3603
        %v3605 = vsel %vm3604, %v3597, %v3601
        %v3606 = vand.u32 2147483647, %v3537
        %vm3607 = vcmp.eq.f32.partialorder %v3606, 8.507059e+37
        %v3608 = vand.u32 %v3537, 2147483648
        %v3609 = vor.u32 1.1754944e-38, %v3608
        %v3610 = vsel %vm3607, %v3609, %v3605
        %v3611 = vrcp.pop %v3538
        %v3612 = vmul.f32 %v3538, %v3611
        %v3613 = vsub.f32 1.0, %v3612
        %v3614 = vmul.f32 %v3611, %v3613
        %v3615 = vadd.f32 %v3611, %v3614
        %vm3616 = vweird.f32 %v3538
        %vm3617 = vweird.f32 %v3611
        %vm3618 = vmor %vm3616, %vm3617
        %v3619 = vsel %vm3618, %v3611, %v3615
        %v3620 = vand.u32 2147483647, %v3538
        %vm3621 = vcmp.eq.f32.partialorder %v3620, 8.507059e+37
        %v3622 = vand.u32 %v3538, 2147483648
        %v3623 = vor.u32 1.1754944e-38, %v3622
        %v3624 = vsel %vm3621, %v3623, %v3619
        %v3625 = vrcp.pop %v3539
        %v3626 = vmul.f32 %v3539, %v3625
        %v3627 = vsub.f32 1.0, %v3626
        %v3628 = vmul.f32 %v3625, %v3627
        %v3629 = vadd.f32 %v3625, %v3628
        %vm3630 = vweird.f32 %v3539
        %vm3631 = vweird.f32 %v3625
        %vm3632 = vmor %vm3630, %vm3631
        %v3633 = vsel %vm3632, %v3625, %v3629
        %v3634 = vand.u32 2147483647, %v3539
        %vm3635 = vcmp.eq.f32.partialorder %v3634, 8.507059e+37
        %v3636 = vand.u32 %v3539, 2147483648
        %v3637 = vor.u32 1.1754944e-38, %v3636
        %v3638 = vsel %vm3635, %v3637, %v3633
        %v3639 = vrcp.pop %v3540
        %v3640 = vmul.f32 %v3540, %v3639
        %v3641 = vsub.f32 1.0, %v3640
        %v3642 = vmul.f32 %v3639, %v3641
        %v3643 = vadd.f32 %v3639, %v3642
        %vm3644 = vweird.f32 %v3540
        %vm3645 = vweird.f32 %v3639
        %vm3646 = vmor %vm3644, %vm3645
        %v3647 = vsel %vm3646, %v3639, %v3643
        %v3648 = vand.u32 2147483647, %v3540
        %vm3649 = vcmp.eq.f32.partialorder %v3648, 8.507059e+37
        %v3650 = vand.u32 %v3540, 2147483648
        %v3651 = vor.u32 1.1754944e-38, %v3650
        %v3652 = vsel %vm3649, %v3651, %v3647
        %v3653 = vperm.slane %v3554, 0
        %v3654 = vlaneseq
        %v3655 = vshrl.u32 %v3654, 7
        %3657 = vset.pattern.permute.xlu0 %v3655
        %3658 = vperm.xlu0 %3657, %v3653
        %v3659 = vpop.permute.xlu0 %3658
        %v3660 = vlaneseq
        %v3661 = vshrl.u32 %v3660, 7
        %v3662 = vadd.s32 %v3661, 8
        %3663 = vset.pattern.permute.xlu0 %v3662
        %3664 = vperm.xlu0 %3663, %v3653
        %v3665 = vpop.permute.xlu0 %3664
        %v3666 = vperm.slane %v3554, 1
        %v3667 = vlaneseq
        %v3668 = vshrl.u32 %v3667, 7
        %3670 = vset.pattern.permute.xlu0 %v3668
        %3671 = vperm.xlu0 %3670, %v3666
        %v3672 = vpop.permute.xlu0 %3671
        %v3673 = vlaneseq
        %v3674 = vshrl.u32 %v3673, 7
        %v3675 = vadd.s32 %v3674, 8
        %3676 = vset.pattern.permute.xlu0 %v3675
        %3677 = vperm.xlu0 %3676, %v3666
        %v3678 = vpop.permute.xlu0 %3677
        %v3679 = vperm.slane %v3554, 2
        %v3680 = vlaneseq
        %v3681 = vshrl.u32 %v3680, 7
        %3683 = vset.pattern.permute.xlu0 %v3681
        %3684 = vperm.xlu0 %3683, %v3679
        %v3685 = vpop.permute.xlu0 %3684
        %v3686 = vlaneseq
        %v3687 = vshrl.u32 %v3686, 7
        %v3688 = vadd.s32 %v3687, 8
        %3689 = vset.pattern.permute.xlu0 %v3688
        %3690 = vperm.xlu0 %3689, %v3679
        %v3691 = vpop.permute.xlu0 %3690
        %v3692 = vperm.slane %v3554, 3
        %v3693 = vlaneseq
        %v3694 = vshrl.u32 %v3693, 7
        %3696 = vset.pattern.permute.xlu0 %v3694
        %3697 = vperm.xlu0 %3696, %v3692
        %v3698 = vpop.permute.xlu0 %3697
        %v3699 = vlaneseq
        %v3700 = vshrl.u32 %v3699, 7
        %v3701 = vadd.s32 %v3700, 8
        %3702 = vset.pattern.permute.xlu0 %v3701
        %3703 = vperm.xlu0 %3702, %v3692
        %v3704 = vpop.permute.xlu0 %3703
        %v3705 = vperm.slane %v3554, 4
        %v3706 = vlaneseq
        %v3707 = vshrl.u32 %v3706, 7
        %3709 = vset.pattern.permute.xlu0 %v3707
        %3710 = vperm.xlu0 %3709, %v3705
        %v3711 = vpop.permute.xlu0 %3710
        %v3712 = vlaneseq
        %v3713 = vshrl.u32 %v3712, 7
        %v3714 = vadd.s32 %v3713, 8
        %3715 = vset.pattern.permute.xlu0 %v3714
        %3716 = vperm.xlu0 %3715, %v3705
        %v3717 = vpop.permute.xlu0 %3716
        %v3718 = vperm.slane %v3554, 5
        %v3719 = vlaneseq
        %v3720 = vshrl.u32 %v3719, 7
        %3722 = vset.pattern.permute.xlu0 %v3720
        %3723 = vperm.xlu0 %3722, %v3718
        %v3724 = vpop.permute.xlu0 %3723
        %v3725 = vlaneseq
        %v3726 = vshrl.u32 %v3725, 7
        %v3727 = vadd.s32 %v3726, 8
        %3728 = vset.pattern.permute.xlu0 %v3727
        %3729 = vperm.xlu0 %3728, %v3718
        %v3730 = vpop.permute.xlu0 %3729
        %v3731 = vperm.slane %v3554, 6
        %v3732 = vlaneseq
        %v3733 = vshrl.u32 %v3732, 7
        %3735 = vset.pattern.permute.xlu0 %v3733
        %3736 = vperm.xlu0 %3735, %v3731
        %v3737 = vpop.permute.xlu0 %3736
        %v3738 = vlaneseq
        %v3739 = vshrl.u32 %v3738, 7
        %v3740 = vadd.s32 %v3739, 8
        %3741 = vset.pattern.permute.xlu0 %v3740
        %3742 = vperm.xlu0 %3741, %v3731
        %v3743 = vpop.permute.xlu0 %3742
        %v3744 = vperm.slane %v3554, 7
        %v3745 = vlaneseq
        %v3746 = vshrl.u32 %v3745, 7
        %3748 = vset.pattern.permute.xlu0 %v3746
        %3749 = vperm.xlu0 %3748, %v3744
        %v3750 = vpop.permute.xlu0 %3749
        %v3751 = vlaneseq
        %v3752 = vshrl.u32 %v3751, 7
        %v3753 = vadd.s32 %v3752, 8
        %3754 = vset.pattern.permute.xlu0 %v3753
        %3755 = vperm.xlu0 %3754, %v3744
        %v3756 = vpop.permute.xlu0 %3755
        %v3757 = vperm.slane %v3568, 0
        %v3758 = vlaneseq
        %v3759 = vshrl.u32 %v3758, 7
        %3761 = vset.pattern.permute.xlu0 %v3759
        %3762 = vperm.xlu0 %3761, %v3757
        %v3763 = vpop.permute.xlu0 %3762
        %v3764 = vlaneseq
        %v3765 = vshrl.u32 %v3764, 7
        %v3766 = vadd.s32 %v3765, 8
        %3767 = vset.pattern.permute.xlu0 %v3766
        %3768 = vperm.xlu0 %3767, %v3757
        %v3769 = vpop.permute.xlu0 %3768
        %v3770 = vperm.slane %v3568, 1
        %v3771 = vlaneseq
        %v3772 = vshrl.u32 %v3771, 7
        %3774 = vset.pattern.permute.xlu0 %v3772
        %3775 = vperm.xlu0 %3774, %v3770
        %v3776 = vpop.permute.xlu0 %3775
        %v3777 = vlaneseq
        %v3778 = vshrl.u32 %v3777, 7
        %v3779 = vadd.s32 %v3778, 8
        %3780 = vset.pattern.permute.xlu0 %v3779
        %3781 = vperm.xlu0 %3780, %v3770
        %v3782 = vpop.permute.xlu0 %3781
        %v3783 = vperm.slane %v3568, 2
        %v3784 = vlaneseq
        %v3785 = vshrl.u32 %v3784, 7
        %3787 = vset.pattern.permute.xlu0 %v3785
        %3788 = vperm.xlu0 %3787, %v3783
        %v3789 = vpop.permute.xlu0 %3788
        %v3790 = vlaneseq
        %v3791 = vshrl.u32 %v3790, 7
        %v3792 = vadd.s32 %v3791, 8
        %3793 = vset.pattern.permute.xlu0 %v3792
        %3794 = vperm.xlu0 %3793, %v3783
        %v3795 = vpop.permute.xlu0 %3794
        %v3796 = vperm.slane %v3568, 3
        %v3797 = vlaneseq
        %v3798 = vshrl.u32 %v3797, 7
        %3800 = vset.pattern.permute.xlu0 %v3798
        %3801 = vperm.xlu0 %3800, %v3796
        %v3802 = vpop.permute.xlu0 %3801
        %v3803 = vlaneseq
        %v3804 = vshrl.u32 %v3803, 7
        %v3805 = vadd.s32 %v3804, 8
        %3806 = vset.pattern.permute.xlu0 %v3805
        %3807 = vperm.xlu0 %3806, %v3796
        %v3808 = vpop.permute.xlu0 %3807
        %v3809 = vperm.slane %v3568, 4
        %v3810 = vlaneseq
        %v3811 = vshrl.u32 %v3810, 7
        %3813 = vset.pattern.permute.xlu0 %v3811
        %3814 = vperm.xlu0 %3813, %v3809
        %v3815 = vpop.permute.xlu0 %3814
        %v3816 = vlaneseq
        %v3817 = vshrl.u32 %v3816, 7
        %v3818 = vadd.s32 %v3817, 8
        %3819 = vset.pattern.permute.xlu0 %v3818
        %3820 = vperm.xlu0 %3819, %v3809
        %v3821 = vpop.permute.xlu0 %3820
        %v3822 = vperm.slane %v3568, 5
        %v3823 = vlaneseq
        %v3824 = vshrl.u32 %v3823, 7
        %3826 = vset.pattern.permute.xlu0 %v3824
        %3827 = vperm.xlu0 %3826, %v3822
        %v3828 = vpop.permute.xlu0 %3827
        %v3829 = vlaneseq
        %v3830 = vshrl.u32 %v3829, 7
        %v3831 = vadd.s32 %v3830, 8
        %3832 = vset.pattern.permute.xlu0 %v3831
        %3833 = vperm.xlu0 %3832, %v3822
        %v3834 = vpop.permute.xlu0 %3833
        %v3835 = vperm.slane %v3568, 6
        %v3836 = vlaneseq
        %v3837 = vshrl.u32 %v3836, 7
        %3839 = vset.pattern.permute.xlu0 %v3837
        %3840 = vperm.xlu0 %3839, %v3835
        %v3841 = vpop.permute.xlu0 %3840
        %v3842 = vlaneseq
        %v3843 = vshrl.u32 %v3842, 7
        %v3844 = vadd.s32 %v3843, 8
        %3845 = vset.pattern.permute.xlu0 %v3844
        %3846 = vperm.xlu0 %3845, %v3835
        %v3847 = vpop.permute.xlu0 %3846
        %v3848 = vperm.slane %v3568, 7
        %v3849 = vlaneseq
        %v3850 = vshrl.u32 %v3849, 7
        %3852 = vset.pattern.permute.xlu0 %v3850
        %3853 = vperm.xlu0 %3852, %v3848
        %v3854 = vpop.permute.xlu0 %3853
        %v3855 = vlaneseq
        %v3856 = vshrl.u32 %v3855, 7
        %v3857 = vadd.s32 %v3856, 8
        %3858 = vset.pattern.permute.xlu0 %v3857
        %3859 = vperm.xlu0 %3858, %v3848
        %v3860 = vpop.permute.xlu0 %3859
        %v3861 = vperm.slane %v3582, 0
        %v3862 = vlaneseq
        %v3863 = vshrl.u32 %v3862, 7
        %3865 = vset.pattern.permute.xlu0 %v3863
        %3866 = vperm.xlu0 %3865, %v3861
        %v3867 = vpop.permute.xlu0 %3866
        %v3868 = vlaneseq
        %v3869 = vshrl.u32 %v3868, 7
        %v3870 = vadd.s32 %v3869, 8
        %3871 = vset.pattern.permute.xlu0 %v3870
        %3872 = vperm.xlu0 %3871, %v3861
        %v3873 = vpop.permute.xlu0 %3872
        %v3874 = vperm.slane %v3582, 1
        %v3875 = vlaneseq
        %v3876 = vshrl.u32 %v3875, 7
        %3878 = vset.pattern.permute.xlu0 %v3876
        %3879 = vperm.xlu0 %3878, %v3874
        %v3880 = vpop.permute.xlu0 %3879
        %v3881 = vlaneseq
        %v3882 = vshrl.u32 %v3881, 7
        %v3883 = vadd.s32 %v3882, 8
        %3884 = vset.pattern.permute.xlu0 %v3883
        %3885 = vperm.xlu0 %3884, %v3874
        %v3886 = vpop.permute.xlu0 %3885
        %v3887 = vperm.slane %v3582, 2
        %v3888 = vlaneseq
        %v3889 = vshrl.u32 %v3888, 7
        %3891 = vset.pattern.permute.xlu0 %v3889
        %3892 = vperm.xlu0 %3891, %v3887
        %v3893 = vpop.permute.xlu0 %3892
        %v3894 = vlaneseq
        %v3895 = vshrl.u32 %v3894, 7
        %v3896 = vadd.s32 %v3895, 8
        %3897 = vset.pattern.permute.xlu0 %v3896
        %3898 = vperm.xlu0 %3897, %v3887
        %v3899 = vpop.permute.xlu0 %3898
        %v3900 = vperm.slane %v3582, 3
        %v3901 = vlaneseq
        %v3902 = vshrl.u32 %v3901, 7
        %3904 = vset.pattern.permute.xlu0 %v3902
        %3905 = vperm.xlu0 %3904, %v3900
        %v3906 = vpop.permute.xlu0 %3905
        %v3907 = vlaneseq
        %v3908 = vshrl.u32 %v3907, 7
        %v3909 = vadd.s32 %v3908, 8
        %3910 = vset.pattern.permute.xlu0 %v3909
        %3911 = vperm.xlu0 %3910, %v3900
        %v3912 = vpop.permute.xlu0 %3911
        %v3913 = vperm.slane %v3582, 4
        %v3914 = vlaneseq
        %v3915 = vshrl.u32 %v3914, 7
        %3917 = vset.pattern.permute.xlu0 %v3915
        %3918 = vperm.xlu0 %3917, %v3913
        %v3919 = vpop.permute.xlu0 %3918
        %v3920 = vlaneseq
        %v3921 = vshrl.u32 %v3920, 7
        %v3922 = vadd.s32 %v3921, 8
        %3923 = vset.pattern.permute.xlu0 %v3922
        %3924 = vperm.xlu0 %3923, %v3913
        %v3925 = vpop.permute.xlu0 %3924
        %v3926 = vperm.slane %v3582, 5
        %v3927 = vlaneseq
        %v3928 = vshrl.u32 %v3927, 7
        %3930 = vset.pattern.permute.xlu0 %v3928
        %3931 = vperm.xlu0 %3930, %v3926
        %v3932 = vpop.permute.xlu0 %3931
        %v3933 = vlaneseq
        %v3934 = vshrl.u32 %v3933, 7
        %v3935 = vadd.s32 %v3934, 8
        %3936 = vset.pattern.permute.xlu0 %v3935
        %3937 = vperm.xlu0 %3936, %v3926
        %v3938 = vpop.permute.xlu0 %3937
        %v3939 = vperm.slane %v3582, 6
        %v3940 = vlaneseq
        %v3941 = vshrl.u32 %v3940, 7
        %3943 = vset.pattern.permute.xlu0 %v3941
        %3944 = vperm.xlu0 %3943, %v3939
        %v3945 = vpop.permute.xlu0 %3944
        %v3946 = vlaneseq
        %v3947 = vshrl.u32 %v3946, 7
        %v3948 = vadd.s32 %v3947, 8
        %3949 = vset.pattern.permute.xlu0 %v3948
        %3950 = vperm.xlu0 %3949, %v3939
        %v3951 = vpop.permute.xlu0 %3950
        %v3952 = vperm.slane %v3582, 7
        %v3953 = vlaneseq
        %v3954 = vshrl.u32 %v3953, 7
        %3956 = vset.pattern.permute.xlu0 %v3954
        %3957 = vperm.xlu0 %3956, %v3952
        %v3958 = vpop.permute.xlu0 %3957
        %v3959 = vlaneseq
        %v3960 = vshrl.u32 %v3959, 7
        %v3961 = vadd.s32 %v3960, 8
        %3962 = vset.pattern.permute.xlu0 %v3961
        %3963 = vperm.xlu0 %3962, %v3952
        %v3964 = vpop.permute.xlu0 %3963
        %v3965 = vperm.slane %v3596, 0
        %v3966 = vlaneseq
        %v3967 = vshrl.u32 %v3966, 7
        %3969 = vset.pattern.permute.xlu0 %v3967
        %3970 = vperm.xlu0 %3969, %v3965
        %v3971 = vpop.permute.xlu0 %3970
        %v3972 = vlaneseq
        %v3973 = vshrl.u32 %v3972, 7
        %v3974 = vadd.s32 %v3973, 8
        %3975 = vset.pattern.permute.xlu0 %v3974
        %3976 = vperm.xlu0 %3975, %v3965
        %v3977 = vpop.permute.xlu0 %3976
        %v3978 = vperm.slane %v3596, 1
        %v3979 = vlaneseq
        %v3980 = vshrl.u32 %v3979, 7
        %3982 = vset.pattern.permute.xlu0 %v3980
        %3983 = vperm.xlu0 %3982, %v3978
        %v3984 = vpop.permute.xlu0 %3983
        %v3985 = vlaneseq
        %v3986 = vshrl.u32 %v3985, 7
        %v3987 = vadd.s32 %v3986, 8
        %3988 = vset.pattern.permute.xlu0 %v3987
        %3989 = vperm.xlu0 %3988, %v3978
        %v3990 = vpop.permute.xlu0 %3989
        %v3991 = vperm.slane %v3596, 2
        %v3992 = vlaneseq
        %v3993 = vshrl.u32 %v3992, 7
        %3995 = vset.pattern.permute.xlu0 %v3993
        %3996 = vperm.xlu0 %3995, %v3991
        %v3997 = vpop.permute.xlu0 %3996
        %v3998 = vlaneseq
        %v3999 = vshrl.u32 %v3998, 7
        %v4000 = vadd.s32 %v3999, 8
        %4001 = vset.pattern.permute.xlu0 %v4000
        %4002 = vperm.xlu0 %4001, %v3991
        %v4003 = vpop.permute.xlu0 %4002
        %v4004 = vperm.slane %v3596, 3
        %v4005 = vlaneseq
        %v4006 = vshrl.u32 %v4005, 7
        %4008 = vset.pattern.permute.xlu0 %v4006
        %4009 = vperm.xlu0 %4008, %v4004
        %v4010 = vpop.permute.xlu0 %4009
        %v4011 = vlaneseq
        %v4012 = vshrl.u32 %v4011, 7
        %v4013 = vadd.s32 %v4012, 8
        %4014 = vset.pattern.permute.xlu0 %v4013
        %4015 = vperm.xlu0 %4014, %v4004
        %v4016 = vpop.permute.xlu0 %4015
        %v4017 = vperm.slane %v3596, 4
        %v4018 = vlaneseq
        %v4019 = vshrl.u32 %v4018, 7
        %4021 = vset.pattern.permute.xlu0 %v4019
        %4022 = vperm.xlu0 %4021, %v4017
        %v4023 = vpop.permute.xlu0 %4022
        %v4024 = vlaneseq
        %v4025 = vshrl.u32 %v4024, 7
        %v4026 = vadd.s32 %v4025, 8
        %4027 = vset.pattern.permute.xlu0 %v4026
        %4028 = vperm.xlu0 %4027, %v4017
        %v4029 = vpop.permute.xlu0 %4028
        %v4030 = vperm.slane %v3596, 5
        %v4031 = vlaneseq
        %v4032 = vshrl.u32 %v4031, 7
        %4034 = vset.pattern.permute.xlu0 %v4032
        %4035 = vperm.xlu0 %4034, %v4030
        %v4036 = vpop.permute.xlu0 %4035
        %v4037 = vlaneseq
        %v4038 = vshrl.u32 %v4037, 7
        %v4039 = vadd.s32 %v4038, 8
        %4040 = vset.pattern.permute.xlu0 %v4039
        %4041 = vperm.xlu0 %4040, %v4030
        %v4042 = vpop.permute.xlu0 %4041
        %v4043 = vperm.slane %v3596, 6
        %v4044 = vlaneseq
        %v4045 = vshrl.u32 %v4044, 7
        %4047 = vset.pattern.permute.xlu0 %v4045
        %4048 = vperm.xlu0 %4047, %v4043
        %v4049 = vpop.permute.xlu0 %4048
        %v4050 = vlaneseq
        %v4051 = vshrl.u32 %v4050, 7
        %v4052 = vadd.s32 %v4051, 8
        %4053 = vset.pattern.permute.xlu0 %v4052
        %4054 = vperm.xlu0 %4053, %v4043
        %v4055 = vpop.permute.xlu0 %4054
        %v4056 = vperm.slane %v3596, 7
        %v4057 = vlaneseq
        %v4058 = vshrl.u32 %v4057, 7
        %4060 = vset.pattern.permute.xlu0 %v4058
        %4061 = vperm.xlu0 %4060, %v4056
        %v4062 = vpop.permute.xlu0 %4061
        %v4063 = vlaneseq
        %v4064 = vshrl.u32 %v4063, 7
        %v4065 = vadd.s32 %v4064, 8
        %4066 = vset.pattern.permute.xlu0 %v4065
        %4067 = vperm.xlu0 %4066, %v4056
        %v4068 = vpop.permute.xlu0 %4067
        %v4069 = vperm.slane %v3610, 0
        %v4070 = vlaneseq
        %v4071 = vshrl.u32 %v4070, 7
        %4073 = vset.pattern.permute.xlu0 %v4071
        %4074 = vperm.xlu0 %4073, %v4069
        %v4075 = vpop.permute.xlu0 %4074
        %v4076 = vlaneseq
        %v4077 = vshrl.u32 %v4076, 7
        %v4078 = vadd.s32 %v4077, 8
        %4079 = vset.pattern.permute.xlu0 %v4078
        %4080 = vperm.xlu0 %4079, %v4069
        %v4081 = vpop.permute.xlu0 %4080
        %v4082 = vperm.slane %v3610, 1
        %v4083 = vlaneseq
        %v4084 = vshrl.u32 %v4083, 7
        %4086 = vset.pattern.permute.xlu0 %v4084
        %4087 = vperm.xlu0 %4086, %v4082
        %v4088 = vpop.permute.xlu0 %4087
        %v4089 = vlaneseq
        %v4090 = vshrl.u32 %v4089, 7
        %v4091 = vadd.s32 %v4090, 8
        %4092 = vset.pattern.permute.xlu0 %v4091
        %4093 = vperm.xlu0 %4092, %v4082
        %v4094 = vpop.permute.xlu0 %4093
        %v4095 = vperm.slane %v3610, 2
        %v4096 = vlaneseq
        %v4097 = vshrl.u32 %v4096, 7
        %4099 = vset.pattern.permute.xlu0 %v4097
        %4100 = vperm.xlu0 %4099, %v4095
        %v4101 = vpop.permute.xlu0 %4100
        %v4102 = vlaneseq
        %v4103 = vshrl.u32 %v4102, 7
        %v4104 = vadd.s32 %v4103, 8
        %4105 = vset.pattern.permute.xlu0 %v4104
        %4106 = vperm.xlu0 %4105, %v4095
        %v4107 = vpop.permute.xlu0 %4106
        %v4108 = vperm.slane %v3610, 3
        %v4109 = vlaneseq
        %v4110 = vshrl.u32 %v4109, 7
        %4112 = vset.pattern.permute.xlu0 %v4110
        %4113 = vperm.xlu0 %4112, %v4108
        %v4114 = vpop.permute.xlu0 %4113
        %v4115 = vlaneseq
        %v4116 = vshrl.u32 %v4115, 7
        %v4117 = vadd.s32 %v4116, 8
        %4118 = vset.pattern.permute.xlu0 %v4117
        %4119 = vperm.xlu0 %4118, %v4108
        %v4120 = vpop.permute.xlu0 %4119
        %v4121 = vperm.slane %v3610, 4
        %v4122 = vlaneseq
        %v4123 = vshrl.u32 %v4122, 7
        %4125 = vset.pattern.permute.xlu0 %v4123
        %4126 = vperm.xlu0 %4125, %v4121
        %v4127 = vpop.permute.xlu0 %4126
        %v4128 = vlaneseq
        %v4129 = vshrl.u32 %v4128, 7
        %v4130 = vadd.s32 %v4129, 8
        %4131 = vset.pattern.permute.xlu0 %v4130
        %4132 = vperm.xlu0 %4131, %v4121
        %v4133 = vpop.permute.xlu0 %4132
        %v4134 = vperm.slane %v3610, 5
        %v4135 = vlaneseq
        %v4136 = vshrl.u32 %v4135, 7
        %4138 = vset.pattern.permute.xlu0 %v4136
        %4139 = vperm.xlu0 %4138, %v4134
        %v4140 = vpop.permute.xlu0 %4139
        %v4141 = vlaneseq
        %v4142 = vshrl.u32 %v4141, 7
        %v4143 = vadd.s32 %v4142, 8
        %4144 = vset.pattern.permute.xlu0 %v4143
        %4145 = vperm.xlu0 %4144, %v4134
        %v4146 = vpop.permute.xlu0 %4145
        %v4147 = vperm.slane %v3610, 6
        %v4148 = vlaneseq
        %v4149 = vshrl.u32 %v4148, 7
        %4151 = vset.pattern.permute.xlu0 %v4149
        %4152 = vperm.xlu0 %4151, %v4147
        %v4153 = vpop.permute.xlu0 %4152
        %v4154 = vlaneseq
        %v4155 = vshrl.u32 %v4154, 7
        %v4156 = vadd.s32 %v4155, 8
        %4157 = vset.pattern.permute.xlu0 %v4156
        %4158 = vperm.xlu0 %4157, %v4147
        %v4159 = vpop.permute.xlu0 %4158
        %v4160 = vperm.slane %v3610, 7
        %v4161 = vlaneseq
        %v4162 = vshrl.u32 %v4161, 7
        %4164 = vset.pattern.permute.xlu0 %v4162
        %4165 = vperm.xlu0 %4164, %v4160
        %v4166 = vpop.permute.xlu0 %4165
        %v4167 = vlaneseq
        %v4168 = vshrl.u32 %v4167, 7
        %v4169 = vadd.s32 %v4168, 8
        %4170 = vset.pattern.permute.xlu0 %v4169
        %4171 = vperm.xlu0 %4170, %v4160
        %v4172 = vpop.permute.xlu0 %4171
        %v4173 = vperm.slane %v3624, 0
        %v4174 = vlaneseq
        %v4175 = vshrl.u32 %v4174, 7
        %4177 = vset.pattern.permute.xlu0 %v4175
        %4178 = vperm.xlu0 %4177, %v4173
        %v4179 = vpop.permute.xlu0 %4178
        %v4180 = vlaneseq
        %v4181 = vshrl.u32 %v4180, 7
        %v4182 = vadd.s32 %v4181, 8
        %4183 = vset.pattern.permute.xlu0 %v4182
        %4184 = vperm.xlu0 %4183, %v4173
        %v4185 = vpop.permute.xlu0 %4184
        %v4186 = vperm.slane %v3624, 1
        %v4187 = vlaneseq
        %v4188 = vshrl.u32 %v4187, 7
        %4190 = vset.pattern.permute.xlu0 %v4188
        %4191 = vperm.xlu0 %4190, %v4186
        %v4192 = vpop.permute.xlu0 %4191
        %v4193 = vlaneseq
        %v4194 = vshrl.u32 %v4193, 7
        %v4195 = vadd.s32 %v4194, 8
        %4196 = vset.pattern.permute.xlu0 %v4195
        %4197 = vperm.xlu0 %4196, %v4186
        %v4198 = vpop.permute.xlu0 %4197
        %v4199 = vperm.slane %v3624, 2
        %v4200 = vlaneseq
        %v4201 = vshrl.u32 %v4200, 7
        %4203 = vset.pattern.permute.xlu0 %v4201
        %4204 = vperm.xlu0 %4203, %v4199
        %v4205 = vpop.permute.xlu0 %4204
        %v4206 = vlaneseq
        %v4207 = vshrl.u32 %v4206, 7
        %v4208 = vadd.s32 %v4207, 8
        %4209 = vset.pattern.permute.xlu0 %v4208
        %4210 = vperm.xlu0 %4209, %v4199
        %v4211 = vpop.permute.xlu0 %4210
        %v4212 = vperm.slane %v3624, 3
        %v4213 = vlaneseq
        %v4214 = vshrl.u32 %v4213, 7
        %4216 = vset.pattern.permute.xlu0 %v4214
        %4217 = vperm.xlu0 %4216, %v4212
        %v4218 = vpop.permute.xlu0 %4217
        %v4219 = vlaneseq
        %v4220 = vshrl.u32 %v4219, 7
        %v4221 = vadd.s32 %v4220, 8
        %4222 = vset.pattern.permute.xlu0 %v4221
        %4223 = vperm.xlu0 %4222, %v4212
        %v4224 = vpop.permute.xlu0 %4223
        %v4225 = vperm.slane %v3624, 4
        %v4226 = vlaneseq
        %v4227 = vshrl.u32 %v4226, 7
        %4229 = vset.pattern.permute.xlu0 %v4227
        %4230 = vperm.xlu0 %4229, %v4225
        %v4231 = vpop.permute.xlu0 %4230
        %v4232 = vlaneseq
        %v4233 = vshrl.u32 %v4232, 7
        %v4234 = vadd.s32 %v4233, 8
        %4235 = vset.pattern.permute.xlu0 %v4234
        %4236 = vperm.xlu0 %4235, %v4225
        %v4237 = vpop.permute.xlu0 %4236
        %v4238 = vperm.slane %v3624, 5
        %v4239 = vlaneseq
        %v4240 = vshrl.u32 %v4239, 7
        %4242 = vset.pattern.permute.xlu0 %v4240
        %4243 = vperm.xlu0 %4242, %v4238
        %v4244 = vpop.permute.xlu0 %4243
        %v4245 = vlaneseq
        %v4246 = vshrl.u32 %v4245, 7
        %v4247 = vadd.s32 %v4246, 8
        %4248 = vset.pattern.permute.xlu0 %v4247
        %4249 = vperm.xlu0 %4248, %v4238
        %v4250 = vpop.permute.xlu0 %4249
        %v4251 = vperm.slane %v3624, 6
        %v4252 = vlaneseq
        %v4253 = vshrl.u32 %v4252, 7
        %4255 = vset.pattern.permute.xlu0 %v4253
        %4256 = vperm.xlu0 %4255, %v4251
        %v4257 = vpop.permute.xlu0 %4256
        %v4258 = vlaneseq
        %v4259 = vshrl.u32 %v4258, 7
        %v4260 = vadd.s32 %v4259, 8
        %4261 = vset.pattern.permute.xlu0 %v4260
        %4262 = vperm.xlu0 %4261, %v4251
        %v4263 = vpop.permute.xlu0 %4262
        %v4264 = vperm.slane %v3624, 7
        %v4265 = vlaneseq
        %v4266 = vshrl.u32 %v4265, 7
        %4268 = vset.pattern.permute.xlu0 %v4266
        %4269 = vperm.xlu0 %4268, %v4264
        %v4270 = vpop.permute.xlu0 %4269
        %v4271 = vlaneseq
        %v4272 = vshrl.u32 %v4271, 7
        %v4273 = vadd.s32 %v4272, 8
        %4274 = vset.pattern.permute.xlu0 %v4273
        %4275 = vperm.xlu0 %4274, %v4264
        %v4276 = vpop.permute.xlu0 %4275
        %v4277 = vperm.slane %v3638, 0
        %v4278 = vlaneseq
        %v4279 = vshrl.u32 %v4278, 7
        %4281 = vset.pattern.permute.xlu0 %v4279
        %4282 = vperm.xlu0 %4281, %v4277
        %v4283 = vpop.permute.xlu0 %4282
        %v4284 = vlaneseq
        %v4285 = vshrl.u32 %v4284, 7
        %v4286 = vadd.s32 %v4285, 8
        %4287 = vset.pattern.permute.xlu0 %v4286
        %4288 = vperm.xlu0 %4287, %v4277
        %v4289 = vpop.permute.xlu0 %4288
        %v4290 = vperm.slane %v3638, 1
        %v4291 = vlaneseq
        %v4292 = vshrl.u32 %v4291, 7
        %4294 = vset.pattern.permute.xlu0 %v4292
        %4295 = vperm.xlu0 %4294, %v4290
        %v4296 = vpop.permute.xlu0 %4295
        %v4297 = vlaneseq
        %v4298 = vshrl.u32 %v4297, 7
        %v4299 = vadd.s32 %v4298, 8
        %4300 = vset.pattern.permute.xlu0 %v4299
        %4301 = vperm.xlu0 %4300, %v4290
        %v4302 = vpop.permute.xlu0 %4301
        %v4303 = vperm.slane %v3638, 2
        %v4304 = vlaneseq
        %v4305 = vshrl.u32 %v4304, 7
        %4307 = vset.pattern.permute.xlu0 %v4305
        %4308 = vperm.xlu0 %4307, %v4303
        %v4309 = vpop.permute.xlu0 %4308
        %v4310 = vlaneseq
        %v4311 = vshrl.u32 %v4310, 7
        %v4312 = vadd.s32 %v4311, 8
        %4313 = vset.pattern.permute.xlu0 %v4312
        %4314 = vperm.xlu0 %4313, %v4303
        %v4315 = vpop.permute.xlu0 %4314
        %v4316 = vperm.slane %v3638, 3
        %v4317 = vlaneseq
        %v4318 = vshrl.u32 %v4317, 7
        %4320 = vset.pattern.permute.xlu0 %v4318
        %4321 = vperm.xlu0 %4320, %v4316
        %v4322 = vpop.permute.xlu0 %4321
        %v4323 = vlaneseq
        %v4324 = vshrl.u32 %v4323, 7
        %v4325 = vadd.s32 %v4324, 8
        %4326 = vset.pattern.permute.xlu0 %v4325
        %4327 = vperm.xlu0 %4326, %v4316
        %v4328 = vpop.permute.xlu0 %4327
        %v4329 = vperm.slane %v3638, 4
        %v4330 = vlaneseq
        %v4331 = vshrl.u32 %v4330, 7
        %4333 = vset.pattern.permute.xlu0 %v4331
        %4334 = vperm.xlu0 %4333, %v4329
        %v4335 = vpop.permute.xlu0 %4334
        %v4336 = vlaneseq
        %v4337 = vshrl.u32 %v4336, 7
        %v4338 = vadd.s32 %v4337, 8
        %4339 = vset.pattern.permute.xlu0 %v4338
        %4340 = vperm.xlu0 %4339, %v4329
        %v4341 = vpop.permute.xlu0 %4340
        %v4342 = vperm.slane %v3638, 5
        %v4343 = vlaneseq
        %v4344 = vshrl.u32 %v4343, 7
        %4346 = vset.pattern.permute.xlu0 %v4344
        %4347 = vperm.xlu0 %4346, %v4342
        %v4348 = vpop.permute.xlu0 %4347
        %v4349 = vlaneseq
        %v4350 = vshrl.u32 %v4349, 7
        %v4351 = vadd.s32 %v4350, 8
        %4352 = vset.pattern.permute.xlu0 %v4351
        %4353 = vperm.xlu0 %4352, %v4342
        %v4354 = vpop.permute.xlu0 %4353
        %v4355 = vperm.slane %v3638, 6
        %v4356 = vlaneseq
        %v4357 = vshrl.u32 %v4356, 7
        %4359 = vset.pattern.permute.xlu0 %v4357
        %4360 = vperm.xlu0 %4359, %v4355
        %v4361 = vpop.permute.xlu0 %4360
        %v4362 = vlaneseq
        %v4363 = vshrl.u32 %v4362, 7
        %v4364 = vadd.s32 %v4363, 8
        %4365 = vset.pattern.permute.xlu0 %v4364
        %4366 = vperm.xlu0 %4365, %v4355
        %v4367 = vpop.permute.xlu0 %4366
        %v4368 = vperm.slane %v3638, 7
        %v4369 = vlaneseq
        %v4370 = vshrl.u32 %v4369, 7
        %4372 = vset.pattern.permute.xlu0 %v4370
        %4373 = vperm.xlu0 %4372, %v4368
        %v4374 = vpop.permute.xlu0 %4373
        %v4375 = vlaneseq
        %v4376 = vshrl.u32 %v4375, 7
        %v4377 = vadd.s32 %v4376, 8
        %4378 = vset.pattern.permute.xlu0 %v4377
        %4379 = vperm.xlu0 %4378, %v4368
        %v4380 = vpop.permute.xlu0 %4379
        %v4381 = vperm.slane %v3652, 0
        %v4382 = vlaneseq
        %v4383 = vshrl.u32 %v4382, 7
        %4385 = vset.pattern.permute.xlu0 %v4383
        %4386 = vperm.xlu0 %4385, %v4381
        %v4387 = vpop.permute.xlu0 %4386
        %v4388 = vlaneseq
        %v4389 = vshrl.u32 %v4388, 7
        %v4390 = vadd.s32 %v4389, 8
        %4391 = vset.pattern.permute.xlu0 %v4390
        %4392 = vperm.xlu0 %4391, %v4381
        %v4393 = vpop.permute.xlu0 %4392
        %v4394 = vperm.slane %v3652, 1
        %v4395 = vlaneseq
        %v4396 = vshrl.u32 %v4395, 7
        %4398 = vset.pattern.permute.xlu0 %v4396
        %4399 = vperm.xlu0 %4398, %v4394
        %v4400 = vpop.permute.xlu0 %4399
        %v4401 = vlaneseq
        %v4402 = vshrl.u32 %v4401, 7
        %v4403 = vadd.s32 %v4402, 8
        %4404 = vset.pattern.permute.xlu0 %v4403
        %4405 = vperm.xlu0 %4404, %v4394
        %v4406 = vpop.permute.xlu0 %4405
        %v4407 = vperm.slane %v3652, 2
        %v4408 = vlaneseq
        %v4409 = vshrl.u32 %v4408, 7
        %4411 = vset.pattern.permute.xlu0 %v4409
        %4412 = vperm.xlu0 %4411, %v4407
        %v4413 = vpop.permute.xlu0 %4412
        %v4414 = vlaneseq
        %v4415 = vshrl.u32 %v4414, 7
        %v4416 = vadd.s32 %v4415, 8
        %4417 = vset.pattern.permute.xlu0 %v4416
        %4418 = vperm.xlu0 %4417, %v4407
        %v4419 = vpop.permute.xlu0 %4418
        %v4420 = vperm.slane %v3652, 3
        %v4421 = vlaneseq
        %v4422 = vshrl.u32 %v4421, 7
        %4424 = vset.pattern.permute.xlu0 %v4422
        %4425 = vperm.xlu0 %4424, %v4420
        %v4426 = vpop.permute.xlu0 %4425
        %v4427 = vlaneseq
        %v4428 = vshrl.u32 %v4427, 7
        %v4429 = vadd.s32 %v4428, 8
        %4430 = vset.pattern.permute.xlu0 %v4429
        %4431 = vperm.xlu0 %4430, %v4420
        %v4432 = vpop.permute.xlu0 %4431
        %v4433 = vperm.slane %v3652, 4
        %v4434 = vlaneseq
        %v4435 = vshrl.u32 %v4434, 7
        %4437 = vset.pattern.permute.xlu0 %v4435
        %4438 = vperm.xlu0 %4437, %v4433
        %v4439 = vpop.permute.xlu0 %4438
        %v4440 = vlaneseq
        %v4441 = vshrl.u32 %v4440, 7
        %v4442 = vadd.s32 %v4441, 8
        %4443 = vset.pattern.permute.xlu0 %v4442
        %4444 = vperm.xlu0 %4443, %v4433
        %v4445 = vpop.permute.xlu0 %4444
        %v4446 = vperm.slane %v3652, 5
        %v4447 = vlaneseq
        %v4448 = vshrl.u32 %v4447, 7
        %4450 = vset.pattern.permute.xlu0 %v4448
        %4451 = vperm.xlu0 %4450, %v4446
        %v4452 = vpop.permute.xlu0 %4451
        %v4453 = vlaneseq
        %v4454 = vshrl.u32 %v4453, 7
        %v4455 = vadd.s32 %v4454, 8
        %4456 = vset.pattern.permute.xlu0 %v4455
        %4457 = vperm.xlu0 %4456, %v4446
        %v4458 = vpop.permute.xlu0 %4457
        %v4459 = vperm.slane %v3652, 6
        %v4460 = vlaneseq
        %v4461 = vshrl.u32 %v4460, 7
        %4463 = vset.pattern.permute.xlu0 %v4461
        %4464 = vperm.xlu0 %4463, %v4459
        %v4465 = vpop.permute.xlu0 %4464
        %v4466 = vlaneseq
        %v4467 = vshrl.u32 %v4466, 7
        %v4468 = vadd.s32 %v4467, 8
        %4469 = vset.pattern.permute.xlu0 %v4468
        %4470 = vperm.xlu0 %4469, %v4459
        %v4471 = vpop.permute.xlu0 %4470
        %v4472 = vperm.slane %v3652, 7
        %v4473 = vlaneseq
        %v4474 = vshrl.u32 %v4473, 7
        %4476 = vset.pattern.permute.xlu0 %v4474
        %4477 = vperm.xlu0 %4476, %v4472
        %v4478 = vpop.permute.xlu0 %4477
        %v4479 = vlaneseq
        %v4480 = vshrl.u32 %v4479, 7
        %v4481 = vadd.s32 %v4480, 8
        %4482 = vset.pattern.permute.xlu0 %v4481
        %4483 = vperm.xlu0 %4482, %v4472
        %v4484 = vpop.permute.xlu0 %4483
        %v4485 = vmul.f32 %v886, %v3659
        %v4486 = vmul.f32 %v887, %v3665
        %v4487 = vmul.f32 %v888, %v3672
        %v4488 = vmul.f32 %v889, %v3678
        %v4489 = vmul.f32 %v890, %v3685
        %v4490 = vmul.f32 %v891, %v3691
        %v4491 = vmul.f32 %v892, %v3698
        %v4492 = vmul.f32 %v893, %v3704
        %v4493 = vmul.f32 %v894, %v3711
        %v4494 = vmul.f32 %v895, %v3717
        %v4495 = vmul.f32 %v896, %v3724
        %v4496 = vmul.f32 %v897, %v3730
        %v4497 = vmul.f32 %v898, %v3737
        %v4498 = vmul.f32 %v899, %v3743
        %v4499 = vmul.f32 %v900, %v3750
        %v4500 = vmul.f32 %v901, %v3756
        %v4501 = vmul.f32 %v902, %v3763
        %v4502 = vmul.f32 %v903, %v3769
        %v4503 = vmul.f32 %v904, %v3776
        %v4504 = vmul.f32 %v905, %v3782
        %v4505 = vmul.f32 %v906, %v3789
        %v4506 = vmul.f32 %v907, %v3795
        %v4507 = vmul.f32 %v908, %v3802
        %v4508 = vmul.f32 %v909, %v3808
        %v4509 = vmul.f32 %v910, %v3815
        %v4510 = vmul.f32 %v911, %v3821
        %v4511 = vmul.f32 %v912, %v3828
        %v4512 = vmul.f32 %v913, %v3834
        %v4513 = vmul.f32 %v914, %v3841
        %v4514 = vmul.f32 %v915, %v3847
        %v4515 = vmul.f32 %v916, %v3854
        %v4516 = vmul.f32 %v917, %v3860
        %v4517 = vmul.f32 %v918, %v3867
        %v4518 = vmul.f32 %v919, %v3873
        %v4519 = vmul.f32 %v920, %v3880
        %v4520 = vmul.f32 %v921, %v3886
        %v4521 = vmul.f32 %v922, %v3893
        %v4522 = vmul.f32 %v923, %v3899
        %v4523 = vmul.f32 %v924, %v3906
        %v4524 = vmul.f32 %v925, %v3912
        %v4525 = vmul.f32 %v926, %v3919
        %v4526 = vmul.f32 %v927, %v3925
        %v4527 = vmul.f32 %v928, %v3932
        %v4528 = vmul.f32 %v929, %v3938
        %v4529 = vmul.f32 %v930, %v3945
        %v4530 = vmul.f32 %v931, %v3951
        %v4531 = vmul.f32 %v932, %v3958
        %v4532 = vmul.f32 %v933, %v3964
        %v4533 = vmul.f32 %v934, %v3971
        %v4534 = vmul.f32 %v935, %v3977
        %v4535 = vmul.f32 %v936, %v3984
        %v4536 = vmul.f32 %v937, %v3990
        %v4537 = vmul.f32 %v938, %v3997
        %v4538 = vmul.f32 %v939, %v4003
        %v4539 = vmul.f32 %v940, %v4010
        %v4540 = vmul.f32 %v941, %v4016
        %v4541 = vmul.f32 %v942, %v4023
        %v4542 = vmul.f32 %v943, %v4029
        %v4543 = vmul.f32 %v944, %v4036
        %v4544 = vmul.f32 %v945, %v4042
        %v4545 = vmul.f32 %v946, %v4049
        %v4546 = vmul.f32 %v947, %v4055
        %v4547 = vmul.f32 %v948, %v4062
        %v4548 = vmul.f32 %v949, %v4068
        %v4549 = vmul.f32 %v950, %v4075
        %v4550 = vmul.f32 %v951, %v4081
        %v4551 = vmul.f32 %v952, %v4088
        %v4552 = vmul.f32 %v953, %v4094
        %v4553 = vmul.f32 %v954, %v4101
        %v4554 = vmul.f32 %v955, %v4107
        %v4555 = vmul.f32 %v956, %v4114
        %v4556 = vmul.f32 %v957, %v4120
        %v4557 = vmul.f32 %v958, %v4127
        %v4558 = vmul.f32 %v959, %v4133
        %v4559 = vmul.f32 %v960, %v4140
        %v4560 = vmul.f32 %v961, %v4146
        %v4561 = vmul.f32 %v962, %v4153
        %v4562 = vmul.f32 %v963, %v4159
        %v4563 = vmul.f32 %v964, %v4166
        %v4564 = vmul.f32 %v965, %v4172
        %v4565 = vmul.f32 %v966, %v4179
        %v4566 = vmul.f32 %v967, %v4185
        %v4567 = vmul.f32 %v968, %v4192
        %v4568 = vmul.f32 %v969, %v4198
        %v4569 = vmul.f32 %v970, %v4205
        %v4570 = vmul.f32 %v971, %v4211
        %v4571 = vmul.f32 %v972, %v4218
        %v4572 = vmul.f32 %v973, %v4224
        %v4573 = vmul.f32 %v974, %v4231
        %v4574 = vmul.f32 %v975, %v4237
        %v4575 = vmul.f32 %v976, %v4244
        %v4576 = vmul.f32 %v977, %v4250
        %v4577 = vmul.f32 %v978, %v4257
        %v4578 = vmul.f32 %v979, %v4263
        %v4579 = vmul.f32 %v980, %v4270
        %v4580 = vmul.f32 %v981, %v4276
        %v4581 = vmul.f32 %v982, %v4283
        %v4582 = vmul.f32 %v983, %v4289
        %v4583 = vmul.f32 %v984, %v4296
        %v4584 = vmul.f32 %v985, %v4302
        %v4585 = vmul.f32 %v986, %v4309
        %v4586 = vmul.f32 %v987, %v4315
        %v4587 = vmul.f32 %v988, %v4322
        %v4588 = vmul.f32 %v989, %v4328
        %v4589 = vmul.f32 %v990, %v4335
        %v4590 = vmul.f32 %v991, %v4341
        %v4591 = vmul.f32 %v992, %v4348
        %v4592 = vmul.f32 %v993, %v4354
        %v4593 = vmul.f32 %v994, %v4361
        %v4594 = vmul.f32 %v995, %v4367
        %v4595 = vmul.f32 %v996, %v4374
        %v4596 = vmul.f32 %v997, %v4380
        %v4597 = vmul.f32 %v998, %v4387
        %v4598 = vmul.f32 %v999, %v4393
        %v4599 = vmul.f32 %v1000, %v4400
        %v4600 = vmul.f32 %v1001, %v4406
        %v4601 = vmul.f32 %v1002, %v4413
        %v4602 = vmul.f32 %v1003, %v4419
        %v4603 = vmul.f32 %v1004, %v4426
        %v4604 = vmul.f32 %v1005, %v4432
        %v4605 = vmul.f32 %v1006, %v4439
        %v4606 = vmul.f32 %v1007, %v4445
        %v4607 = vmul.f32 %v1008, %v4452
        %v4608 = vmul.f32 %v1009, %v4458
        %v4609 = vmul.f32 %v1010, %v4465
        %v4610 = vmul.f32 %v1011, %v4471
        %v4611 = vmul.f32 %v1012, %v4478
        %v4612 = vmul.f32 %v1013, %v4484
        %4613 = vst [vmem:[%s327] sm:$0xff] %v4485
        %4614 = vst [vmem:[%s327 + $0x8] sm:$0xff] %v4486
        %4615 = vst [vmem:[%s327 + $0x10] sm:$0xff] %v4487
        %4616 = vst [vmem:[%s327 + $0x18] sm:$0xff] %v4488
        %4617 = vst [vmem:[%s327 + $0x20] sm:$0xff] %v4489
        %4618 = vst [vmem:[%s327 + $0x28] sm:$0xff] %v4490
        %4619 = vst [vmem:[%s327 + $0x30] sm:$0xff] %v4491
        %4620 = vst [vmem:[%s327 + $0x38] sm:$0xff] %v4492
        %4621 = vst [vmem:[%s327 + $0x40] sm:$0xff] %v4493
        %4622 = vst [vmem:[%s327 + $0x48] sm:$0xff] %v4494
        %4623 = vst [vmem:[%s327 + $0x50] sm:$0xff] %v4495
        %4624 = vst [vmem:[%s327 + $0x58] sm:$0xff] %v4496
        %4625 = vst [vmem:[%s327 + $0x60] sm:$0xff] %v4497
        %4626 = vst [vmem:[%s327 + $0x68] sm:$0xff] %v4498
        %4627 = vst [vmem:[%s327 + $0x70] sm:$0xff] %v4499
        %4628 = vst [vmem:[%s327 + $0x78] sm:$0xff] %v4500
        %4629 = vst [vmem:[%s327 + $0x80] sm:$0xff] %v4501
        %4630 = vst [vmem:[%s327 + $0x88] sm:$0xff] %v4502
        %4631 = vst [vmem:[%s327 + $0x90] sm:$0xff] %v4503
        %4632 = vst [vmem:[%s327 + $0x98] sm:$0xff] %v4504
        %4633 = vst [vmem:[%s327 + $0xa0] sm:$0xff] %v4505
        %4634 = vst [vmem:[%s327 + $0xa8] sm:$0xff] %v4506
        %4635 = vst [vmem:[%s327 + $0xb0] sm:$0xff] %v4507
        %4636 = vst [vmem:[%s327 + $0xb8] sm:$0xff] %v4508
        %4637 = vst [vmem:[%s327 + $0xc0] sm:$0xff] %v4509
        %4638 = vst [vmem:[%s327 + $0xc8] sm:$0xff] %v4510
        %4639 = vst [vmem:[%s327 + $0xd0] sm:$0xff] %v4511
        %4640 = vst [vmem:[%s327 + $0xd8] sm:$0xff] %v4512
        %4641 = vst [vmem:[%s327 + $0xe0] sm:$0xff] %v4513
        %4642 = vst [vmem:[%s327 + $0xe8] sm:$0xff] %v4514
        %4643 = vst [vmem:[%s327 + $0xf0] sm:$0xff] %v4515
        %4644 = vst [vmem:[%s327 + $0xf8] sm:$0xff] %v4516
        %4645 = vst [vmem:[%s327 + $0x100] sm:$0xff] %v4517
        %4646 = vst [vmem:[%s327 + $0x108] sm:$0xff] %v4518
        %4647 = vst [vmem:[%s327 + $0x110] sm:$0xff] %v4519
        %4648 = vst [vmem:[%s327 + $0x118] sm:$0xff] %v4520
        %4649 = vst [vmem:[%s327 + $0x120] sm:$0xff] %v4521
        %4650 = vst [vmem:[%s327 + $0x128] sm:$0xff] %v4522
        %4651 = vst [vmem:[%s327 + $0x130] sm:$0xff] %v4523
        %4652 = vst [vmem:[%s327 + $0x138] sm:$0xff] %v4524
        %4653 = vst [vmem:[%s327 + $0x140] sm:$0xff] %v4525
        %4654 = vst [vmem:[%s327 + $0x148] sm:$0xff] %v4526
        %4655 = vst [vmem:[%s327 + $0x150] sm:$0xff] %v4527
        %4656 = vst [vmem:[%s327 + $0x158] sm:$0xff] %v4528
        %4657 = vst [vmem:[%s327 + $0x160] sm:$0xff] %v4529
        %4658 = vst [vmem:[%s327 + $0x168] sm:$0xff] %v4530
        %4659 = vst [vmem:[%s327 + $0x170] sm:$0xff] %v4531
        %4660 = vst [vmem:[%s327 + $0x178] sm:$0xff] %v4532
        %4661 = vst [vmem:[%s327 + $0x180] sm:$0xff] %v4533
        %4662 = vst [vmem:[%s327 + $0x188] sm:$0xff] %v4534
        %4663 = vst [vmem:[%s327 + $0x190] sm:$0xff] %v4535
        %4664 = vst [vmem:[%s327 + $0x198] sm:$0xff] %v4536
        %4665 = vst [vmem:[%s327 + $0x1a0] sm:$0xff] %v4537
        %4666 = vst [vmem:[%s327 + $0x1a8] sm:$0xff] %v4538
        %4667 = vst [vmem:[%s327 + $0x1b0] sm:$0xff] %v4539
        %4668 = vst [vmem:[%s327 + $0x1b8] sm:$0xff] %v4540
        %4669 = vst [vmem:[%s327 + $0x1c0] sm:$0xff] %v4541
        %4670 = vst [vmem:[%s327 + $0x1c8] sm:$0xff] %v4542
        %4671 = vst [vmem:[%s327 + $0x1d0] sm:$0xff] %v4543
        %4672 = vst [vmem:[%s327 + $0x1d8] sm:$0xff] %v4544
        %4673 = vst [vmem:[%s327 + $0x1e0] sm:$0xff] %v4545
        %4674 = vst [vmem:[%s327 + $0x1e8] sm:$0xff] %v4546
        %4675 = vst [vmem:[%s327 + $0x1f0] sm:$0xff] %v4547
        %4676 = vst [vmem:[%s327 + $0x1f8] sm:$0xff] %v4548
        %4677 = vst [vmem:[%s327 + $0x200] sm:$0xff] %v4549
        %4678 = vst [vmem:[%s327 + $0x208] sm:$0xff] %v4550
        %4679 = vst [vmem:[%s327 + $0x210] sm:$0xff] %v4551
        %4680 = vst [vmem:[%s327 + $0x218] sm:$0xff] %v4552
        %4681 = vst [vmem:[%s327 + $0x220] sm:$0xff] %v4553
        %4682 = vst [vmem:[%s327 + $0x228] sm:$0xff] %v4554
        %4683 = vst [vmem:[%s327 + $0x230] sm:$0xff] %v4555
        %4684 = vst [vmem:[%s327 + $0x238] sm:$0xff] %v4556
        %4685 = vst [vmem:[%s327 + $0x240] sm:$0xff] %v4557
        %4686 = vst [vmem:[%s327 + $0x248] sm:$0xff] %v4558
        %4687 = vst [vmem:[%s327 + $0x250] sm:$0xff] %v4559
        %4688 = vst [vmem:[%s327 + $0x258] sm:$0xff] %v4560
        %4689 = vst [vmem:[%s327 + $0x260] sm:$0xff] %v4561
        %4690 = vst [vmem:[%s327 + $0x268] sm:$0xff] %v4562
        %4691 = vst [vmem:[%s327 + $0x270] sm:$0xff] %v4563
        %4692 = vst [vmem:[%s327 + $0x278] sm:$0xff] %v4564
        %4693 = vst [vmem:[%s327 + $0x280] sm:$0xff] %v4565
        %4694 = vst [vmem:[%s327 + $0x288] sm:$0xff] %v4566
        %4695 = vst [vmem:[%s327 + $0x290] sm:$0xff] %v4567
        %4696 = vst [vmem:[%s327 + $0x298] sm:$0xff] %v4568
        %4697 = vst [vmem:[%s327 + $0x2a0] sm:$0xff] %v4569
        %4698 = vst [vmem:[%s327 + $0x2a8] sm:$0xff] %v4570
        %4699 = vst [vmem:[%s327 + $0x2b0] sm:$0xff] %v4571
        %4700 = vst [vmem:[%s327 + $0x2b8] sm:$0xff] %v4572
        %4701 = vst [vmem:[%s327 + $0x2c0] sm:$0xff] %v4573
        %4702 = vst [vmem:[%s327 + $0x2c8] sm:$0xff] %v4574
        %4703 = vst [vmem:[%s327 + $0x2d0] sm:$0xff] %v4575
        %4704 = vst [vmem:[%s327 + $0x2d8] sm:$0xff] %v4576
        %4705 = vst [vmem:[%s327 + $0x2e0] sm:$0xff] %v4577
        %4706 = vst [vmem:[%s327 + $0x2e8] sm:$0xff] %v4578
        %4707 = vst [vmem:[%s327 + $0x2f0] sm:$0xff] %v4579
        %4708 = vst [vmem:[%s327 + $0x2f8] sm:$0xff] %v4580
        %4709 = vst [vmem:[%s327 + $0x300] sm:$0xff] %v4581
        %4710 = vst [vmem:[%s327 + $0x308] sm:$0xff] %v4582
        %4711 = vst [vmem:[%s327 + $0x310] sm:$0xff] %v4583
        %4712 = vst [vmem:[%s327 + $0x318] sm:$0xff] %v4584
        %4713 = vst [vmem:[%s327 + $0x320] sm:$0xff] %v4585
        %4714 = vst [vmem:[%s327 + $0x328] sm:$0xff] %v4586
        %4715 = vst [vmem:[%s327 + $0x330] sm:$0xff] %v4587
        %4716 = vst [vmem:[%s327 + $0x338] sm:$0xff] %v4588
        %4717 = vst [vmem:[%s327 + $0x340] sm:$0xff] %v4589
        %4718 = vst [vmem:[%s327 + $0x348] sm:$0xff] %v4590
        %4719 = vst [vmem:[%s327 + $0x350] sm:$0xff] %v4591
        %4720 = vst [vmem:[%s327 + $0x358] sm:$0xff] %v4592
        %4721 = vst [vmem:[%s327 + $0x360] sm:$0xff] %v4593
        %4722 = vst [vmem:[%s327 + $0x368] sm:$0xff] %v4594
        %4723 = vst [vmem:[%s327 + $0x370] sm:$0xff] %v4595
        %4724 = vst [vmem:[%s327 + $0x378] sm:$0xff] %v4596
        %4725 = vst [vmem:[%s327 + $0x380] sm:$0xff] %v4597
        %4726 = vst [vmem:[%s327 + $0x388] sm:$0xff] %v4598
        %4727 = vst [vmem:[%s327 + $0x390] sm:$0xff] %v4599
        %4728 = vst [vmem:[%s327 + $0x398] sm:$0xff] %v4600
        %4729 = vst [vmem:[%s327 + $0x3a0] sm:$0xff] %v4601
        %4730 = vst [vmem:[%s327 + $0x3a8] sm:$0xff] %v4602
        %4731 = vst [vmem:[%s327 + $0x3b0] sm:$0xff] %v4603
        %4732 = vst [vmem:[%s327 + $0x3b8] sm:$0xff] %v4604
        %4733 = vst [vmem:[%s327 + $0x3c0] sm:$0xff] %v4605
        %4734 = vst [vmem:[%s327 + $0x3c8] sm:$0xff] %v4606
        %4735 = vst [vmem:[%s327 + $0x3d0] sm:$0xff] %v4607
        %4736 = vst [vmem:[%s327 + $0x3d8] sm:$0xff] %v4608
        %4737 = vst [vmem:[%s327 + $0x3e0] sm:$0xff] %v4609
        %4738 = vst [vmem:[%s327 + $0x3e8] sm:$0xff] %v4610
        %4739 = vst [vmem:[%s327 + $0x3f0] sm:$0xff] %v4611
        %4740 = vst [vmem:[%s327 + $0x3f8] sm:$0xff] %v4612
        %s4741 = sand.u32 %s207, 1
        %s4742 = scalar_lea.sflag [#allocation5], %s4741
        %s4743 = sand.u32 %s207, 1
        %s4744 = smul.addr %s4743, 1024
        %s4745 = scalar_lea.vmem [#allocation6], %s4744
        // Predicated region
        $region57: #{tpu_custom_call.1} parent=51 // pred_check
          %p4746 = pneg %p217
        $region58: #{tpu_custom_call.1} parent=51 // pred_check_branch
          %4748 = sbr.rel (%p4746) target = $region60
        $region59: #{tpu_custom_call.1} parent=51 // pred_region
          %s4749 = smul.u32 4, %s26
          %4751 = vsyncadd %s4742, 0
          %s4752 = smul.addr %s4749, 32
          %s4753 = smul.addr %s4752, 8
          %s4754 = scalar_lea.hbm %s8, %s4753
          %s4755 = sshll.u32 %s4745, 4
          %s4756 = int_to_ptr.vmem [resolvable:$true] %s4755
          %s4757 = sshll.u32 %s4754, 4
          %s4758 = int_to_ptr.hbm [resolvable:$true] %s4757
          %4763 = dma.vmem_to_hbm [thread:$0]  %s4756, 16384, %s4758, %s4742, 128, 128, 8
        $region60: #{tpu_custom_call.1} parent=51 // pred_fallthru
          _
      $region52: #{tpu_custom_call.1} parent=5 // pred_fallthru
        _
      %p4764 = scmp.le.s32.totalorder 2, %s21
      // Predicated region
      $region61: #{tpu_custom_call.1} parent=5 // pred_check
        %p4765 = pneg %p4764
      $region62: #{tpu_custom_call.1} parent=5 // pred_check_branch
        %4767 = sbr.rel (%p4765) target = $region64
      $region63: #{tpu_custom_call.1} parent=5 // pred_region
        %s4768 = ssub.s32 %s21, 2
        // Predicated region
        $region65: #{tpu_custom_call.1} parent=63 // pred_check
          %p4769 = pneg %p223
        $region66: #{tpu_custom_call.1} parent=63 // pred_check_branch
          %4771 = sbr.rel (%p4769) target = $region68
        $region67: #{tpu_custom_call.1} parent=63 // pred_region
          %s4772 = sand.u32 %s208, 1
          %s4773 = scalar_lea.sflag [#allocation5], %s4772
          %s4774 = sand.u32 %s208, 1
          %s4775 = smul.addr %s4774, 1024
          %s4776 = scalar_lea.vmem [#allocation6], %s4775
          %4778 = dma.done %s4773, 16384
        $region68: #{tpu_custom_call.1} parent=63 // pred_fallthru
          _
      $region64: #{tpu_custom_call.1} parent=5 // pred_fallthru
        _
    $region6: #{tpu_custom_call.1} parent=1 // loop_footer
      %s25 = sadd.s32 1, %s21
    $region7: #{tpu_custom_call.1} parent=1 // loop_footer_branch
      %20 = sbr.rel target = $region3
    $region8: #{tpu_custom_call.1} parent=1 // loop_exit
      _
    %4779 = vsyncpa [#allocation4], 1
    %s4780 = scalar_lea.sflag [#allocation4], 1
    %4781 = vsyncpa %s4780, 1
    %4782 = vsyncpa [#allocation5], 1
    %s4783 = scalar_lea.sflag [#allocation5], 1
    %4784 = vsyncpa %s4783, 1

</llo_original>
